<compile_context>
chip_gen: v6e
topology: v6e:2x2x1
jax: 0.10.0
libtpu: 0.0.40
codegen_flags: <defaults>
</compile_context>

<pallas_src>
import functools

import jax
import jax.numpy as jnp
from jax.experimental import pallas as pl
from jax.experimental.pallas import tpu as pltpu


def _mdp_backward_kernel(tmat_ref, erow_ref, cost_ref, px_ref, py_ref,
                         repx_ref, obvx_ref, seg_ref, vinit_ref, out_ref,
                         m_ref, *, horizon, n_s):
    """Fused reward+cost backward recursion; horizon/n_s are static ints."""
    # ---------------- Phase 1: off the serial critical path ----------------
    # Column weights for every step at once:
    #   w[t, c] = px[t, x_c] * sum_g py[t, y_c, g] * obv[s_c, g]
    pxw = jnp.dot(px_ref[...], repx_ref[...],
                  preferred_element_type=jnp.float32)          # (T, S*XY)
    pyw = jnp.dot(py_ref[...], obvx_ref[...],
                  preferred_element_type=jnp.float32)          # (T, S*XY)
    w = pxw * pyw                                              # (T, S*XY)

    # Per-step affine addends (reward uses the t-invariant E row; cost uses
    # the per-step cost row).  Both are (T, S) and stay live (2 vregs total).
    b_r_all = jnp.dot(w * erow_ref[...], seg_ref[...],
                      preferred_element_type=jnp.float32)      # (T, S)
    b_c_all = jnp.dot(w * cost_ref[...], seg_ref[...],
                      preferred_element_type=jnp.float32)      # (T, S)

    # Per-step effective operator M[t] = (t_mat * w[t]) @ seg  -> (S, S),
    # written to VMEM scratch so no large operand is pinned in vregs across
    # the serial recursion.  The `horizon` matmuls are independent.
    for t in range(horizon):
        w_t = w[t:t + 1, :]                                    # (1, S*XY)
        m_t = jnp.dot(tmat_ref[...] * w_t, seg_ref[...],
                      preferred_element_type=jnp.float32)      # (S, S)
        m_ref[pl.ds(t * n_s, n_s), :] = m_t

    # ---------------- Phase 2: strictly serial backward recursion -----------
    # Two independent 1-row chains (reward, cost); one (1,S)@(S,S) matmul each
    # per step, which the scheduler overlaps.
    v_r = vinit_ref[pl.ds(0, 1), :]                            # (1, S) V_r[T]
    v_c = vinit_ref[pl.ds(1, 1), :]                            # (1, S) V_c[T]=0
    for i in range(horizon):
        t = horizon - 1 - i
        m_t = m_ref[pl.ds(t * n_s, n_s), :]                    # (S, S)
        v_r = jnp.dot(v_r, m_t, preferred_element_type=jnp.float32) \
            + b_r_all[t:t + 1, :]
        v_c = jnp.dot(v_c, m_t, preferred_element_type=jnp.float32) \
            + b_c_all[t:t + 1, :]

    out_ref[pl.ds(0, 1), :] = v_r
    out_ref[pl.ds(1, 1), :] = v_c


def make_mdp_static_operands(t4d, e_tab, obv, n_ax, n_ay):
    """Builds the policy-independent kernel operands ONCE (cache & reuse).

    Only the softmaxed policies and the cost schedule change per forward call.
    """
    n_s = e_tab.shape[0]
    n_g = obv.shape[1]
    n_xy = n_ax * n_ay
    n_cols = n_s * n_xy

    # t_mat[s', s*XY + x*Ay + y] = T4d[s, x, y, s']
    t_mat = jnp.transpose(t4d, (3, 0, 1, 2)).reshape(n_s, n_cols)

    col = jnp.arange(n_cols)
    col_s = col // n_xy
    col_x = (col // n_ay) % n_ax
    col_y = col % n_ay

    # E flattened once (t-invariant) -- replaces the old padded (T,2,512) slab.
    e_row = e_tab.reshape(1, n_cols).astype(jnp.float32)

    # px expansion: rows beyond n_ax are all-zero (px is zero-padded too).
    k_x = max(8, ((n_ax + 7) // 8) * 8)
    rep_x = (col_x[None, :] == jnp.arange(k_x)[:, None]).astype(jnp.float32)

    # obv_expand[(y',g), c] = (y_c == y') * obv[s_c, g]
    row = jnp.arange(n_ay * n_g)
    row_y = row // n_g
    row_g = row % n_g
    obv_expand = ((col_y[None, :] == row_y[:, None]).astype(jnp.float32)
                  * obv[col_s[None, :], row_g[:, None]])

    # Segment-sum matrix: column group s*XY .. s*XY+XY-1 -> state s.
    seg_mat = (col_s[:, None] == jnp.arange(n_s)[None, :]).astype(jnp.float32)

    # Terminal state: V_r[T] = E[:,0,0], V_c[T] = 0.
    v_init = jnp.stack([e_tab[:, 0, 0], jnp.zeros((n_s,), jnp.float32)], axis=0)

    col_x_f = col_x.astype(jnp.float32)[None, :]
    col_y_f = col_y.astype(jnp.float32)[None, :]

    return dict(t_mat=t_mat, e_row=e_row, rep_x=rep_x, obv_expand=obv_expand,
                seg_mat=seg_mat, v_init=v_init,
                col_x_f=col_x_f, col_y_f=col_y_f,
                n_s=n_s, n_ax=n_ax, n_ay=n_ay, n_g=n_g,
                k_x=k_x, n_cols=n_cols)


def mdp_value_tables(static_ops, c_x, c_y, policy_x, policy_y):
    """Runs the fused backward recursion; returns (V_r[0], V_c[0])."""
    horizon, n_ax = policy_x.shape
    n_ay, n_g = policy_y.shape[1], policy_y.shape[2]
    n_s = static_ops["n_s"]
    k_x = static_ops["k_x"]

    # ---- per-call operands (policy / cost-schedule dependent, pure JAX) ----
    cost_rows = (c_x[:, None] * static_ops["col_x_f"]
                 + c_y[:, None] * static_ops["col_y_f"])       # (T, n_cols)
    px_pad = jnp.zeros((horizon, k_x), jnp.float32).at[:, :n_ax].set(policy_x)
    py_flat = policy_y.reshape(horizon, n_ay * n_g)

    kernel = functools.partial(_mdp_backward_kernel, horizon=horizon, n_s=n_s)

    out = pl.pallas_call(
        kernel,
        out_shape=jax.ShapeDtypeStruct((2, n_s), jnp.float32),
        grid=(1,),
        in_specs=[
            pl.BlockSpec(static_ops["t_mat"].shape, lambda i: (0, 0)),
            pl.BlockSpec(static_ops["e_row"].shape, lambda i: (0, 0)),
            pl.BlockSpec(cost_rows.shape, lambda i: (0, 0)),
            pl.BlockSpec(px_pad.shape, lambda i: (0, 0)),
            pl.BlockSpec(py_flat.shape, lambda i: (0, 0)),
            pl.BlockSpec(static_ops["rep_x"].shape, lambda i: (0, 0)),
            pl.BlockSpec(static_ops["obv_expand"].shape, lambda i: (0, 0)),
            pl.BlockSpec(static_ops["seg_mat"].shape, lambda i: (0, 0)),
            pl.BlockSpec(static_ops["v_init"].shape, lambda i: (0, 0)),
        ],
        out_specs=pl.BlockSpec((2, n_s), lambda i: (0, 0)),
        scratch_shapes=[pltpu.VMEM((horizon * n_s, n_s), jnp.float32)],
        compiler_params=pltpu.CompilerParams(dimension_semantics=("arbitrary",)),
    )(static_ops["t_mat"], static_ops["e_row"], cost_rows, px_pad, py_flat,
      static_ops["rep_x"], static_ops["obv_expand"], static_ops["seg_mat"],
      static_ops["v_init"])

    return out[0], out[1]


def mdp_forward(policy_var, lagrange_lambda, c_x, c_y, static_ops,
                horizon, n_ax, n_ay, n_g, pi_0=None):
    """Equivalent of MdpTorchKernel.forward(lagrange_lambda, pi_0)."""
    n_s = static_ops["n_s"]

    # fromVariableToPolicy (glue): split flat parameter and softmax (dim=1).
    px_numel = horizon * n_ax
    policy_x = jax.nn.softmax(policy_var[:px_numel].reshape(horizon, n_ax), axis=1)
    policy_y = jax.nn.softmax(
        policy_var[px_numel:].reshape(horizon, n_ay, n_g), axis=1)

    if pi_0 is None:
        pi_0 = jnp.zeros((n_s,), jnp.float32).at[0].set(1.0)
    else:
        pi_0 = jnp.asarray(pi_0, jnp.float32)

    v_r0, v_c0 = mdp_value_tables(static_ops, c_x, c_y, policy_x, policy_y)

    j_r = jnp.dot(pi_0, v_r0)
    j_c = jnp.dot(pi_0, v_c0)
    j_total = j_r + lagrange_lambda * j_c
    return j_total, j_r, j_c


def _reference_value_tables(c_x, c_y, t4d, e_tab, obv, policy_x, policy_y):
    """Pure-JAX reference mirroring the PyTorch loops (for correctness check)."""
    n_s, n_ax, n_ay = e_tab.shape
    horizon = policy_x.shape[0]
    v_r = e_tab[:, 0, 0]
    v_c = jnp.zeros((n_s,), jnp.float32)
    xg = jnp.arange(n_ax, dtype=jnp.float32)[:, None]
    yg = jnp.arange(n_ay, dtype=jnp.float32)[None, :]
    for t in range(horizon - 1, -1, -1):
        phi_r = jnp.sum(t4d * v_r[None, None, None, :], axis=-1)
        phi_c = jnp.sum(t4d * v_c[None, None, None, :], axis=-1)
        a_r = e_tab + phi_r
        a_c = (c_x[t] * xg + c_y[t] * yg)[None] + phi_c
        b_r = jnp.sum(a_r * policy_x[t][None, :, None], axis=1)
        b_c = jnp.sum(a_c * policy_x[t][None, :, None], axis=1)
        c_r = b_r @ policy_y[t]
        c_c = b_c @ policy_y[t]
        v_r = jnp.sum(c_r * obv, axis=1)
        v_c = jnp.sum(c_c * obv, axis=1)
    return v_r, v_c


if __name__ == "__main__":
    # Small problem sizes consistent with the module.
    N_MARKOV = 32          # N_markov
    N_GROUP = 8            # N_markov_grouped
    N_AX = 4               # N_Ax
    N_AY = 4               # N_Ay
    LEN_HORIZON = 8        # LEN_horizon
    MAX_COST_X = 1.0
    MAX_COST_Y = 2.0

    key = jax.random.PRNGKey(0)
    k_e, k_t, k_obv, k_pol = jax.random.split(key, 4)

    # Synthetic deterministic MdpKernel tables.
    e_tab = jax.random.normal(k_e, (N_MARKOV, N_AX, N_AY), jnp.float32)
    # Torch T layout is (S, S', Ax, Ay); rows stochastic over S'.
    t_raw = jax.random.normal(k_t, (N_MARKOV, N_MARKOV, N_AX, N_AY), jnp.float32)
    t_trans = jax.nn.softmax(t_raw, axis=1)
    t4d = jnp.transpose(t_trans, (0, 2, 3, 1))               # == T.permute(0,2,3,1)
    obv = jax.nn.softmax(
        jax.random.normal(k_obv, (N_MARKOV, N_GROUP), jnp.float32), axis=1)

    # Cost schedules (updateCost in __init__).
    c_x = MAX_COST_X * jnp.ones((LEN_HORIZON,), jnp.float32)
    c_y = MAX_COST_Y * jnp.ones((LEN_HORIZON,), jnp.float32)

    # Flat trainable policy variable (initialPolicyVariable).
    total_numel = LEN_HORIZON * N_AX + LEN_HORIZON * N_AY * N_GROUP
    policy_var = 0.01 * jax.random.normal(k_pol, (total_numel,), jnp.float32)

    lagrange_lambda = jnp.float32(0.5)

    # Structure-only operands built ONCE and reused across forward calls.
    static_ops = make_mdp_static_operands(t4d, e_tab, obv, N_AX, N_AY)
    jax.block_until_ready(static_ops["t_mat"])

    j_total, j_r, j_c = mdp_forward(
        policy_var, lagrange_lambda, c_x, c_y, static_ops,
        LEN_HORIZON, N_AX, N_AY, N_GROUP)
    jax.block_until_ready((j_total, j_r, j_c))

    # Cross-check kernel output against a pure-JAX reference.
    px = jax.nn.softmax(
        policy_var[:LEN_HORIZON * N_AX].reshape(LEN_HORIZON, N_AX), axis=1)
    py = jax.nn.softmax(
        policy_var[LEN_HORIZON * N_AX:].reshape(LEN_HORIZON, N_AY, N_GROUP), axis=1)
    v_r0_k, v_c0_k = mdp_value_tables(static_ops, c_x, c_y, px, py)
    v_r0_ref, v_c0_ref = _reference_value_tables(c_x, c_y, t4d, e_tab, obv, px, py)
    assert jnp.allclose(v_r0_k, v_r0_ref, rtol=1e-3, atol=1e-3), "V_r mismatch"
    assert jnp.allclose(v_c0_k, v_c0_ref, rtol=1e-3, atol=1e-3), "V_c mismatch"

    pi_0 = jnp.zeros((N_MARKOV,), jnp.float32).at[0].set(1.0)
    j_r_ref = pi_0 @ v_r0_ref
    j_c_ref = pi_0 @ v_c0_ref
    j_total_ref = j_r_ref + lagrange_lambda * j_c_ref
    assert jnp.allclose(j_total, j_total_ref, rtol=1e-3, atol=1e-3), "J mismatch"

    print("KERNEL_OK")
</pallas_src>

<mosaic_0001>
module attributes {stable_mosaic.version = 11 : i64} {
  func.func @_mdp_backward_kernel(%arg0: i32, %arg1: memref<32x512xf32, #tpu.memory_space<vmem>>, %arg2: memref<1x512xf32, #tpu.memory_space<vmem>>, %arg3: memref<8x512xf32, #tpu.memory_space<vmem>>, %arg4: memref<8x8xf32, #tpu.memory_space<vmem>>, %arg5: memref<8x32xf32, #tpu.memory_space<vmem>>, %arg6: memref<8x512xf32, #tpu.memory_space<vmem>>, %arg7: memref<32x512xf32, #tpu.memory_space<vmem>>, %arg8: memref<512x32xf32, #tpu.memory_space<vmem>>, %arg9: memref<2x32xf32, #tpu.memory_space<vmem>>, %arg10: memref<2x32xf32, #tpu.memory_space<vmem>>, %arg11: memref<256x32xf32, #tpu.memory_space<vmem>>) attributes {dimension_semantics = [#tpu.dimension_semantics<arbitrary>], iteration_bounds = array<i64: 1>, scalar_prefetch = 0 : i64, scratch_operands = 1 : i64, tpu.core_type = #tpu.core_type<tc>, window_params = [{pipeline_mode = #tpu.pipeline_mode<synchronous>, transform_indices = @transform_0, window_bounds = array<i64: 32, 512>}, {pipeline_mode = #tpu.pipeline_mode<synchronous>, transform_indices = @transform_1, window_bounds = array<i64: 1, 512>}, {pipeline_mode = #tpu.pipeline_mode<synchronous>, transform_indices = @transform_2, window_bounds = array<i64: 8, 512>}, {pipeline_mode = #tpu.pipeline_mode<synchronous>, transform_indices = @transform_3, window_bounds = array<i64: 8, 8>}, {pipeline_mode = #tpu.pipeline_mode<synchronous>, transform_indices = @transform_4, window_bounds = array<i64: 8, 32>}, {pipeline_mode = #tpu.pipeline_mode<synchronous>, transform_indices = @transform_5, window_bounds = array<i64: 8, 512>}, {pipeline_mode = #tpu.pipeline_mode<synchronous>, transform_indices = @transform_6, window_bounds = array<i64: 32, 512>}, {pipeline_mode = #tpu.pipeline_mode<synchronous>, transform_indices = @transform_7, window_bounds = array<i64: 512, 32>}, {pipeline_mode = #tpu.pipeline_mode<synchronous>, transform_indices = @transform_8, window_bounds = array<i64: 2, 32>}, {pipeline_mode = #tpu.pipeline_mode<synchronous>, transform_indices = @transform_9, window_bounds = array<i64: 2, 32>}]} {
    %c0 = arith.constant 0 : index
    %c0_0 = arith.constant 0 : index
    %0 = vector.load %arg4[%c0, %c0_0] : memref<8x8xf32, #tpu.memory_space<vmem>>, vector<8x8xf32>
    %c0_1 = arith.constant 0 : index
    %c0_2 = arith.constant 0 : index
    %1 = vector.load %arg6[%c0_1, %c0_2] : memref<8x512xf32, #tpu.memory_space<vmem>>, vector<8x512xf32>
    %cst = arith.constant dense<0.000000e+00> : vector<8x512xf32>
    %2 = tpu.matmul %0, %1, %cst {dimension_numbers = #tpu.dot_dimension_numbers<[1], [0], [0], [1], [0, 0, 1, 1], [], []>} : vector<8x8xf32>, vector<8x512xf32>, vector<8x512xf32> -> vector<8x512xf32>
    %c0_3 = arith.constant 0 : index
    %c0_4 = arith.constant 0 : index
    %3 = vector.load %arg5[%c0_3, %c0_4] : memref<8x32xf32, #tpu.memory_space<vmem>>, vector<8x32xf32>
    %c0_5 = arith.constant 0 : index
    %c0_6 = arith.constant 0 : index
    %4 = vector.load %arg7[%c0_5, %c0_6] : memref<32x512xf32, #tpu.memory_space<vmem>>, vector<32x512xf32>
    %cst_7 = arith.constant dense<0.000000e+00> : vector<8x512xf32>
    %5 = tpu.matmul %3, %4, %cst_7 {dimension_numbers = #tpu.dot_dimension_numbers<[1], [0], [0], [1], [0, 0, 1, 1], [], []>} : vector<8x32xf32>, vector<32x512xf32>, vector<8x512xf32> -> vector<8x512xf32>
    %6 = arith.mulf %2, %5 : vector<8x512xf32>
    %c0_8 = arith.constant 0 : index
    %c0_9 = arith.constant 0 : index
    %7 = vector.load %arg2[%c0_8, %c0_9] : memref<1x512xf32, #tpu.memory_space<vmem>>, vector<1x512xf32>
    %8 = vector.broadcast %7 : vector<1x512xf32> to vector<8x512xf32>
    %9 = arith.mulf %6, %8 : vector<8x512xf32>
    %c0_10 = arith.constant 0 : index
    %c0_11 = arith.constant 0 : index
    %10 = vector.load %arg8[%c0_10, %c0_11] : memref<512x32xf32, #tpu.memory_space<vmem>>, vector<512x32xf32>
    %cst_12 = arith.constant dense<0.000000e+00> : vector<8x32xf32>
    %11 = tpu.matmul %9, %10, %cst_12 {dimension_numbers = #tpu.dot_dimension_numbers<[1], [0], [0], [1], [0, 0, 1, 1], [], []>} : vector<8x512xf32>, vector<512x32xf32>, vector<8x32xf32> -> vector<8x32xf32>
    %c0_13 = arith.constant 0 : index
    %c0_14 = arith.constant 0 : index
    %12 = vector.load %arg3[%c0_13, %c0_14] : memref<8x512xf32, #tpu.memory_space<vmem>>, vector<8x512xf32>
    %13 = arith.mulf %6, %12 : vector<8x512xf32>
    %c0_15 = arith.constant 0 : index
    %c0_16 = arith.constant 0 : index
    %14 = vector.load %arg8[%c0_15, %c0_16] : memref<512x32xf32, #tpu.memory_space<vmem>>, vector<512x32xf32>
    %cst_17 = arith.constant dense<0.000000e+00> : vector<8x32xf32>
    %15 = tpu.matmul %13, %14, %cst_17 {dimension_numbers = #tpu.dot_dimension_numbers<[1], [0], [0], [1], [0, 0, 1, 1], [], []>} : vector<8x512xf32>, vector<512x32xf32>, vector<8x32xf32> -> vector<8x32xf32>
    %16 = vector.extract_strided_slice %6 {offsets = [0, 0], sizes = [1, 512], strides = [1, 1]} : vector<8x512xf32> to vector<1x512xf32>
    %c0_18 = arith.constant 0 : index
    %c0_19 = arith.constant 0 : index
    %17 = vector.load %arg1[%c0_18, %c0_19] : memref<32x512xf32, #tpu.memory_space<vmem>>, vector<32x512xf32>
    %18 = vector.broadcast %16 : vector<1x512xf32> to vector<32x512xf32>
    %19 = arith.mulf %17, %18 : vector<32x512xf32>
    %c0_20 = arith.constant 0 : index
    %c0_21 = arith.constant 0 : index
    %20 = vector.load %arg8[%c0_20, %c0_21] : memref<512x32xf32, #tpu.memory_space<vmem>>, vector<512x32xf32>
    %cst_22 = arith.constant dense<0.000000e+00> : vector<32x32xf32>
    %21 = tpu.matmul %19, %20, %cst_22 {dimension_numbers = #tpu.dot_dimension_numbers<[1], [0], [0], [1], [0, 0, 1, 1], [], []>} : vector<32x512xf32>, vector<512x32xf32>, vector<32x32xf32> -> vector<32x32xf32>
    %c0_23 = arith.constant 0 : index
    %c0_24 = arith.constant 0 : index
    %22 = vector.load %arg11[%c0_23, %c0_24] : memref<256x32xf32, #tpu.memory_space<vmem>>, vector<32x32xf32>
    tpu.vector_store %arg11[%c0_23, %c0_24], %21 {strides = array<i32>} : memref<256x32xf32, #tpu.memory_space<vmem>>, vector<32x32xf32>,
    %23 = vector.extract_strided_slice %6 {offsets = [1, 0], sizes = [1, 512], strides = [1, 1]} : vector<8x512xf32> to vector<1x512xf32>
    %c0_25 = arith.constant 0 : index
    %c0_26 = arith.constant 0 : index
    %24 = vector.load %arg1[%c0_25, %c0_26] : memref<32x512xf32, #tpu.memory_space<vmem>>, vector<32x512xf32>
    %25 = vector.broadcast %23 : vector<1x512xf32> to vector<32x512xf32>
    %26 = arith.mulf %24, %25 : vector<32x512xf32>
    %c0_27 = arith.constant 0 : index
    %c0_28 = arith.constant 0 : index
    %27 = vector.load %arg8[%c0_27, %c0_28] : memref<512x32xf32, #tpu.memory_space<vmem>>, vector<512x32xf32>
    %cst_29 = arith.constant dense<0.000000e+00> : vector<32x32xf32>
    %28 = tpu.matmul %26, %27, %cst_29 {dimension_numbers = #tpu.dot_dimension_numbers<[1], [0], [0], [1], [0, 0, 1, 1], [], []>} : vector<32x512xf32>, vector<512x32xf32>, vector<32x32xf32> -> vector<32x32xf32>
    %c32 = arith.constant 32 : index
    %c0_30 = arith.constant 0 : index
    %29 = vector.load %arg11[%c32, %c0_30] : memref<256x32xf32, #tpu.memory_space<vmem>>, vector<32x32xf32>
    tpu.vector_store %arg11[%c32, %c0_30], %28 {strides = array<i32>} : memref<256x32xf32, #tpu.memory_space<vmem>>, vector<32x32xf32>,
    %30 = vector.extract_strided_slice %6 {offsets = [2, 0], sizes = [1, 512], strides = [1, 1]} : vector<8x512xf32> to vector<1x512xf32>
    %c0_31 = arith.constant 0 : index
    %c0_32 = arith.constant 0 : index
    %31 = vector.load %arg1[%c0_31, %c0_32] : memref<32x512xf32, #tpu.memory_space<vmem>>, vector<32x512xf32>
    %32 = vector.broadcast %30 : vector<1x512xf32> to vector<32x512xf32>
    %33 = arith.mulf %31, %32 : vector<32x512xf32>
    %c0_33 = arith.constant 0 : index
    %c0_34 = arith.constant 0 : index
    %34 = vector.load %arg8[%c0_33, %c0_34] : memref<512x32xf32, #tpu.memory_space<vmem>>, vector<512x32xf32>
    %cst_35 = arith.constant dense<0.000000e+00> : vector<32x32xf32>
    %35 = tpu.matmul %33, %34, %cst_35 {dimension_numbers = #tpu.dot_dimension_numbers<[1], [0], [0], [1], [0, 0, 1, 1], [], []>} : vector<32x512xf32>, vector<512x32xf32>, vector<32x32xf32> -> vector<32x32xf32>
    %c64 = arith.constant 64 : index
    %c0_36 = arith.constant 0 : index
    %36 = vector.load %arg11[%c64, %c0_36] : memref<256x32xf32, #tpu.memory_space<vmem>>, vector<32x32xf32>
    tpu.vector_store %arg11[%c64, %c0_36], %35 {strides = array<i32>} : memref<256x32xf32, #tpu.memory_space<vmem>>, vector<32x32xf32>,
    %37 = vector.extract_strided_slice %6 {offsets = [3, 0], sizes = [1, 512], strides = [1, 1]} : vector<8x512xf32> to vector<1x512xf32>
    %c0_37 = arith.constant 0 : index
    %c0_38 = arith.constant 0 : index
    %38 = vector.load %arg1[%c0_37, %c0_38] : memref<32x512xf32, #tpu.memory_space<vmem>>, vector<32x512xf32>
    %39 = vector.broadcast %37 : vector<1x512xf32> to vector<32x512xf32>
    %40 = arith.mulf %38, %39 : vector<32x512xf32>
    %c0_39 = arith.constant 0 : index
    %c0_40 = arith.constant 0 : index
    %41 = vector.load %arg8[%c0_39, %c0_40] : memref<512x32xf32, #tpu.memory_space<vmem>>, vector<512x32xf32>
    %cst_41 = arith.constant dense<0.000000e+00> : vector<32x32xf32>
    %42 = tpu.matmul %40, %41, %cst_41 {dimension_numbers = #tpu.dot_dimension_numbers<[1], [0], [0], [1], [0, 0, 1, 1], [], []>} : vector<32x512xf32>, vector<512x32xf32>, vector<32x32xf32> -> vector<32x32xf32>
    %c96 = arith.constant 96 : index
    %c0_42 = arith.constant 0 : index
    %43 = vector.load %arg11[%c96, %c0_42] : memref<256x32xf32, #tpu.memory_space<vmem>>, vector<32x32xf32>
    tpu.vector_store %arg11[%c96, %c0_42], %42 {strides = array<i32>} : memref<256x32xf32, #tpu.memory_space<vmem>>, vector<32x32xf32>,
    %44 = vector.extract_strided_slice %6 {offsets = [4, 0], sizes = [1, 512], strides = [1, 1]} : vector<8x512xf32> to vector<1x512xf32>
    %c0_43 = arith.constant 0 : index
    %c0_44 = arith.constant 0 : index
    %45 = vector.load %arg1[%c0_43, %c0_44] : memref<32x512xf32, #tpu.memory_space<vmem>>, vector<32x512xf32>
    %46 = vector.broadcast %44 : vector<1x512xf32> to vector<32x512xf32>
    %47 = arith.mulf %45, %46 : vector<32x512xf32>
    %c0_45 = arith.constant 0 : index
    %c0_46 = arith.constant 0 : index
    %48 = vector.load %arg8[%c0_45, %c0_46] : memref<512x32xf32, #tpu.memory_space<vmem>>, vector<512x32xf32>
    %cst_47 = arith.constant dense<0.000000e+00> : vector<32x32xf32>
    %49 = tpu.matmul %47, %48, %cst_47 {dimension_numbers = #tpu.dot_dimension_numbers<[1], [0], [0], [1], [0, 0, 1, 1], [], []>} : vector<32x512xf32>, vector<512x32xf32>, vector<32x32xf32> -> vector<32x32xf32>
    %c128 = arith.constant 128 : index
    %c0_48 = arith.constant 0 : index
    %50 = vector.load %arg11[%c128, %c0_48] : memref<256x32xf32, #tpu.memory_space<vmem>>, vector<32x32xf32>
    tpu.vector_store %arg11[%c128, %c0_48], %49 {strides = array<i32>} : memref<256x32xf32, #tpu.memory_space<vmem>>, vector<32x32xf32>,
    %51 = vector.extract_strided_slice %6 {offsets = [5, 0], sizes = [1, 512], strides = [1, 1]} : vector<8x512xf32> to vector<1x512xf32>
    %c0_49 = arith.constant 0 : index
    %c0_50 = arith.constant 0 : index
    %52 = vector.load %arg1[%c0_49, %c0_50] : memref<32x512xf32, #tpu.memory_space<vmem>>, vector<32x512xf32>
    %53 = vector.broadcast %51 : vector<1x512xf32> to vector<32x512xf32>
    %54 = arith.mulf %52, %53 : vector<32x512xf32>
    %c0_51 = arith.constant 0 : index
    %c0_52 = arith.constant 0 : index
    %55 = vector.load %arg8[%c0_51, %c0_52] : memref<512x32xf32, #tpu.memory_space<vmem>>, vector<512x32xf32>
    %cst_53 = arith.constant dense<0.000000e+00> : vector<32x32xf32>
    %56 = tpu.matmul %54, %55, %cst_53 {dimension_numbers = #tpu.dot_dimension_numbers<[1], [0], [0], [1], [0, 0, 1, 1], [], []>} : vector<32x512xf32>, vector<512x32xf32>, vector<32x32xf32> -> vector<32x32xf32>
    %c160 = arith.constant 160 : index
    %c0_54 = arith.constant 0 : index
    %57 = vector.load %arg11[%c160, %c0_54] : memref<256x32xf32, #tpu.memory_space<vmem>>, vector<32x32xf32>
    tpu.vector_store %arg11[%c160, %c0_54], %56 {strides = array<i32>} : memref<256x32xf32, #tpu.memory_space<vmem>>, vector<32x32xf32>,
    %58 = vector.extract_strided_slice %6 {offsets = [6, 0], sizes = [1, 512], strides = [1, 1]} : vector<8x512xf32> to vector<1x512xf32>
    %c0_55 = arith.constant 0 : index
    %c0_56 = arith.constant 0 : index
    %59 = vector.load %arg1[%c0_55, %c0_56] : memref<32x512xf32, #tpu.memory_space<vmem>>, vector<32x512xf32>
    %60 = vector.broadcast %58 : vector<1x512xf32> to vector<32x512xf32>
    %61 = arith.mulf %59, %60 : vector<32x512xf32>
    %c0_57 = arith.constant 0 : index
    %c0_58 = arith.constant 0 : index
    %62 = vector.load %arg8[%c0_57, %c0_58] : memref<512x32xf32, #tpu.memory_space<vmem>>, vector<512x32xf32>
    %cst_59 = arith.constant dense<0.000000e+00> : vector<32x32xf32>
    %63 = tpu.matmul %61, %62, %cst_59 {dimension_numbers = #tpu.dot_dimension_numbers<[1], [0], [0], [1], [0, 0, 1, 1], [], []>} : vector<32x512xf32>, vector<512x32xf32>, vector<32x32xf32> -> vector<32x32xf32>
    %c192 = arith.constant 192 : index
    %c0_60 = arith.constant 0 : index
    %64 = vector.load %arg11[%c192, %c0_60] : memref<256x32xf32, #tpu.memory_space<vmem>>, vector<32x32xf32>
    tpu.vector_store %arg11[%c192, %c0_60], %63 {strides = array<i32>} : memref<256x32xf32, #tpu.memory_space<vmem>>, vector<32x32xf32>,
    %65 = vector.extract_strided_slice %6 {offsets = [7, 0], sizes = [1, 512], strides = [1, 1]} : vector<8x512xf32> to vector<1x512xf32>
    %c0_61 = arith.constant 0 : index
    %c0_62 = arith.constant 0 : index
    %66 = vector.load %arg1[%c0_61, %c0_62] : memref<32x512xf32, #tpu.memory_space<vmem>>, vector<32x512xf32>
    %67 = vector.broadcast %65 : vector<1x512xf32> to vector<32x512xf32>
    %68 = arith.mulf %66, %67 : vector<32x512xf32>
    %c0_63 = arith.constant 0 : index
    %c0_64 = arith.constant 0 : index
    %69 = vector.load %arg8[%c0_63, %c0_64] : memref<512x32xf32, #tpu.memory_space<vmem>>, vector<512x32xf32>
    %cst_65 = arith.constant dense<0.000000e+00> : vector<32x32xf32>
    %70 = tpu.matmul %68, %69, %cst_65 {dimension_numbers = #tpu.dot_dimension_numbers<[1], [0], [0], [1], [0, 0, 1, 1], [], []>} : vector<32x512xf32>, vector<512x32xf32>, vector<32x32xf32> -> vector<32x32xf32>
    %c224 = arith.constant 224 : index
    %c0_66 = arith.constant 0 : index
    %71 = vector.load %arg11[%c224, %c0_66] : memref<256x32xf32, #tpu.memory_space<vmem>>, vector<32x32xf32>
    tpu.vector_store %arg11[%c224, %c0_66], %70 {strides = array<i32>} : memref<256x32xf32, #tpu.memory_space<vmem>>, vector<32x32xf32>,
    %c0_67 = arith.constant 0 : index
    %c0_68 = arith.constant 0 : index
    %72 = vector.load %arg9[%c0_67, %c0_68] : memref<2x32xf32, #tpu.memory_space<vmem>>, vector<1x32xf32>
    %c1 = arith.constant 1 : index
    %c0_69 = arith.constant 0 : index
    %73 = vector.load %arg9[%c1, %c0_69] : memref<2x32xf32, #tpu.memory_space<vmem>>, vector<1x32xf32>
    %c224_70 = arith.constant 224 : index
    %c0_71 = arith.constant 0 : index
    %74 = vector.load %arg11[%c224_70, %c0_71] : memref<256x32xf32, #tpu.memory_space<vmem>>, vector<32x32xf32>
    %cst_72 = arith.constant dense<0.000000e+00> : vector<1x32xf32>
    %75 = tpu.matmul %72, %74, %cst_72 {dimension_numbers = #tpu.dot_dimension_numbers<[1], [0], [0], [1], [0, 0, 1, 1], [], []>} : vector<1x32xf32>, vector<32x32xf32>, vector<1x32xf32> -> vector<1x32xf32>
    %76 = vector.extract_strided_slice %11 {offsets = [7, 0], sizes = [1, 32], strides = [1, 1]} : vector<8x32xf32> to vector<1x32xf32>
    %77 = arith.addf %75, %76 : vector<1x32xf32>
    %cst_73 = arith.constant dense<0.000000e+00> : vector<1x32xf32>
    %78 = tpu.matmul %73, %74, %cst_73 {dimension_numbers = #tpu.dot_dimension_numbers<[1], [0], [0], [1], [0, 0, 1, 1], [], []>} : vector<1x32xf32>, vector<32x32xf32>, vector<1x32xf32> -> vector<1x32xf32>
    %79 = vector.extract_strided_slice %15 {offsets = [7, 0], sizes = [1, 32], strides = [1, 1]} : vector<8x32xf32> to vector<1x32xf32>
    %80 = arith.addf %78, %79 : vector<1x32xf32>
    %c192_74 = arith.constant 192 : index
    %c0_75 = arith.constant 0 : index
    %81 = vector.load %arg11[%c192_74, %c0_75] : memref<256x32xf32, #tpu.memory_space<vmem>>, vector<32x32xf32>
    %cst_76 = arith.constant dense<0.000000e+00> : vector<1x32xf32>
    %82 = tpu.matmul %77, %81, %cst_76 {dimension_numbers = #tpu.dot_dimension_numbers<[1], [0], [0], [1], [0, 0, 1, 1], [], []>} : vector<1x32xf32>, vector<32x32xf32>, vector<1x32xf32> -> vector<1x32xf32>
    %83 = vector.extract_strided_slice %11 {offsets = [6, 0], sizes = [1, 32], strides = [1, 1]} : vector<8x32xf32> to vector<1x32xf32>
    %84 = arith.addf %82, %83 : vector<1x32xf32>
    %cst_77 = arith.constant dense<0.000000e+00> : vector<1x32xf32>
    %85 = tpu.matmul %80, %81, %cst_77 {dimension_numbers = #tpu.dot_dimension_numbers<[1], [0], [0], [1], [0, 0, 1, 1], [], []>} : vector<1x32xf32>, vector<32x32xf32>, vector<1x32xf32> -> vector<1x32xf32>
    %86 = vector.extract_strided_slice %15 {offsets = [6, 0], sizes = [1, 32], strides = [1, 1]} : vector<8x32xf32> to vector<1x32xf32>
    %87 = arith.addf %85, %86 : vector<1x32xf32>
    %c160_78 = arith.constant 160 : index
    %c0_79 = arith.constant 0 : index
    %88 = vector.load %arg11[%c160_78, %c0_79] : memref<256x32xf32, #tpu.memory_space<vmem>>, vector<32x32xf32>
    %cst_80 = arith.constant dense<0.000000e+00> : vector<1x32xf32>
    %89 = tpu.matmul %84, %88, %cst_80 {dimension_numbers = #tpu.dot_dimension_numbers<[1], [0], [0], [1], [0, 0, 1, 1], [], []>} : vector<1x32xf32>, vector<32x32xf32>, vector<1x32xf32> -> vector<1x32xf32>
    %90 = vector.extract_strided_slice %11 {offsets = [5, 0], sizes = [1, 32], strides = [1, 1]} : vector<8x32xf32> to vector<1x32xf32>
    %91 = arith.addf %89, %90 : vector<1x32xf32>
    %cst_81 = arith.constant dense<0.000000e+00> : vector<1x32xf32>
    %92 = tpu.matmul %87, %88, %cst_81 {dimension_numbers = #tpu.dot_dimension_numbers<[1], [0], [0], [1], [0, 0, 1, 1], [], []>} : vector<1x32xf32>, vector<32x32xf32>, vector<1x32xf32> -> vector<1x32xf32>
    %93 = vector.extract_strided_slice %15 {offsets = [5, 0], sizes = [1, 32], strides = [1, 1]} : vector<8x32xf32> to vector<1x32xf32>
    %94 = arith.addf %92, %93 : vector<1x32xf32>
    %c128_82 = arith.constant 128 : index
    %c0_83 = arith.constant 0 : index
    %95 = vector.load %arg11[%c128_82, %c0_83] : memref<256x32xf32, #tpu.memory_space<vmem>>, vector<32x32xf32>
    %cst_84 = arith.constant dense<0.000000e+00> : vector<1x32xf32>
    %96 = tpu.matmul %91, %95, %cst_84 {dimension_numbers = #tpu.dot_dimension_numbers<[1], [0], [0], [1], [0, 0, 1, 1], [], []>} : vector<1x32xf32>, vector<32x32xf32>, vector<1x32xf32> -> vector<1x32xf32>
    %97 = vector.extract_strided_slice %11 {offsets = [4, 0], sizes = [1, 32], strides = [1, 1]} : vector<8x32xf32> to vector<1x32xf32>
    %98 = arith.addf %96, %97 : vector<1x32xf32>
    %cst_85 = arith.constant dense<0.000000e+00> : vector<1x32xf32>
    %99 = tpu.matmul %94, %95, %cst_85 {dimension_numbers = #tpu.dot_dimension_numbers<[1], [0], [0], [1], [0, 0, 1, 1], [], []>} : vector<1x32xf32>, vector<32x32xf32>, vector<1x32xf32> -> vector<1x32xf32>
    %100 = vector.extract_strided_slice %15 {offsets = [4, 0], sizes = [1, 32], strides = [1, 1]} : vector<8x32xf32> to vector<1x32xf32>
    %101 = arith.addf %99, %100 : vector<1x32xf32>
    %c96_86 = arith.constant 96 : index
    %c0_87 = arith.constant 0 : index
    %102 = vector.load %arg11[%c96_86, %c0_87] : memref<256x32xf32, #tpu.memory_space<vmem>>, vector<32x32xf32>
    %cst_88 = arith.constant dense<0.000000e+00> : vector<1x32xf32>
    %103 = tpu.matmul %98, %102, %cst_88 {dimension_numbers = #tpu.dot_dimension_numbers<[1], [0], [0], [1], [0, 0, 1, 1], [], []>} : vector<1x32xf32>, vector<32x32xf32>, vector<1x32xf32> -> vector<1x32xf32>
    %104 = vector.extract_strided_slice %11 {offsets = [3, 0], sizes = [1, 32], strides = [1, 1]} : vector<8x32xf32> to vector<1x32xf32>
    %105 = arith.addf %103, %104 : vector<1x32xf32>
    %cst_89 = arith.constant dense<0.000000e+00> : vector<1x32xf32>
    %106 = tpu.matmul %101, %102, %cst_89 {dimension_numbers = #tpu.dot_dimension_numbers<[1], [0], [0], [1], [0, 0, 1, 1], [], []>} : vector<1x32xf32>, vector<32x32xf32>, vector<1x32xf32> -> vector<1x32xf32>
    %107 = vector.extract_strided_slice %15 {offsets = [3, 0], sizes = [1, 32], strides = [1, 1]} : vector<8x32xf32> to vector<1x32xf32>
    %108 = arith.addf %106, %107 : vector<1x32xf32>
    %c64_90 = arith.constant 64 : index
    %c0_91 = arith.constant 0 : index
    %109 = vector.load %arg11[%c64_90, %c0_91] : memref<256x32xf32, #tpu.memory_space<vmem>>, vector<32x32xf32>
    %cst_92 = arith.constant dense<0.000000e+00> : vector<1x32xf32>
    %110 = tpu.matmul %105, %109, %cst_92 {dimension_numbers = #tpu.dot_dimension_numbers<[1], [0], [0], [1], [0, 0, 1, 1], [], []>} : vector<1x32xf32>, vector<32x32xf32>, vector<1x32xf32> -> vector<1x32xf32>
    %111 = vector.extract_strided_slice %11 {offsets = [2, 0], sizes = [1, 32], strides = [1, 1]} : vector<8x32xf32> to vector<1x32xf32>
    %112 = arith.addf %110, %111 : vector<1x32xf32>
    %cst_93 = arith.constant dense<0.000000e+00> : vector<1x32xf32>
    %113 = tpu.matmul %108, %109, %cst_93 {dimension_numbers = #tpu.dot_dimension_numbers<[1], [0], [0], [1], [0, 0, 1, 1], [], []>} : vector<1x32xf32>, vector<32x32xf32>, vector<1x32xf32> -> vector<1x32xf32>
    %114 = vector.extract_strided_slice %15 {offsets = [2, 0], sizes = [1, 32], strides = [1, 1]} : vector<8x32xf32> to vector<1x32xf32>
    %115 = arith.addf %113, %114 : vector<1x32xf32>
    %c32_94 = arith.constant 32 : index
    %c0_95 = arith.constant 0 : index
    %116 = vector.load %arg11[%c32_94, %c0_95] : memref<256x32xf32, #tpu.memory_space<vmem>>, vector<32x32xf32>
    %cst_96 = arith.constant dense<0.000000e+00> : vector<1x32xf32>
    %117 = tpu.matmul %112, %116, %cst_96 {dimension_numbers = #tpu.dot_dimension_numbers<[1], [0], [0], [1], [0, 0, 1, 1], [], []>} : vector<1x32xf32>, vector<32x32xf32>, vector<1x32xf32> -> vector<1x32xf32>
    %118 = vector.extract_strided_slice %11 {offsets = [1, 0], sizes = [1, 32], strides = [1, 1]} : vector<8x32xf32> to vector<1x32xf32>
    %119 = arith.addf %117, %118 : vector<1x32xf32>
    %cst_97 = arith.constant dense<0.000000e+00> : vector<1x32xf32>
    %120 = tpu.matmul %115, %116, %cst_97 {dimension_numbers = #tpu.dot_dimension_numbers<[1], [0], [0], [1], [0, 0, 1, 1], [], []>} : vector<1x32xf32>, vector<32x32xf32>, vector<1x32xf32> -> vector<1x32xf32>
    %121 = vector.extract_strided_slice %15 {offsets = [1, 0], sizes = [1, 32], strides = [1, 1]} : vector<8x32xf32> to vector<1x32xf32>
    %122 = arith.addf %120, %121 : vector<1x32xf32>
    %c0_98 = arith.constant 0 : index
    %c0_99 = arith.constant 0 : index
    %123 = vector.load %arg11[%c0_98, %c0_99] : memref<256x32xf32, #tpu.memory_space<vmem>>, vector<32x32xf32>
    %cst_100 = arith.constant dense<0.000000e+00> : vector<1x32xf32>
    %124 = tpu.matmul %119, %123, %cst_100 {dimension_numbers = #tpu.dot_dimension_numbers<[1], [0], [0], [1], [0, 0, 1, 1], [], []>} : vector<1x32xf32>, vector<32x32xf32>, vector<1x32xf32> -> vector<1x32xf32>
    %125 = vector.extract_strided_slice %11 {offsets = [0, 0], sizes = [1, 32], strides = [1, 1]} : vector<8x32xf32> to vector<1x32xf32>
    %126 = arith.addf %124, %125 : vector<1x32xf32>
    %cst_101 = arith.constant dense<0.000000e+00> : vector<1x32xf32>
    %127 = tpu.matmul %122, %123, %cst_101 {dimension_numbers = #tpu.dot_dimension_numbers<[1], [0], [0], [1], [0, 0, 1, 1], [], []>} : vector<1x32xf32>, vector<32x32xf32>, vector<1x32xf32> -> vector<1x32xf32>
    %128 = vector.extract_strided_slice %15 {offsets = [0, 0], sizes = [1, 32], strides = [1, 1]} : vector<8x32xf32> to vector<1x32xf32>
    %129 = arith.addf %127, %128 : vector<1x32xf32>
    %c0_102 = arith.constant 0 : index
    %c0_103 = arith.constant 0 : index
    %130 = vector.load %arg10[%c0_102, %c0_103] : memref<2x32xf32, #tpu.memory_space<vmem>>, vector<1x32xf32>
    tpu.vector_store %arg10[%c0_102, %c0_103], %126 {strides = array<i32>} : memref<2x32xf32, #tpu.memory_space<vmem>>, vector<1x32xf32>,
    %c1_104 = arith.constant 1 : index
    %c0_105 = arith.constant 0 : index
    %131 = vector.load %arg10[%c1_104, %c0_105] : memref<2x32xf32, #tpu.memory_space<vmem>>, vector<1x32xf32>
    tpu.vector_store %arg10[%c1_104, %c0_105], %129 {strides = array<i32>} : memref<2x32xf32, #tpu.memory_space<vmem>>, vector<1x32xf32>,
    return
  }
  func.func @transform_0(%arg0: i32) -> (i32, i32) {
    %c0_i32 = arith.constant 0 : i32
    %c0_i32_0 = arith.constant 0 : i32
    %c0_i32_1 = arith.constant 0 : i32
    return %c0_i32, %c0_i32_0 : i32, i32
  }
  func.func @transform_1(%arg0: i32) -> (i32, i32) {
    %c0_i32 = arith.constant 0 : i32
    %c0_i32_0 = arith.constant 0 : i32
    %c0_i32_1 = arith.constant 0 : i32
    return %c0_i32, %c0_i32_0 : i32, i32
  }
  func.func @transform_2(%arg0: i32) -> (i32, i32) {
    %c0_i32 = arith.constant 0 : i32
    %c0_i32_0 = arith.constant 0 : i32
    %c0_i32_1 = arith.constant 0 : i32
    return %c0_i32, %c0_i32_0 : i32, i32
  }
  func.func @transform_3(%arg0: i32) -> (i32, i32) {
    %c0_i32 = arith.constant 0 : i32
    %c0_i32_0 = arith.constant 0 : i32
    %c0_i32_1 = arith.constant 0 : i32
    return %c0_i32, %c0_i32_0 : i32, i32
  }
  func.func @transform_4(%arg0: i32) -> (i32, i32) {
    %c0_i32 = arith.constant 0 : i32
    %c0_i32_0 = arith.constant 0 : i32
    %c0_i32_1 = arith.constant 0 : i32
    return %c0_i32, %c0_i32_0 : i32, i32
  }
  func.func @transform_5(%arg0: i32) -> (i32, i32) {
    %c0_i32 = arith.constant 0 : i32
    %c0_i32_0 = arith.constant 0 : i32
    %c0_i32_1 = arith.constant 0 : i32
    return %c0_i32, %c0_i32_0 : i32, i32
  }
  func.func @transform_6(%arg0: i32) -> (i32, i32) {
    %c0_i32 = arith.constant 0 : i32
    %c0_i32_0 = arith.constant 0 : i32
    %c0_i32_1 = arith.constant 0 : i32
    return %c0_i32, %c0_i32_0 : i32, i32
  }
  func.func @transform_7(%arg0: i32) -> (i32, i32) {
    %c0_i32 = arith.constant 0 : i32
    %c0_i32_0 = arith.constant 0 : i32
    %c0_i32_1 = arith.constant 0 : i32
    return %c0_i32, %c0_i32_0 : i32, i32
  }
  func.func @transform_8(%arg0: i32) -> (i32, i32) {
    %c0_i32 = arith.constant 0 : i32
    %c0_i32_0 = arith.constant 0 : i32
    %c0_i32_1 = arith.constant 0 : i32
    return %c0_i32, %c0_i32_0 : i32, i32
  }
  func.func @transform_9(%arg0: i32) -> (i32, i32) {
    %c0_i32 = arith.constant 0 : i32
    %c0_i32_0 = arith.constant 0 : i32
    %c0_i32_1 = arith.constant 0 : i32
    return %c0_i32, %c0_i32_0 : i32, i32
  }
}

</mosaic_0001>

<llo_original>
// kernel: tpu_custom_call.1
$region0: #{tpu_custom_call.1}
  #allocation0 [shape = 'u32[]', space=smem, size = 0x4, offset = 0x4, fixed_abs, tag = 'smem constant byte address 0x4 - core index']
  #allocation1 [shape = 'u32[144,128]{1,0:T(1,128)}', space=vmem, size = 0x12000, scoped, tag = 'internal scratch']
  #allocation2 [shape = 'f32[256,32]{1,0:T(8,128)}', space=vmem, size = 0x20000, scoped, tag = 'scratch operand']
  %s0 = inlined_call_operand.vmem [shape: f32[32,512], index: 0, kind: input, shape index: {}]
  %s1 = inlined_call_operand.vmem [shape: f32[1,512], index: 1, kind: input, shape index: {}]
  %s2 = inlined_call_operand.vmem [shape: f32[8,512], index: 2, kind: input, shape index: {}]
  %s3 = inlined_call_operand.vmem [shape: f32[8,8], index: 3, kind: input, shape index: {}]
  %s4 = inlined_call_operand.vmem [shape: f32[8,32], index: 4, kind: input, shape index: {}]
  %s5 = inlined_call_operand.vmem [shape: f32[8,512], index: 5, kind: input, shape index: {}]
  %s6 = inlined_call_operand.vmem [shape: f32[32,512], index: 6, kind: input, shape index: {}]
  %s7 = inlined_call_operand.vmem [shape: f32[512,32], index: 7, kind: input, shape index: {}]
  %s8 = inlined_call_operand.vmem [shape: f32[2,32], index: 8, kind: input, shape index: {}]
  %s9 = inlined_call_operand.hbm [shape: f32[2,32], index: 9, kind: output, shape index: {}]
  %s10 = sld [smem:[#allocation0]]
  $region46: #{tpu_custom_call.1} parent=0
    _
  %s12 = ssub.s32 1, %s10
  %s13 = scalar_select 0, %s12, %s10
  $region1: #{tpu_custom_call.1} parent=0
    #allocation3 [shape = 'u8[1024]{0}', space=vmem, size = 0x400, scoped, tag = 'output window, operand 0, single buffered']
    #allocation4 [shape = 's32[1]{0}', space=sflag, size = 0x4, scoped, tag = 'scoped memory for tpu_custom_call.1']
    %14 = vsyncpa [#allocation4], 0
    // Predicated region
    $region2: #{tpu_custom_call.1} parent=1 // pred_check
      _
    $region3: #{tpu_custom_call.1} parent=1 // pred_check_branch
      %16 = sbr.rel (0) target = $region5
    $region4: #{tpu_custom_call.1} parent=1 // pred_region
      _
    $region5: #{tpu_custom_call.1} parent=1 // pred_fallthru
      _
    // Predicated region
    $region6: #{tpu_custom_call.1} parent=1 // pred_check
      _
    $region7: #{tpu_custom_call.1} parent=1 // pred_check_branch
      %18 = sbr.rel (0) target = $region9
    $region8: #{tpu_custom_call.1} parent=1 // pred_region
      _
    $region9: #{tpu_custom_call.1} parent=1 // pred_fallthru
      _
    // Predicated region
    $region10: #{tpu_custom_call.1} parent=1 // pred_check
      _
    $region11: #{tpu_custom_call.1} parent=1 // pred_check_branch
      %20 = sbr.rel (0) target = $region13
    $region12: #{tpu_custom_call.1} parent=1 // pred_region
      _
    $region13: #{tpu_custom_call.1} parent=1 // pred_fallthru
      _
    // Predicated region
    $region14: #{tpu_custom_call.1} parent=1 // pred_check
      _
    $region15: #{tpu_custom_call.1} parent=1 // pred_check_branch
      %22 = sbr.rel (0) target = $region17
    $region16: #{tpu_custom_call.1} parent=1 // pred_region
      _
    $region17: #{tpu_custom_call.1} parent=1 // pred_fallthru
      _
    // Predicated region
    $region18: #{tpu_custom_call.1} parent=1 // pred_check
      _
    $region19: #{tpu_custom_call.1} parent=1 // pred_check_branch
      %24 = sbr.rel (0) target = $region21
    $region20: #{tpu_custom_call.1} parent=1 // pred_region
      _
    $region21: #{tpu_custom_call.1} parent=1 // pred_fallthru
      _
    // Predicated region
    $region22: #{tpu_custom_call.1} parent=1 // pred_check
      _
    $region23: #{tpu_custom_call.1} parent=1 // pred_check_branch
      %26 = sbr.rel (0) target = $region25
    $region24: #{tpu_custom_call.1} parent=1 // pred_region
      _
    $region25: #{tpu_custom_call.1} parent=1 // pred_fallthru
      _
    // Predicated region
    $region26: #{tpu_custom_call.1} parent=1 // pred_check
      _
    $region27: #{tpu_custom_call.1} parent=1 // pred_check_branch
      %28 = sbr.rel (0) target = $region29
    $region28: #{tpu_custom_call.1} parent=1 // pred_region
      _
    $region29: #{tpu_custom_call.1} parent=1 // pred_fallthru
      _
    // Predicated region
    $region30: #{tpu_custom_call.1} parent=1 // pred_check
      _
    $region31: #{tpu_custom_call.1} parent=1 // pred_check_branch
      %30 = sbr.rel (0) target = $region33
    $region32: #{tpu_custom_call.1} parent=1 // pred_region
      _
    $region33: #{tpu_custom_call.1} parent=1 // pred_fallthru
      _
    // Predicated region
    $region34: #{tpu_custom_call.1} parent=1 // pred_check
      _
    $region35: #{tpu_custom_call.1} parent=1 // pred_check_branch
      %32 = sbr.rel (0) target = $region37
    $region36: #{tpu_custom_call.1} parent=1 // pred_region
      _
    $region37: #{tpu_custom_call.1} parent=1 // pred_fallthru
      _
    %v33 = vld [vmem:[%s3] sm:$0xff]
    %v34 = vld [vmem:[%s5] sm:$0xff]
    %v35 = vld [vmem:[%s5 + $0x8] sm:$0xff]
    %v36 = vld [vmem:[%s5 + $0x10] sm:$0xff]
    %v37 = vld [vmem:[%s5 + $0x18] sm:$0xff]
    %vm38 = vcmask 64512
    %v40 = vsel %vm38, %v33, 0
    %42 = vmatprep.subr.mxu0 0.0
    %43 = vmatpush1.msra.mxu0 0.0
    %44 = vmatprep.subr.mxu0 0.0
    %45 = vmatpush1.msra.mxu0 0.0
    %46 = vmatprep.subr.mxu0 0.0
    %47 = vmatpush1.msra.mxu0 0.0
    %48 = vmatprep.subr.mxu0 0.0
    %49 = vmatpush1.msra.mxu0 0.0
    %50 = vmatprep.subr.mxu0 0.0
    %51 = vmatpush1.msra.mxu0 0.0
    %52 = vmatprep.subr.mxu0 0.0
    %53 = vmatpush1.msra.mxu0 0.0
    %54 = vmatprep.subr.mxu0 0.0
    %55 = vmatpush1.msra.mxu0 0.0
    %56 = vmatprep.subr.mxu0 0.0
    %57 = vmatpush1.msra.mxu0 0.0
    %58 = vmatprep.subr.mxu0 0.0
    %59 = vmatpush1.msra.mxu0 0.0
    %60 = vmatprep.subr.mxu0 0.0
    %61 = vmatpush1.msra.mxu0 0.0
    %62 = vmatprep.subr.mxu0 0.0
    %63 = vmatpush1.msra.mxu0 0.0
    %64 = vmatprep.subr.mxu0 0.0
    %65 = vmatpush1.msra.mxu0 0.0
    %66 = vmatprep.subr.mxu0 0.0
    %67 = vmatpush1.msra.mxu0 0.0
    %68 = vmatprep.subr.mxu0 0.0
    %69 = vmatpush1.msra.mxu0 0.0
    %70 = vmatprep.subr.mxu0 0.0
    %71 = vmatpush1.msra.mxu0 0.0
    %72 = vmatprep.subr.mxu0 %v35
    %73 = vmatpush1.msra.mxu0 %v34
    %74 = vmatprep.subr.mxu0 0.0
    %75 = vmatpush2.msra.mxu0 0.0
    %76 = vmatprep.subr.mxu0 0.0
    %77 = vmatpush2.msra.mxu0 0.0
    %78 = vmatprep.subr.mxu0 0.0
    %79 = vmatpush2.msra.mxu0 0.0
    %80 = vmatprep.subr.mxu0 0.0
    %81 = vmatpush2.msra.mxu0 0.0
    %82 = vmatprep.subr.mxu0 0.0
    %83 = vmatpush2.msra.mxu0 0.0
    %84 = vmatprep.subr.mxu0 0.0
    %85 = vmatpush2.msra.mxu0 0.0
    %86 = vmatprep.subr.mxu0 0.0
    %87 = vmatpush2.msra.mxu0 0.0
    %88 = vmatprep.subr.mxu0 0.0
    %89 = vmatpush2.msra.mxu0 0.0
    %90 = vmatprep.subr.mxu0 0.0
    %91 = vmatpush2.msra.mxu0 0.0
    %92 = vmatprep.subr.mxu0 0.0
    %93 = vmatpush2.msra.mxu0 0.0
    %94 = vmatprep.subr.mxu0 0.0
    %95 = vmatpush2.msra.mxu0 0.0
    %96 = vmatprep.subr.mxu0 0.0
    %97 = vmatpush2.msra.mxu0 0.0
    %98 = vmatprep.subr.mxu0 0.0
    %99 = vmatpush2.msra.mxu0 0.0
    %100 = vmatprep.subr.mxu0 0.0
    %101 = vmatpush2.msra.mxu0 0.0
    %102 = vmatprep.subr.mxu0 0.0
    %103 = vmatpush2.msra.mxu0 0.0
    %104 = vmatprep.subr.mxu0 0.0
    %105 = vmatpush2.msra.mxu0 0.0
    %106 = vmatprep.mubr.f32.mxu0 0.0
    %107 = vmatmul.mubr.f32.gmra.mxu0 %v40
    %v108 = vpop.f32.mrf.mxu0
    %v109 = vadd.f32 0.0, %v108
    %v110 = vpop.f32.mrf.mxu0
    %v111 = vadd.f32 0.0, %v110
    %112 = vdwg.mxu0
    %113 = vmatprep.subr.mxu0 0.0
    %114 = vmatpush1.msra.mxu0 0.0
    %115 = vmatprep.subr.mxu0 0.0
    %116 = vmatpush1.msra.mxu0 0.0
    %117 = vmatprep.subr.mxu0 0.0
    %118 = vmatpush1.msra.mxu0 0.0
    %119 = vmatprep.subr.mxu0 0.0
    %120 = vmatpush1.msra.mxu0 0.0
    %121 = vmatprep.subr.mxu0 0.0
    %122 = vmatpush1.msra.mxu0 0.0
    %123 = vmatprep.subr.mxu0 0.0
    %124 = vmatpush1.msra.mxu0 0.0
    %125 = vmatprep.subr.mxu0 0.0
    %126 = vmatpush1.msra.mxu0 0.0
    %127 = vmatprep.subr.mxu0 0.0
    %128 = vmatpush1.msra.mxu0 0.0
    %129 = vmatprep.subr.mxu0 0.0
    %130 = vmatpush1.msra.mxu0 0.0
    %131 = vmatprep.subr.mxu0 0.0
    %132 = vmatpush1.msra.mxu0 0.0
    %133 = vmatprep.subr.mxu0 0.0
    %134 = vmatpush1.msra.mxu0 0.0
    %135 = vmatprep.subr.mxu0 0.0
    %136 = vmatpush1.msra.mxu0 0.0
    %137 = vmatprep.subr.mxu0 0.0
    %138 = vmatpush1.msra.mxu0 0.0
    %139 = vmatprep.subr.mxu0 0.0
    %140 = vmatpush1.msra.mxu0 0.0
    %141 = vmatprep.subr.mxu0 0.0
    %142 = vmatpush1.msra.mxu0 0.0
    %143 = vmatprep.subr.mxu0 %v37
    %144 = vmatpush1.msra.mxu0 %v36
    %145 = vmatprep.subr.mxu0 0.0
    %146 = vmatpush2.msra.mxu0 0.0
    %147 = vmatprep.subr.mxu0 0.0
    %148 = vmatpush2.msra.mxu0 0.0
    %149 = vmatprep.subr.mxu0 0.0
    %150 = vmatpush2.msra.mxu0 0.0
    %151 = vmatprep.subr.mxu0 0.0
    %152 = vmatpush2.msra.mxu0 0.0
    %153 = vmatprep.subr.mxu0 0.0
    %154 = vmatpush2.msra.mxu0 0.0
    %155 = vmatprep.subr.mxu0 0.0
    %156 = vmatpush2.msra.mxu0 0.0
    %157 = vmatprep.subr.mxu0 0.0
    %158 = vmatpush2.msra.mxu0 0.0
    %159 = vmatprep.subr.mxu0 0.0
    %160 = vmatpush2.msra.mxu0 0.0
    %161 = vmatprep.subr.mxu0 0.0
    %162 = vmatpush2.msra.mxu0 0.0
    %163 = vmatprep.subr.mxu0 0.0
    %164 = vmatpush2.msra.mxu0 0.0
    %165 = vmatprep.subr.mxu0 0.0
    %166 = vmatpush2.msra.mxu0 0.0
    %167 = vmatprep.subr.mxu0 0.0
    %168 = vmatpush2.msra.mxu0 0.0
    %169 = vmatprep.subr.mxu0 0.0
    %170 = vmatpush2.msra.mxu0 0.0
    %171 = vmatprep.subr.mxu0 0.0
    %172 = vmatpush2.msra.mxu0 0.0
    %173 = vmatprep.subr.mxu0 0.0
    %174 = vmatpush2.msra.mxu0 0.0
    %175 = vmatprep.subr.mxu0 0.0
    %176 = vmatpush2.msra.mxu0 0.0
    %177 = vmatprep.mubr.f32.mxu0 0.0
    %178 = vmatmul.mubr.f32.gmra.mxu0 %v40
    %v179 = vpop.f32.mrf.mxu0
    %v180 = vadd.f32 0.0, %v179
    %v181 = vpop.f32.mrf.mxu0
    %v182 = vadd.f32 0.0, %v181
    %183 = vdwg.mxu0
    %v184 = vld [vmem:[%s4] sm:$0xff]
    %v185 = vld [vmem:[%s6] sm:$0xff]
    %v186 = vld [vmem:[%s6 + $0x8] sm:$0xff]
    %v187 = vld [vmem:[%s6 + $0x10] sm:$0xff]
    %v188 = vld [vmem:[%s6 + $0x18] sm:$0xff]
    %v189 = vld [vmem:[%s6 + $0x20] sm:$0xff]
    %v190 = vld [vmem:[%s6 + $0x28] sm:$0xff]
    %v191 = vld [vmem:[%s6 + $0x30] sm:$0xff]
    %v192 = vld [vmem:[%s6 + $0x38] sm:$0xff]
    %v193 = vld [vmem:[%s6 + $0x40] sm:$0xff]
    %v194 = vld [vmem:[%s6 + $0x48] sm:$0xff]
    %v195 = vld [vmem:[%s6 + $0x50] sm:$0xff]
    %v196 = vld [vmem:[%s6 + $0x58] sm:$0xff]
    %v197 = vld [vmem:[%s6 + $0x60] sm:$0xff]
    %v198 = vld [vmem:[%s6 + $0x68] sm:$0xff]
    %v199 = vld [vmem:[%s6 + $0x70] sm:$0xff]
    %v200 = vld [vmem:[%s6 + $0x78] sm:$0xff]
    %vm201 = vcmask 261120
    %v203 = vsel %vm201, %v184, 0
    %205 = vmatprep.subr.mxu0 0.0
    %206 = vmatpush1.msra.mxu0 0.0
    %207 = vmatprep.subr.mxu0 0.0
    %208 = vmatpush1.msra.mxu0 0.0
    %209 = vmatprep.subr.mxu0 0.0
    %210 = vmatpush1.msra.mxu0 0.0
    %211 = vmatprep.subr.mxu0 0.0
    %212 = vmatpush1.msra.mxu0 0.0
    %213 = vmatprep.subr.mxu0 0.0
    %214 = vmatpush1.msra.mxu0 0.0
    %215 = vmatprep.subr.mxu0 0.0
    %216 = vmatpush1.msra.mxu0 0.0
    %217 = vmatprep.subr.mxu0 0.0
    %218 = vmatpush1.msra.mxu0 0.0
    %219 = vmatprep.subr.mxu0 0.0
    %220 = vmatpush1.msra.mxu0 0.0
    %221 = vmatprep.subr.mxu0 0.0
    %222 = vmatpush1.msra.mxu0 0.0
    %223 = vmatprep.subr.mxu0 0.0
    %224 = vmatpush1.msra.mxu0 0.0
    %225 = vmatprep.subr.mxu0 0.0
    %226 = vmatpush1.msra.mxu0 0.0
    %227 = vmatprep.subr.mxu0 0.0
    %228 = vmatpush1.msra.mxu0 0.0
    %229 = vmatprep.subr.mxu0 %v198
    %230 = vmatpush1.msra.mxu0 %v197
    %231 = vmatprep.subr.mxu0 %v194
    %232 = vmatpush1.msra.mxu0 %v193
    %233 = vmatprep.subr.mxu0 %v190
    %234 = vmatpush1.msra.mxu0 %v189
    %235 = vmatprep.subr.mxu0 %v186
    %236 = vmatpush1.msra.mxu0 %v185
    %237 = vmatprep.subr.mxu0 0.0
    %238 = vmatpush2.msra.mxu0 0.0
    %239 = vmatprep.subr.mxu0 0.0
    %240 = vmatpush2.msra.mxu0 0.0
    %241 = vmatprep.subr.mxu0 0.0
    %242 = vmatpush2.msra.mxu0 0.0
    %243 = vmatprep.subr.mxu0 0.0
    %244 = vmatpush2.msra.mxu0 0.0
    %245 = vmatprep.subr.mxu0 0.0
    %246 = vmatpush2.msra.mxu0 0.0
    %247 = vmatprep.subr.mxu0 0.0
    %248 = vmatpush2.msra.mxu0 0.0
    %249 = vmatprep.subr.mxu0 0.0
    %250 = vmatpush2.msra.mxu0 0.0
    %251 = vmatprep.subr.mxu0 0.0
    %252 = vmatpush2.msra.mxu0 0.0
    %253 = vmatprep.subr.mxu0 0.0
    %254 = vmatpush2.msra.mxu0 0.0
    %255 = vmatprep.subr.mxu0 0.0
    %256 = vmatpush2.msra.mxu0 0.0
    %257 = vmatprep.subr.mxu0 0.0
    %258 = vmatpush2.msra.mxu0 0.0
    %259 = vmatprep.subr.mxu0 0.0
    %260 = vmatpush2.msra.mxu0 0.0
    %261 = vmatprep.subr.mxu0 0.0
    %262 = vmatpush2.msra.mxu0 0.0
    %263 = vmatprep.subr.mxu0 0.0
    %264 = vmatpush2.msra.mxu0 0.0
    %265 = vmatprep.subr.mxu0 0.0
    %266 = vmatpush2.msra.mxu0 0.0
    %267 = vmatprep.subr.mxu0 0.0
    %268 = vmatpush2.msra.mxu0 0.0
    %269 = vmatprep.mubr.f32.mxu0 0.0
    %270 = vmatmul.mubr.f32.gmra.mxu0 %v203
    %v271 = vpop.f32.mrf.mxu0
    %v272 = vadd.f32 0.0, %v271
    %v273 = vpop.f32.mrf.mxu0
    %v274 = vadd.f32 0.0, %v273
    %275 = vdwg.mxu0
    %276 = vmatprep.subr.mxu0 0.0
    %277 = vmatpush1.msra.mxu0 0.0
    %278 = vmatprep.subr.mxu0 0.0
    %279 = vmatpush1.msra.mxu0 0.0
    %280 = vmatprep.subr.mxu0 0.0
    %281 = vmatpush1.msra.mxu0 0.0
    %282 = vmatprep.subr.mxu0 0.0
    %283 = vmatpush1.msra.mxu0 0.0
    %284 = vmatprep.subr.mxu0 0.0
    %285 = vmatpush1.msra.mxu0 0.0
    %286 = vmatprep.subr.mxu0 0.0
    %287 = vmatpush1.msra.mxu0 0.0
    %288 = vmatprep.subr.mxu0 0.0
    %289 = vmatpush1.msra.mxu0 0.0
    %290 = vmatprep.subr.mxu0 0.0
    %291 = vmatpush1.msra.mxu0 0.0
    %292 = vmatprep.subr.mxu0 0.0
    %293 = vmatpush1.msra.mxu0 0.0
    %294 = vmatprep.subr.mxu0 0.0
    %295 = vmatpush1.msra.mxu0 0.0
    %296 = vmatprep.subr.mxu0 0.0
    %297 = vmatpush1.msra.mxu0 0.0
    %298 = vmatprep.subr.mxu0 0.0
    %299 = vmatpush1.msra.mxu0 0.0
    %300 = vmatprep.subr.mxu0 %v200
    %301 = vmatpush1.msra.mxu0 %v199
    %302 = vmatprep.subr.mxu0 %v196
    %303 = vmatpush1.msra.mxu0 %v195
    %304 = vmatprep.subr.mxu0 %v192
    %305 = vmatpush1.msra.mxu0 %v191
    %306 = vmatprep.subr.mxu0 %v188
    %307 = vmatpush1.msra.mxu0 %v187
    %308 = vmatprep.subr.mxu0 0.0
    %309 = vmatpush2.msra.mxu0 0.0
    %310 = vmatprep.subr.mxu0 0.0
    %311 = vmatpush2.msra.mxu0 0.0
    %312 = vmatprep.subr.mxu0 0.0
    %313 = vmatpush2.msra.mxu0 0.0
    %314 = vmatprep.subr.mxu0 0.0
    %315 = vmatpush2.msra.mxu0 0.0
    %316 = vmatprep.subr.mxu0 0.0
    %317 = vmatpush2.msra.mxu0 0.0
    %318 = vmatprep.subr.mxu0 0.0
    %319 = vmatpush2.msra.mxu0 0.0
    %320 = vmatprep.subr.mxu0 0.0
    %321 = vmatpush2.msra.mxu0 0.0
    %322 = vmatprep.subr.mxu0 0.0
    %323 = vmatpush2.msra.mxu0 0.0
    %324 = vmatprep.subr.mxu0 0.0
    %325 = vmatpush2.msra.mxu0 0.0
    %326 = vmatprep.subr.mxu0 0.0
    %327 = vmatpush2.msra.mxu0 0.0
    %328 = vmatprep.subr.mxu0 0.0
    %329 = vmatpush2.msra.mxu0 0.0
    %330 = vmatprep.subr.mxu0 0.0
    %331 = vmatpush2.msra.mxu0 0.0
    %332 = vmatprep.subr.mxu0 0.0
    %333 = vmatpush2.msra.mxu0 0.0
    %334 = vmatprep.subr.mxu0 0.0
    %335 = vmatpush2.msra.mxu0 0.0
    %336 = vmatprep.subr.mxu0 0.0
    %337 = vmatpush2.msra.mxu0 0.0
    %338 = vmatprep.subr.mxu0 0.0
    %339 = vmatpush2.msra.mxu0 0.0
    %340 = vmatprep.mubr.f32.mxu0 0.0
    %341 = vmatmul.mubr.f32.gmra.mxu0 %v203
    %v342 = vpop.f32.mrf.mxu0
    %v343 = vadd.f32 0.0, %v342
    %v344 = vpop.f32.mrf.mxu0
    %v345 = vadd.f32 0.0, %v344
    %346 = vdwg.mxu0
    %v347 = vmul.f32 %v109, %v272
    %v348 = vmul.f32 %v111, %v274
    %v349 = vmul.f32 %v180, %v343
    %v350 = vmul.f32 %v182, %v345
    %v351 = vld [vmem:[%s1] sm:$0xf]
    %v353 = vlaneseq
    %v354 = vshrl.u32 %v353, 7
    %v355 = vsub.s32 0, %v354
    %v356 = vrot.slane %v351, %v355
    %v357 = vlaneseq
    %v358 = vshrl.u32 %v357, 7
    %v359 = vsub.s32 1, %v358
    %v360 = vrot.slane %v351, %v359
    %v361 = vlaneseq
    %v362 = vshrl.u32 %v361, 7
    %v363 = vsub.s32 2, %v362
    %v364 = vrot.slane %v351, %v363
    %v365 = vlaneseq
    %v366 = vshrl.u32 %v365, 7
    %v367 = vsub.s32 3, %v366
    %v368 = vrot.slane %v351, %v367
    %v373 = vmul.f32 %v347, %v356
    %v374 = vmul.f32 %v348, %v360
    %v375 = vmul.f32 %v349, %v364
    %v376 = vmul.f32 %v350, %v368
    %v377 = vld [vmem:[%s7] sm:$0xff]
    %v378 = vld [vmem:[%s7 + $0x8] sm:$0xff]
    %v379 = vld [vmem:[%s7 + $0x10] sm:$0xff]
    %v380 = vld [vmem:[%s7 + $0x18] sm:$0xff]
    %v381 = vld [vmem:[%s7 + $0x20] sm:$0xff]
    %v382 = vld [vmem:[%s7 + $0x28] sm:$0xff]
    %v383 = vld [vmem:[%s7 + $0x30] sm:$0xff]
    %v384 = vld [vmem:[%s7 + $0x38] sm:$0xff]
    %v385 = vld [vmem:[%s7 + $0x40] sm:$0xff]
    %v386 = vld [vmem:[%s7 + $0x48] sm:$0xff]
    %v387 = vld [vmem:[%s7 + $0x50] sm:$0xff]
    %v388 = vld [vmem:[%s7 + $0x58] sm:$0xff]
    %v389 = vld [vmem:[%s7 + $0x60] sm:$0xff]
    %v390 = vld [vmem:[%s7 + $0x68] sm:$0xff]
    %v391 = vld [vmem:[%s7 + $0x70] sm:$0xff]
    %v392 = vld [vmem:[%s7 + $0x78] sm:$0xff]
    %v393 = vld [vmem:[%s7 + $0x80] sm:$0xff]
    %v394 = vld [vmem:[%s7 + $0x88] sm:$0xff]
    %v395 = vld [vmem:[%s7 + $0x90] sm:$0xff]
    %v396 = vld [vmem:[%s7 + $0x98] sm:$0xff]
    %v397 = vld [vmem:[%s7 + $0xa0] sm:$0xff]
    %v398 = vld [vmem:[%s7 + $0xa8] sm:$0xff]
    %v399 = vld [vmem:[%s7 + $0xb0] sm:$0xff]
    %v400 = vld [vmem:[%s7 + $0xb8] sm:$0xff]
    %v401 = vld [vmem:[%s7 + $0xc0] sm:$0xff]
    %v402 = vld [vmem:[%s7 + $0xc8] sm:$0xff]
    %v403 = vld [vmem:[%s7 + $0xd0] sm:$0xff]
    %v404 = vld [vmem:[%s7 + $0xd8] sm:$0xff]
    %v405 = vld [vmem:[%s7 + $0xe0] sm:$0xff]
    %v406 = vld [vmem:[%s7 + $0xe8] sm:$0xff]
    %v407 = vld [vmem:[%s7 + $0xf0] sm:$0xff]
    %v408 = vld [vmem:[%s7 + $0xf8] sm:$0xff]
    %v409 = vld [vmem:[%s7 + $0x100] sm:$0xff]
    %v410 = vld [vmem:[%s7 + $0x108] sm:$0xff]
    %v411 = vld [vmem:[%s7 + $0x110] sm:$0xff]
    %v412 = vld [vmem:[%s7 + $0x118] sm:$0xff]
    %v413 = vld [vmem:[%s7 + $0x120] sm:$0xff]
    %v414 = vld [vmem:[%s7 + $0x128] sm:$0xff]
    %v415 = vld [vmem:[%s7 + $0x130] sm:$0xff]
    %v416 = vld [vmem:[%s7 + $0x138] sm:$0xff]
    %v417 = vld [vmem:[%s7 + $0x140] sm:$0xff]
    %v418 = vld [vmem:[%s7 + $0x148] sm:$0xff]
    %v419 = vld [vmem:[%s7 + $0x150] sm:$0xff]
    %v420 = vld [vmem:[%s7 + $0x158] sm:$0xff]
    %v421 = vld [vmem:[%s7 + $0x160] sm:$0xff]
    %v422 = vld [vmem:[%s7 + $0x168] sm:$0xff]
    %v423 = vld [vmem:[%s7 + $0x170] sm:$0xff]
    %v424 = vld [vmem:[%s7 + $0x178] sm:$0xff]
    %v425 = vld [vmem:[%s7 + $0x180] sm:$0xff]
    %v426 = vld [vmem:[%s7 + $0x188] sm:$0xff]
    %v427 = vld [vmem:[%s7 + $0x190] sm:$0xff]
    %v428 = vld [vmem:[%s7 + $0x198] sm:$0xff]
    %v429 = vld [vmem:[%s7 + $0x1a0] sm:$0xff]
    %v430 = vld [vmem:[%s7 + $0x1a8] sm:$0xff]
    %v431 = vld [vmem:[%s7 + $0x1b0] sm:$0xff]
    %v432 = vld [vmem:[%s7 + $0x1b8] sm:$0xff]
    %v433 = vld [vmem:[%s7 + $0x1c0] sm:$0xff]
    %v434 = vld [vmem:[%s7 + $0x1c8] sm:$0xff]
    %v435 = vld [vmem:[%s7 + $0x1d0] sm:$0xff]
    %v436 = vld [vmem:[%s7 + $0x1d8] sm:$0xff]
    %v437 = vld [vmem:[%s7 + $0x1e0] sm:$0xff]
    %v438 = vld [vmem:[%s7 + $0x1e8] sm:$0xff]
    %v439 = vld [vmem:[%s7 + $0x1f0] sm:$0xff]
    %v440 = vld [vmem:[%s7 + $0x1f8] sm:$0xff]
    %441 = vmatprep.subr.mxu0 0.0
    %442 = vmatpush1.msra.mxu0 %v392
    %443 = vmatprep.subr.mxu0 0.0
    %444 = vmatpush1.msra.mxu0 %v391
    %445 = vmatprep.subr.mxu0 0.0
    %446 = vmatpush1.msra.mxu0 %v390
    %447 = vmatprep.subr.mxu0 0.0
    %448 = vmatpush1.msra.mxu0 %v389
    %449 = vmatprep.subr.mxu0 0.0
    %450 = vmatpush1.msra.mxu0 %v388
    %451 = vmatprep.subr.mxu0 0.0
    %452 = vmatpush1.msra.mxu0 %v387
    %453 = vmatprep.subr.mxu0 0.0
    %454 = vmatpush1.msra.mxu0 %v386
    %455 = vmatprep.subr.mxu0 0.0
    %456 = vmatpush1.msra.mxu0 %v385
    %457 = vmatprep.subr.mxu0 0.0
    %458 = vmatpush1.msra.mxu0 %v384
    %459 = vmatprep.subr.mxu0 0.0
    %460 = vmatpush1.msra.mxu0 %v383
    %461 = vmatprep.subr.mxu0 0.0
    %462 = vmatpush1.msra.mxu0 %v382
    %463 = vmatprep.subr.mxu0 0.0
    %464 = vmatpush1.msra.mxu0 %v381
    %465 = vmatprep.subr.mxu0 0.0
    %466 = vmatpush1.msra.mxu0 %v380
    %467 = vmatprep.subr.mxu0 0.0
    %468 = vmatpush1.msra.mxu0 %v379
    %469 = vmatprep.subr.mxu0 0.0
    %470 = vmatpush1.msra.mxu0 %v378
    %471 = vmatprep.subr.mxu0 0.0
    %472 = vmatpush1.msra.mxu0 %v377
    %473 = vmatprep.subr.mxu0 0.0
    %474 = vmatpush2.msra.mxu0 %v408
    %475 = vmatprep.subr.mxu0 0.0
    %476 = vmatpush2.msra.mxu0 %v407
    %477 = vmatprep.subr.mxu0 0.0
    %478 = vmatpush2.msra.mxu0 %v406
    %479 = vmatprep.subr.mxu0 0.0
    %480 = vmatpush2.msra.mxu0 %v405
    %481 = vmatprep.subr.mxu0 0.0
    %482 = vmatpush2.msra.mxu0 %v404
    %483 = vmatprep.subr.mxu0 0.0
    %484 = vmatpush2.msra.mxu0 %v403
    %485 = vmatprep.subr.mxu0 0.0
    %486 = vmatpush2.msra.mxu0 %v402
    %487 = vmatprep.subr.mxu0 0.0
    %488 = vmatpush2.msra.mxu0 %v401
    %489 = vmatprep.subr.mxu0 0.0
    %490 = vmatpush2.msra.mxu0 %v400
    %491 = vmatprep.subr.mxu0 0.0
    %492 = vmatpush2.msra.mxu0 %v399
    %493 = vmatprep.subr.mxu0 0.0
    %494 = vmatpush2.msra.mxu0 %v398
    %495 = vmatprep.subr.mxu0 0.0
    %496 = vmatpush2.msra.mxu0 %v397
    %497 = vmatprep.subr.mxu0 0.0
    %498 = vmatpush2.msra.mxu0 %v396
    %499 = vmatprep.subr.mxu0 0.0
    %500 = vmatpush2.msra.mxu0 %v395
    %501 = vmatprep.subr.mxu0 0.0
    %502 = vmatpush2.msra.mxu0 %v394
    %503 = vmatprep.subr.mxu0 0.0
    %504 = vmatpush2.msra.mxu0 %v393
    %505 = vmatprep.mubr.f32.mxu0 %v374
    %506 = vmatmul.mubr.f32.gmra.mxu0 %v373
    %v507 = vpop.f32.mrf.mxu0
    %v508 = vadd.f32 0.0, %v507
    %v509 = vpop.f32.mrf.mxu0
    %510 = vdwg.mxu0
    %511 = vmatprep.subr.mxu0 0.0
    %512 = vmatpush1.msra.mxu0 %v424
    %513 = vmatprep.subr.mxu0 0.0
    %514 = vmatpush1.msra.mxu0 %v423
    %515 = vmatprep.subr.mxu0 0.0
    %516 = vmatpush1.msra.mxu0 %v422
    %517 = vmatprep.subr.mxu0 0.0
    %518 = vmatpush1.msra.mxu0 %v421
    %519 = vmatprep.subr.mxu0 0.0
    %520 = vmatpush1.msra.mxu0 %v420
    %521 = vmatprep.subr.mxu0 0.0
    %522 = vmatpush1.msra.mxu0 %v419
    %523 = vmatprep.subr.mxu0 0.0
    %524 = vmatpush1.msra.mxu0 %v418
    %525 = vmatprep.subr.mxu0 0.0
    %526 = vmatpush1.msra.mxu0 %v417
    %527 = vmatprep.subr.mxu0 0.0
    %528 = vmatpush1.msra.mxu0 %v416
    %529 = vmatprep.subr.mxu0 0.0
    %530 = vmatpush1.msra.mxu0 %v415
    %531 = vmatprep.subr.mxu0 0.0
    %532 = vmatpush1.msra.mxu0 %v414
    %533 = vmatprep.subr.mxu0 0.0
    %534 = vmatpush1.msra.mxu0 %v413
    %535 = vmatprep.subr.mxu0 0.0
    %536 = vmatpush1.msra.mxu0 %v412
    %537 = vmatprep.subr.mxu0 0.0
    %538 = vmatpush1.msra.mxu0 %v411
    %539 = vmatprep.subr.mxu0 0.0
    %540 = vmatpush1.msra.mxu0 %v410
    %541 = vmatprep.subr.mxu0 0.0
    %542 = vmatpush1.msra.mxu0 %v409
    %543 = vmatprep.subr.mxu0 0.0
    %544 = vmatpush2.msra.mxu0 %v440
    %545 = vmatprep.subr.mxu0 0.0
    %546 = vmatpush2.msra.mxu0 %v439
    %547 = vmatprep.subr.mxu0 0.0
    %548 = vmatpush2.msra.mxu0 %v438
    %549 = vmatprep.subr.mxu0 0.0
    %550 = vmatpush2.msra.mxu0 %v437
    %551 = vmatprep.subr.mxu0 0.0
    %552 = vmatpush2.msra.mxu0 %v436
    %553 = vmatprep.subr.mxu0 0.0
    %554 = vmatpush2.msra.mxu0 %v435
    %555 = vmatprep.subr.mxu0 0.0
    %556 = vmatpush2.msra.mxu0 %v434
    %557 = vmatprep.subr.mxu0 0.0
    %558 = vmatpush2.msra.mxu0 %v433
    %559 = vmatprep.subr.mxu0 0.0
    %560 = vmatpush2.msra.mxu0 %v432
    %561 = vmatprep.subr.mxu0 0.0
    %562 = vmatpush2.msra.mxu0 %v431
    %563 = vmatprep.subr.mxu0 0.0
    %564 = vmatpush2.msra.mxu0 %v430
    %565 = vmatprep.subr.mxu0 0.0
    %566 = vmatpush2.msra.mxu0 %v429
    %567 = vmatprep.subr.mxu0 0.0
    %568 = vmatpush2.msra.mxu0 %v428
    %569 = vmatprep.subr.mxu0 0.0
    %570 = vmatpush2.msra.mxu0 %v427
    %571 = vmatprep.subr.mxu0 0.0
    %572 = vmatpush2.msra.mxu0 %v426
    %573 = vmatprep.subr.mxu0 0.0
    %574 = vmatpush2.msra.mxu0 %v425
    %575 = vmatprep.mubr.f32.mxu0 %v376
    %576 = vmatmul.mubr.f32.gmra.mxu0 %v375
    %v577 = vpop.f32.mrf.mxu0
    %v578 = vadd.f32 %v508, %v577
    %v579 = vpop.f32.mrf.mxu0
    %580 = vdwg.mxu0
    %v581 = vld [vmem:[%s2] sm:$0xff]
    %v582 = vld [vmem:[%s2 + $0x8] sm:$0xff]
    %v583 = vld [vmem:[%s2 + $0x10] sm:$0xff]
    %v584 = vld [vmem:[%s2 + $0x18] sm:$0xff]
    %v585 = vmul.f32 %v347, %v581
    %v586 = vmul.f32 %v348, %v582
    %v587 = vmul.f32 %v349, %v583
    %v588 = vmul.f32 %v350, %v584
    %589 = vmatprep.subr.mxu0 0.0
    %590 = vmatpush1.msra.mxu0 %v392
    %591 = vmatprep.subr.mxu0 0.0
    %592 = vmatpush1.msra.mxu0 %v391
    %593 = vmatprep.subr.mxu0 0.0
    %594 = vmatpush1.msra.mxu0 %v390
    %595 = vmatprep.subr.mxu0 0.0
    %596 = vmatpush1.msra.mxu0 %v389
    %597 = vmatprep.subr.mxu0 0.0
    %598 = vmatpush1.msra.mxu0 %v388
    %599 = vmatprep.subr.mxu0 0.0
    %600 = vmatpush1.msra.mxu0 %v387
    %601 = vmatprep.subr.mxu0 0.0
    %602 = vmatpush1.msra.mxu0 %v386
    %603 = vmatprep.subr.mxu0 0.0
    %604 = vmatpush1.msra.mxu0 %v385
    %605 = vmatprep.subr.mxu0 0.0
    %606 = vmatpush1.msra.mxu0 %v384
    %607 = vmatprep.subr.mxu0 0.0
    %608 = vmatpush1.msra.mxu0 %v383
    %609 = vmatprep.subr.mxu0 0.0
    %610 = vmatpush1.msra.mxu0 %v382
    %611 = vmatprep.subr.mxu0 0.0
    %612 = vmatpush1.msra.mxu0 %v381
    %613 = vmatprep.subr.mxu0 0.0
    %614 = vmatpush1.msra.mxu0 %v380
    %615 = vmatprep.subr.mxu0 0.0
    %616 = vmatpush1.msra.mxu0 %v379
    %617 = vmatprep.subr.mxu0 0.0
    %618 = vmatpush1.msra.mxu0 %v378
    %619 = vmatprep.subr.mxu0 0.0
    %620 = vmatpush1.msra.mxu0 %v377
    %621 = vmatprep.subr.mxu0 0.0
    %622 = vmatpush2.msra.mxu0 %v408
    %623 = vmatprep.subr.mxu0 0.0
    %624 = vmatpush2.msra.mxu0 %v407
    %625 = vmatprep.subr.mxu0 0.0
    %626 = vmatpush2.msra.mxu0 %v406
    %627 = vmatprep.subr.mxu0 0.0
    %628 = vmatpush2.msra.mxu0 %v405
    %629 = vmatprep.subr.mxu0 0.0
    %630 = vmatpush2.msra.mxu0 %v404
    %631 = vmatprep.subr.mxu0 0.0
    %632 = vmatpush2.msra.mxu0 %v403
    %633 = vmatprep.subr.mxu0 0.0
    %634 = vmatpush2.msra.mxu0 %v402
    %635 = vmatprep.subr.mxu0 0.0
    %636 = vmatpush2.msra.mxu0 %v401
    %637 = vmatprep.subr.mxu0 0.0
    %638 = vmatpush2.msra.mxu0 %v400
    %639 = vmatprep.subr.mxu0 0.0
    %640 = vmatpush2.msra.mxu0 %v399
    %641 = vmatprep.subr.mxu0 0.0
    %642 = vmatpush2.msra.mxu0 %v398
    %643 = vmatprep.subr.mxu0 0.0
    %644 = vmatpush2.msra.mxu0 %v397
    %645 = vmatprep.subr.mxu0 0.0
    %646 = vmatpush2.msra.mxu0 %v396
    %647 = vmatprep.subr.mxu0 0.0
    %648 = vmatpush2.msra.mxu0 %v395
    %649 = vmatprep.subr.mxu0 0.0
    %650 = vmatpush2.msra.mxu0 %v394
    %651 = vmatprep.subr.mxu0 0.0
    %652 = vmatpush2.msra.mxu0 %v393
    %653 = vmatprep.mubr.f32.mxu0 %v586
    %654 = vmatmul.mubr.f32.gmra.mxu0 %v585
    %v655 = vpop.f32.mrf.mxu0
    %v656 = vadd.f32 0.0, %v655
    %v657 = vpop.f32.mrf.mxu0
    %658 = vdwg.mxu0
    %659 = vmatprep.subr.mxu0 0.0
    %660 = vmatpush1.msra.mxu0 %v424
    %661 = vmatprep.subr.mxu0 0.0
    %662 = vmatpush1.msra.mxu0 %v423
    %663 = vmatprep.subr.mxu0 0.0
    %664 = vmatpush1.msra.mxu0 %v422
    %665 = vmatprep.subr.mxu0 0.0
    %666 = vmatpush1.msra.mxu0 %v421
    %667 = vmatprep.subr.mxu0 0.0
    %668 = vmatpush1.msra.mxu0 %v420
    %669 = vmatprep.subr.mxu0 0.0
    %670 = vmatpush1.msra.mxu0 %v419
    %671 = vmatprep.subr.mxu0 0.0
    %672 = vmatpush1.msra.mxu0 %v418
    %673 = vmatprep.subr.mxu0 0.0
    %674 = vmatpush1.msra.mxu0 %v417
    %675 = vmatprep.subr.mxu0 0.0
    %676 = vmatpush1.msra.mxu0 %v416
    %677 = vmatprep.subr.mxu0 0.0
    %678 = vmatpush1.msra.mxu0 %v415
    %679 = vmatprep.subr.mxu0 0.0
    %680 = vmatpush1.msra.mxu0 %v414
    %681 = vmatprep.subr.mxu0 0.0
    %682 = vmatpush1.msra.mxu0 %v413
    %683 = vmatprep.subr.mxu0 0.0
    %684 = vmatpush1.msra.mxu0 %v412
    %685 = vmatprep.subr.mxu0 0.0
    %686 = vmatpush1.msra.mxu0 %v411
    %687 = vmatprep.subr.mxu0 0.0
    %688 = vmatpush1.msra.mxu0 %v410
    %689 = vmatprep.subr.mxu0 0.0
    %690 = vmatpush1.msra.mxu0 %v409
    %691 = vmatprep.subr.mxu0 0.0
    %692 = vmatpush2.msra.mxu0 %v440
    %693 = vmatprep.subr.mxu0 0.0
    %694 = vmatpush2.msra.mxu0 %v439
    %695 = vmatprep.subr.mxu0 0.0
    %696 = vmatpush2.msra.mxu0 %v438
    %697 = vmatprep.subr.mxu0 0.0
    %698 = vmatpush2.msra.mxu0 %v437
    %699 = vmatprep.subr.mxu0 0.0
    %700 = vmatpush2.msra.mxu0 %v436
    %701 = vmatprep.subr.mxu0 0.0
    %702 = vmatpush2.msra.mxu0 %v435
    %703 = vmatprep.subr.mxu0 0.0
    %704 = vmatpush2.msra.mxu0 %v434
    %705 = vmatprep.subr.mxu0 0.0
    %706 = vmatpush2.msra.mxu0 %v433
    %707 = vmatprep.subr.mxu0 0.0
    %708 = vmatpush2.msra.mxu0 %v432
    %709 = vmatprep.subr.mxu0 0.0
    %710 = vmatpush2.msra.mxu0 %v431
    %711 = vmatprep.subr.mxu0 0.0
    %712 = vmatpush2.msra.mxu0 %v430
    %713 = vmatprep.subr.mxu0 0.0
    %714 = vmatpush2.msra.mxu0 %v429
    %715 = vmatprep.subr.mxu0 0.0
    %716 = vmatpush2.msra.mxu0 %v428
    %717 = vmatprep.subr.mxu0 0.0
    %718 = vmatpush2.msra.mxu0 %v427
    %719 = vmatprep.subr.mxu0 0.0
    %720 = vmatpush2.msra.mxu0 %v426
    %721 = vmatprep.subr.mxu0 0.0
    %722 = vmatpush2.msra.mxu0 %v425
    %723 = vmatprep.mubr.f32.mxu0 %v588
    %724 = vmatmul.mubr.f32.gmra.mxu0 %v587
    %v725 = vpop.f32.mrf.mxu0
    %v726 = vadd.f32 %v656, %v725
    %v727 = vpop.f32.mrf.mxu0
    %728 = vdwg.mxu0
    %v729 = vld [vmem:[%s0] sm:$0xff]
    %v730 = vld [vmem:[%s0 + $0x8] sm:$0xff]
    %v731 = vld [vmem:[%s0 + $0x10] sm:$0xff]
    %v732 = vld [vmem:[%s0 + $0x18] sm:$0xff]
    %v733 = vld [vmem:[%s0 + $0x20] sm:$0xff]
    %v734 = vld [vmem:[%s0 + $0x28] sm:$0xff]
    %v735 = vld [vmem:[%s0 + $0x30] sm:$0xff]
    %v736 = vld [vmem:[%s0 + $0x38] sm:$0xff]
    %v737 = vld [vmem:[%s0 + $0x40] sm:$0xff]
    %v738 = vld [vmem:[%s0 + $0x48] sm:$0xff]
    %v739 = vld [vmem:[%s0 + $0x50] sm:$0xff]
    %v740 = vld [vmem:[%s0 + $0x58] sm:$0xff]
    %v741 = vld [vmem:[%s0 + $0x60] sm:$0xff]
    %v742 = vld [vmem:[%s0 + $0x68] sm:$0xff]
    %v743 = vld [vmem:[%s0 + $0x70] sm:$0xff]
    %v744 = vld [vmem:[%s0 + $0x78] sm:$0xff]
    %v745 = vlaneseq
    %v746 = vshrl.u32 %v745, 7
    %v747 = vsub.s32 0, %v746
    %v748 = vrot.slane %v347, %v747
    %v749 = vlaneseq
    %v750 = vshrl.u32 %v749, 7
    %v751 = vsub.s32 0, %v750
    %v752 = vrot.slane %v348, %v751
    %v753 = vlaneseq
    %v754 = vshrl.u32 %v753, 7
    %v755 = vsub.s32 0, %v754
    %v756 = vrot.slane %v349, %v755
    %v757 = vlaneseq
    %v758 = vshrl.u32 %v757, 7
    %v759 = vsub.s32 0, %v758
    %v760 = vrot.slane %v350, %v759
    %v761 = vmul.f32 %v729, %v748
    %v762 = vmul.f32 %v730, %v752
    %v763 = vmul.f32 %v731, %v756
    %v764 = vmul.f32 %v732, %v760
    %v765 = vmul.f32 %v733, %v748
    %v766 = vmul.f32 %v734, %v752
    %v767 = vmul.f32 %v735, %v756
    %v768 = vmul.f32 %v736, %v760
    %v769 = vmul.f32 %v737, %v748
    %v770 = vmul.f32 %v738, %v752
    %v771 = vmul.f32 %v739, %v756
    %v772 = vmul.f32 %v740, %v760
    %v773 = vmul.f32 %v741, %v748
    %v774 = vmul.f32 %v742, %v752
    %v775 = vmul.f32 %v743, %v756
    %v776 = vmul.f32 %v744, %v760
    %777 = vmatprep.subr.mxu0 0.0
    %778 = vmatpush1.msra.mxu0 %v392
    %779 = vmatprep.subr.mxu0 0.0
    %780 = vmatpush1.msra.mxu0 %v391
    %781 = vmatprep.subr.mxu0 0.0
    %782 = vmatpush1.msra.mxu0 %v390
    %783 = vmatprep.subr.mxu0 0.0
    %784 = vmatpush1.msra.mxu0 %v389
    %785 = vmatprep.subr.mxu0 0.0
    %786 = vmatpush1.msra.mxu0 %v388
    %787 = vmatprep.subr.mxu0 0.0
    %788 = vmatpush1.msra.mxu0 %v387
    %789 = vmatprep.subr.mxu0 0.0
    %790 = vmatpush1.msra.mxu0 %v386
    %791 = vmatprep.subr.mxu0 0.0
    %792 = vmatpush1.msra.mxu0 %v385
    %793 = vmatprep.subr.mxu0 0.0
    %794 = vmatpush1.msra.mxu0 %v384
    %795 = vmatprep.subr.mxu0 0.0
    %796 = vmatpush1.msra.mxu0 %v383
    %797 = vmatprep.subr.mxu0 0.0
    %798 = vmatpush1.msra.mxu0 %v382
    %799 = vmatprep.subr.mxu0 0.0
    %800 = vmatpush1.msra.mxu0 %v381
    %801 = vmatprep.subr.mxu0 0.0
    %802 = vmatpush1.msra.mxu0 %v380
    %803 = vmatprep.subr.mxu0 0.0
    %804 = vmatpush1.msra.mxu0 %v379
    %805 = vmatprep.subr.mxu0 0.0
    %806 = vmatpush1.msra.mxu0 %v378
    %807 = vmatprep.subr.mxu0 0.0
    %808 = vmatpush1.msra.mxu0 %v377
    %809 = vmatprep.subr.mxu0 0.0
    %810 = vmatpush2.msra.mxu0 %v408
    %811 = vmatprep.subr.mxu0 0.0
    %812 = vmatpush2.msra.mxu0 %v407
    %813 = vmatprep.subr.mxu0 0.0
    %814 = vmatpush2.msra.mxu0 %v406
    %815 = vmatprep.subr.mxu0 0.0
    %816 = vmatpush2.msra.mxu0 %v405
    %817 = vmatprep.subr.mxu0 0.0
    %818 = vmatpush2.msra.mxu0 %v404
    %819 = vmatprep.subr.mxu0 0.0
    %820 = vmatpush2.msra.mxu0 %v403
    %821 = vmatprep.subr.mxu0 0.0
    %822 = vmatpush2.msra.mxu0 %v402
    %823 = vmatprep.subr.mxu0 0.0
    %824 = vmatpush2.msra.mxu0 %v401
    %825 = vmatprep.subr.mxu0 0.0
    %826 = vmatpush2.msra.mxu0 %v400
    %827 = vmatprep.subr.mxu0 0.0
    %828 = vmatpush2.msra.mxu0 %v399
    %829 = vmatprep.subr.mxu0 0.0
    %830 = vmatpush2.msra.mxu0 %v398
    %831 = vmatprep.subr.mxu0 0.0
    %832 = vmatpush2.msra.mxu0 %v397
    %833 = vmatprep.subr.mxu0 0.0
    %834 = vmatpush2.msra.mxu0 %v396
    %835 = vmatprep.subr.mxu0 0.0
    %836 = vmatpush2.msra.mxu0 %v395
    %837 = vmatprep.subr.mxu0 0.0
    %838 = vmatpush2.msra.mxu0 %v394
    %839 = vmatprep.subr.mxu0 0.0
    %840 = vmatpush2.msra.mxu0 %v393
    %841 = vmatprep.mubr.f32.mxu0 %v762
    %842 = vmatmul.mubr.f32.gmra.mxu0 %v761
    %v843 = vpop.f32.mrf.mxu0
    %v844 = vadd.f32 0.0, %v843
    %v845 = vpop.f32.mrf.mxu0
    %846 = vmatprep.mubr.f32.mxu0 %v766
    %847 = vmatmul.mubr.f32.gmra.mxu0 %v765
    %v848 = vpop.f32.mrf.mxu0
    %v849 = vadd.f32 0.0, %v848
    %v850 = vpop.f32.mrf.mxu0
    %851 = vmatprep.mubr.f32.mxu0 %v770
    %852 = vmatmul.mubr.f32.gmra.mxu0 %v769
    %v853 = vpop.f32.mrf.mxu0
    %v854 = vadd.f32 0.0, %v853
    %v855 = vpop.f32.mrf.mxu0
    %856 = vmatprep.mubr.f32.mxu0 %v774
    %857 = vmatmul.mubr.f32.gmra.mxu0 %v773
    %v858 = vpop.f32.mrf.mxu0
    %v859 = vadd.f32 0.0, %v858
    %v860 = vpop.f32.mrf.mxu0
    %861 = vdwg.mxu0
    %862 = vmatprep.subr.mxu0 0.0
    %863 = vmatpush1.msra.mxu0 %v424
    %864 = vmatprep.subr.mxu0 0.0
    %865 = vmatpush1.msra.mxu0 %v423
    %866 = vmatprep.subr.mxu0 0.0
    %867 = vmatpush1.msra.mxu0 %v422
    %868 = vmatprep.subr.mxu0 0.0
    %869 = vmatpush1.msra.mxu0 %v421
    %870 = vmatprep.subr.mxu0 0.0
    %871 = vmatpush1.msra.mxu0 %v420
    %872 = vmatprep.subr.mxu0 0.0
    %873 = vmatpush1.msra.mxu0 %v419
    %874 = vmatprep.subr.mxu0 0.0
    %875 = vmatpush1.msra.mxu0 %v418
    %876 = vmatprep.subr.mxu0 0.0
    %877 = vmatpush1.msra.mxu0 %v417
    %878 = vmatprep.subr.mxu0 0.0
    %879 = vmatpush1.msra.mxu0 %v416
    %880 = vmatprep.subr.mxu0 0.0
    %881 = vmatpush1.msra.mxu0 %v415
    %882 = vmatprep.subr.mxu0 0.0
    %883 = vmatpush1.msra.mxu0 %v414
    %884 = vmatprep.subr.mxu0 0.0
    %885 = vmatpush1.msra.mxu0 %v413
    %886 = vmatprep.subr.mxu0 0.0
    %887 = vmatpush1.msra.mxu0 %v412
    %888 = vmatprep.subr.mxu0 0.0
    %889 = vmatpush1.msra.mxu0 %v411
    %890 = vmatprep.subr.mxu0 0.0
    %891 = vmatpush1.msra.mxu0 %v410
    %892 = vmatprep.subr.mxu0 0.0
    %893 = vmatpush1.msra.mxu0 %v409
    %894 = vmatprep.subr.mxu0 0.0
    %895 = vmatpush2.msra.mxu0 %v440
    %896 = vmatprep.subr.mxu0 0.0
    %897 = vmatpush2.msra.mxu0 %v439
    %898 = vmatprep.subr.mxu0 0.0
    %899 = vmatpush2.msra.mxu0 %v438
    %900 = vmatprep.subr.mxu0 0.0
    %901 = vmatpush2.msra.mxu0 %v437
    %902 = vmatprep.subr.mxu0 0.0
    %903 = vmatpush2.msra.mxu0 %v436
    %904 = vmatprep.subr.mxu0 0.0
    %905 = vmatpush2.msra.mxu0 %v435
    %906 = vmatprep.subr.mxu0 0.0
    %907 = vmatpush2.msra.mxu0 %v434
    %908 = vmatprep.subr.mxu0 0.0
    %909 = vmatpush2.msra.mxu0 %v433
    %910 = vmatprep.subr.mxu0 0.0
    %911 = vmatpush2.msra.mxu0 %v432
    %912 = vmatprep.subr.mxu0 0.0
    %913 = vmatpush2.msra.mxu0 %v431
    %914 = vmatprep.subr.mxu0 0.0
    %915 = vmatpush2.msra.mxu0 %v430
    %916 = vmatprep.subr.mxu0 0.0
    %917 = vmatpush2.msra.mxu0 %v429
    %918 = vmatprep.subr.mxu0 0.0
    %919 = vmatpush2.msra.mxu0 %v428
    %920 = vmatprep.subr.mxu0 0.0
    %921 = vmatpush2.msra.mxu0 %v427
    %922 = vmatprep.subr.mxu0 0.0
    %923 = vmatpush2.msra.mxu0 %v426
    %924 = vmatprep.subr.mxu0 0.0
    %925 = vmatpush2.msra.mxu0 %v425
    %926 = vmatprep.mubr.f32.mxu0 %v764
    %927 = vmatmul.mubr.f32.gmra.mxu0 %v763
    %v928 = vpop.f32.mrf.mxu0
    %v929 = vadd.f32 %v844, %v928
    %v930 = vpop.f32.mrf.mxu0
    %931 = vmatprep.mubr.f32.mxu0 %v768
    %932 = vmatmul.mubr.f32.gmra.mxu0 %v767
    %v933 = vpop.f32.mrf.mxu0
    %v934 = vadd.f32 %v849, %v933
    %v935 = vpop.f32.mrf.mxu0
    %936 = vmatprep.mubr.f32.mxu0 %v772
    %937 = vmatmul.mubr.f32.gmra.mxu0 %v771
    %v938 = vpop.f32.mrf.mxu0
    %v939 = vadd.f32 %v854, %v938
    %v940 = vpop.f32.mrf.mxu0
    %941 = vmatprep.mubr.f32.mxu0 %v776
    %942 = vmatmul.mubr.f32.gmra.mxu0 %v775
    %v943 = vpop.f32.mrf.mxu0
    %v944 = vadd.f32 %v859, %v943
    %v945 = vpop.f32.mrf.mxu0
    %946 = vdwg.mxu0
    %947 = vst.msk [vmem:[#allocation2] sm:$0xff] %vm201, %v929
    %948 = vst.msk [vmem:[#allocation2 + $0x8] sm:$0xff] %vm201, %v934
    %949 = vst.msk [vmem:[#allocation2 + $0x10] sm:$0xff] %vm201, %v939
    %950 = vst.msk [vmem:[#allocation2 + $0x18] sm:$0xff] %vm201, %v944
    %v951 = vld [vmem:[%s0] sm:$0xff]
    %v952 = vld [vmem:[%s0 + $0x8] sm:$0xff]
    %v953 = vld [vmem:[%s0 + $0x10] sm:$0xff]
    %v954 = vld [vmem:[%s0 + $0x18] sm:$0xff]
    %v955 = vld [vmem:[%s0 + $0x20] sm:$0xff]
    %v956 = vld [vmem:[%s0 + $0x28] sm:$0xff]
    %v957 = vld [vmem:[%s0 + $0x30] sm:$0xff]
    %v958 = vld [vmem:[%s0 + $0x38] sm:$0xff]
    %v959 = vld [vmem:[%s0 + $0x40] sm:$0xff]
    %v960 = vld [vmem:[%s0 + $0x48] sm:$0xff]
    %v961 = vld [vmem:[%s0 + $0x50] sm:$0xff]
    %v962 = vld [vmem:[%s0 + $0x58] sm:$0xff]
    %v963 = vld [vmem:[%s0 + $0x60] sm:$0xff]
    %v964 = vld [vmem:[%s0 + $0x68] sm:$0xff]
    %v965 = vld [vmem:[%s0 + $0x70] sm:$0xff]
    %v966 = vld [vmem:[%s0 + $0x78] sm:$0xff]
    %v967 = vlaneseq
    %v968 = vshrl.u32 %v967, 7
    %v969 = vsub.s32 1, %v968
    %v970 = vrot.slane %v347, %v969
    %v971 = vlaneseq
    %v972 = vshrl.u32 %v971, 7
    %v973 = vsub.s32 1, %v972
    %v974 = vrot.slane %v348, %v973
    %v975 = vlaneseq
    %v976 = vshrl.u32 %v975, 7
    %v977 = vsub.s32 1, %v976
    %v978 = vrot.slane %v349, %v977
    %v979 = vlaneseq
    %v980 = vshrl.u32 %v979, 7
    %v981 = vsub.s32 1, %v980
    %v982 = vrot.slane %v350, %v981
    %v983 = vmul.f32 %v951, %v970
    %v984 = vmul.f32 %v952, %v974
    %v985 = vmul.f32 %v953, %v978
    %v986 = vmul.f32 %v954, %v982
    %v987 = vmul.f32 %v955, %v970
    %v988 = vmul.f32 %v956, %v974
    %v989 = vmul.f32 %v957, %v978
    %v990 = vmul.f32 %v958, %v982
    %v991 = vmul.f32 %v959, %v970
    %v992 = vmul.f32 %v960, %v974
    %v993 = vmul.f32 %v961, %v978
    %v994 = vmul.f32 %v962, %v982
    %v995 = vmul.f32 %v963, %v970
    %v996 = vmul.f32 %v964, %v974
    %v997 = vmul.f32 %v965, %v978
    %v998 = vmul.f32 %v966, %v982
    %v999 = vld [vmem:[%s7] sm:$0xff]
    %v1000 = vld [vmem:[%s7 + $0x8] sm:$0xff]
    %v1001 = vld [vmem:[%s7 + $0x10] sm:$0xff]
    %v1002 = vld [vmem:[%s7 + $0x18] sm:$0xff]
    %v1003 = vld [vmem:[%s7 + $0x20] sm:$0xff]
    %v1004 = vld [vmem:[%s7 + $0x28] sm:$0xff]
    %v1005 = vld [vmem:[%s7 + $0x30] sm:$0xff]
    %v1006 = vld [vmem:[%s7 + $0x38] sm:$0xff]
    %v1007 = vld [vmem:[%s7 + $0x40] sm:$0xff]
    %v1008 = vld [vmem:[%s7 + $0x48] sm:$0xff]
    %v1009 = vld [vmem:[%s7 + $0x50] sm:$0xff]
    %v1010 = vld [vmem:[%s7 + $0x58] sm:$0xff]
    %v1011 = vld [vmem:[%s7 + $0x60] sm:$0xff]
    %v1012 = vld [vmem:[%s7 + $0x68] sm:$0xff]
    %v1013 = vld [vmem:[%s7 + $0x70] sm:$0xff]
    %v1014 = vld [vmem:[%s7 + $0x78] sm:$0xff]
    %v1015 = vld [vmem:[%s7 + $0x80] sm:$0xff]
    %v1016 = vld [vmem:[%s7 + $0x88] sm:$0xff]
    %v1017 = vld [vmem:[%s7 + $0x90] sm:$0xff]
    %v1018 = vld [vmem:[%s7 + $0x98] sm:$0xff]
    %v1019 = vld [vmem:[%s7 + $0xa0] sm:$0xff]
    %v1020 = vld [vmem:[%s7 + $0xa8] sm:$0xff]
    %v1021 = vld [vmem:[%s7 + $0xb0] sm:$0xff]
    %v1022 = vld [vmem:[%s7 + $0xb8] sm:$0xff]
    %v1023 = vld [vmem:[%s7 + $0xc0] sm:$0xff]
    %v1024 = vld [vmem:[%s7 + $0xc8] sm:$0xff]
    %v1025 = vld [vmem:[%s7 + $0xd0] sm:$0xff]
    %v1026 = vld [vmem:[%s7 + $0xd8] sm:$0xff]
    %v1027 = vld [vmem:[%s7 + $0xe0] sm:$0xff]
    %v1028 = vld [vmem:[%s7 + $0xe8] sm:$0xff]
    %v1029 = vld [vmem:[%s7 + $0xf0] sm:$0xff]
    %v1030 = vld [vmem:[%s7 + $0xf8] sm:$0xff]
    %v1031 = vld [vmem:[%s7 + $0x100] sm:$0xff]
    %v1032 = vld [vmem:[%s7 + $0x108] sm:$0xff]
    %v1033 = vld [vmem:[%s7 + $0x110] sm:$0xff]
    %v1034 = vld [vmem:[%s7 + $0x118] sm:$0xff]
    %v1035 = vld [vmem:[%s7 + $0x120] sm:$0xff]
    %v1036 = vld [vmem:[%s7 + $0x128] sm:$0xff]
    %v1037 = vld [vmem:[%s7 + $0x130] sm:$0xff]
    %v1038 = vld [vmem:[%s7 + $0x138] sm:$0xff]
    %v1039 = vld [vmem:[%s7 + $0x140] sm:$0xff]
    %v1040 = vld [vmem:[%s7 + $0x148] sm:$0xff]
    %v1041 = vld [vmem:[%s7 + $0x150] sm:$0xff]
    %v1042 = vld [vmem:[%s7 + $0x158] sm:$0xff]
    %v1043 = vld [vmem:[%s7 + $0x160] sm:$0xff]
    %v1044 = vld [vmem:[%s7 + $0x168] sm:$0xff]
    %v1045 = vld [vmem:[%s7 + $0x170] sm:$0xff]
    %v1046 = vld [vmem:[%s7 + $0x178] sm:$0xff]
    %v1047 = vld [vmem:[%s7 + $0x180] sm:$0xff]
    %v1048 = vld [vmem:[%s7 + $0x188] sm:$0xff]
    %v1049 = vld [vmem:[%s7 + $0x190] sm:$0xff]
    %v1050 = vld [vmem:[%s7 + $0x198] sm:$0xff]
    %v1051 = vld [vmem:[%s7 + $0x1a0] sm:$0xff]
    %v1052 = vld [vmem:[%s7 + $0x1a8] sm:$0xff]
    %v1053 = vld [vmem:[%s7 + $0x1b0] sm:$0xff]
    %v1054 = vld [vmem:[%s7 + $0x1b8] sm:$0xff]
    %v1055 = vld [vmem:[%s7 + $0x1c0] sm:$0xff]
    %v1056 = vld [vmem:[%s7 + $0x1c8] sm:$0xff]
    %v1057 = vld [vmem:[%s7 + $0x1d0] sm:$0xff]
    %v1058 = vld [vmem:[%s7 + $0x1d8] sm:$0xff]
    %v1059 = vld [vmem:[%s7 + $0x1e0] sm:$0xff]
    %v1060 = vld [vmem:[%s7 + $0x1e8] sm:$0xff]
    %v1061 = vld [vmem:[%s7 + $0x1f0] sm:$0xff]
    %v1062 = vld [vmem:[%s7 + $0x1f8] sm:$0xff]
    %1063 = vmatprep.subr.mxu0 0.0
    %1064 = vmatpush1.msra.mxu0 %v1014
    %1065 = vmatprep.subr.mxu0 0.0
    %1066 = vmatpush1.msra.mxu0 %v1013
    %1067 = vmatprep.subr.mxu0 0.0
    %1068 = vmatpush1.msra.mxu0 %v1012
    %1069 = vmatprep.subr.mxu0 0.0
    %1070 = vmatpush1.msra.mxu0 %v1011
    %1071 = vmatprep.subr.mxu0 0.0
    %1072 = vmatpush1.msra.mxu0 %v1010
    %1073 = vmatprep.subr.mxu0 0.0
    %1074 = vmatpush1.msra.mxu0 %v1009
    %1075 = vmatprep.subr.mxu0 0.0
    %1076 = vmatpush1.msra.mxu0 %v1008
    %1077 = vmatprep.subr.mxu0 0.0
    %1078 = vmatpush1.msra.mxu0 %v1007
    %1079 = vmatprep.subr.mxu0 0.0
    %1080 = vmatpush1.msra.mxu0 %v1006
    %1081 = vmatprep.subr.mxu0 0.0
    %1082 = vmatpush1.msra.mxu0 %v1005
    %1083 = vmatprep.subr.mxu0 0.0
    %1084 = vmatpush1.msra.mxu0 %v1004
    %1085 = vmatprep.subr.mxu0 0.0
    %1086 = vmatpush1.msra.mxu0 %v1003
    %1087 = vmatprep.subr.mxu0 0.0
    %1088 = vmatpush1.msra.mxu0 %v1002
    %1089 = vmatprep.subr.mxu0 0.0
    %1090 = vmatpush1.msra.mxu0 %v1001
    %1091 = vmatprep.subr.mxu0 0.0
    %1092 = vmatpush1.msra.mxu0 %v1000
    %1093 = vmatprep.subr.mxu0 0.0
    %1094 = vmatpush1.msra.mxu0 %v999
    %1095 = vmatprep.subr.mxu0 0.0
    %1096 = vmatpush2.msra.mxu0 %v1030
    %1097 = vmatprep.subr.mxu0 0.0
    %1098 = vmatpush2.msra.mxu0 %v1029
    %1099 = vmatprep.subr.mxu0 0.0
    %1100 = vmatpush2.msra.mxu0 %v1028
    %1101 = vmatprep.subr.mxu0 0.0
    %1102 = vmatpush2.msra.mxu0 %v1027
    %1103 = vmatprep.subr.mxu0 0.0
    %1104 = vmatpush2.msra.mxu0 %v1026
    %1105 = vmatprep.subr.mxu0 0.0
    %1106 = vmatpush2.msra.mxu0 %v1025
    %1107 = vmatprep.subr.mxu0 0.0
    %1108 = vmatpush2.msra.mxu0 %v1024
    %1109 = vmatprep.subr.mxu0 0.0
    %1110 = vmatpush2.msra.mxu0 %v1023
    %1111 = vmatprep.subr.mxu0 0.0
    %1112 = vmatpush2.msra.mxu0 %v1022
    %1113 = vmatprep.subr.mxu0 0.0
    %1114 = vmatpush2.msra.mxu0 %v1021
    %1115 = vmatprep.subr.mxu0 0.0
    %1116 = vmatpush2.msra.mxu0 %v1020
    %1117 = vmatprep.subr.mxu0 0.0
    %1118 = vmatpush2.msra.mxu0 %v1019
    %1119 = vmatprep.subr.mxu0 0.0
    %1120 = vmatpush2.msra.mxu0 %v1018
    %1121 = vmatprep.subr.mxu0 0.0
    %1122 = vmatpush2.msra.mxu0 %v1017
    %1123 = vmatprep.subr.mxu0 0.0
    %1124 = vmatpush2.msra.mxu0 %v1016
    %1125 = vmatprep.subr.mxu0 0.0
    %1126 = vmatpush2.msra.mxu0 %v1015
    %1127 = vmatprep.mubr.f32.mxu0 %v984
    %1128 = vmatmul.mubr.f32.gmra.mxu0 %v983
    %v1129 = vpop.f32.mrf.mxu0
    %v1130 = vadd.f32 0.0, %v1129
    %v1131 = vpop.f32.mrf.mxu0
    %1132 = vmatprep.mubr.f32.mxu0 %v988
    %1133 = vmatmul.mubr.f32.gmra.mxu0 %v987
    %v1134 = vpop.f32.mrf.mxu0
    %v1135 = vadd.f32 0.0, %v1134
    %v1136 = vpop.f32.mrf.mxu0
    %1137 = vmatprep.mubr.f32.mxu0 %v992
    %1138 = vmatmul.mubr.f32.gmra.mxu0 %v991
    %v1139 = vpop.f32.mrf.mxu0
    %v1140 = vadd.f32 0.0, %v1139
    %v1141 = vpop.f32.mrf.mxu0
    %1142 = vmatprep.mubr.f32.mxu0 %v996
    %1143 = vmatmul.mubr.f32.gmra.mxu0 %v995
    %v1144 = vpop.f32.mrf.mxu0
    %v1145 = vadd.f32 0.0, %v1144
    %v1146 = vpop.f32.mrf.mxu0
    %1147 = vdwg.mxu0
    %1148 = vmatprep.subr.mxu0 0.0
    %1149 = vmatpush1.msra.mxu0 %v1046
    %1150 = vmatprep.subr.mxu0 0.0
    %1151 = vmatpush1.msra.mxu0 %v1045
    %1152 = vmatprep.subr.mxu0 0.0
    %1153 = vmatpush1.msra.mxu0 %v1044
    %1154 = vmatprep.subr.mxu0 0.0
    %1155 = vmatpush1.msra.mxu0 %v1043
    %1156 = vmatprep.subr.mxu0 0.0
    %1157 = vmatpush1.msra.mxu0 %v1042
    %1158 = vmatprep.subr.mxu0 0.0
    %1159 = vmatpush1.msra.mxu0 %v1041
    %1160 = vmatprep.subr.mxu0 0.0
    %1161 = vmatpush1.msra.mxu0 %v1040
    %1162 = vmatprep.subr.mxu0 0.0
    %1163 = vmatpush1.msra.mxu0 %v1039
    %1164 = vmatprep.subr.mxu0 0.0
    %1165 = vmatpush1.msra.mxu0 %v1038
    %1166 = vmatprep.subr.mxu0 0.0
    %1167 = vmatpush1.msra.mxu0 %v1037
    %1168 = vmatprep.subr.mxu0 0.0
    %1169 = vmatpush1.msra.mxu0 %v1036
    %1170 = vmatprep.subr.mxu0 0.0
    %1171 = vmatpush1.msra.mxu0 %v1035
    %1172 = vmatprep.subr.mxu0 0.0
    %1173 = vmatpush1.msra.mxu0 %v1034
    %1174 = vmatprep.subr.mxu0 0.0
    %1175 = vmatpush1.msra.mxu0 %v1033
    %1176 = vmatprep.subr.mxu0 0.0
    %1177 = vmatpush1.msra.mxu0 %v1032
    %1178 = vmatprep.subr.mxu0 0.0
    %1179 = vmatpush1.msra.mxu0 %v1031
    %1180 = vmatprep.subr.mxu0 0.0
    %1181 = vmatpush2.msra.mxu0 %v1062
    %1182 = vmatprep.subr.mxu0 0.0
    %1183 = vmatpush2.msra.mxu0 %v1061
    %1184 = vmatprep.subr.mxu0 0.0
    %1185 = vmatpush2.msra.mxu0 %v1060
    %1186 = vmatprep.subr.mxu0 0.0
    %1187 = vmatpush2.msra.mxu0 %v1059
    %1188 = vmatprep.subr.mxu0 0.0
    %1189 = vmatpush2.msra.mxu0 %v1058
    %1190 = vmatprep.subr.mxu0 0.0
    %1191 = vmatpush2.msra.mxu0 %v1057
    %1192 = vmatprep.subr.mxu0 0.0
    %1193 = vmatpush2.msra.mxu0 %v1056
    %1194 = vmatprep.subr.mxu0 0.0
    %1195 = vmatpush2.msra.mxu0 %v1055
    %1196 = vmatprep.subr.mxu0 0.0
    %1197 = vmatpush2.msra.mxu0 %v1054
    %1198 = vmatprep.subr.mxu0 0.0
    %1199 = vmatpush2.msra.mxu0 %v1053
    %1200 = vmatprep.subr.mxu0 0.0
    %1201 = vmatpush2.msra.mxu0 %v1052
    %1202 = vmatprep.subr.mxu0 0.0
    %1203 = vmatpush2.msra.mxu0 %v1051
    %1204 = vmatprep.subr.mxu0 0.0
    %1205 = vmatpush2.msra.mxu0 %v1050
    %1206 = vmatprep.subr.mxu0 0.0
    %1207 = vmatpush2.msra.mxu0 %v1049
    %1208 = vmatprep.subr.mxu0 0.0
    %1209 = vmatpush2.msra.mxu0 %v1048
    %1210 = vmatprep.subr.mxu0 0.0
    %1211 = vmatpush2.msra.mxu0 %v1047
    %1212 = vmatprep.mubr.f32.mxu0 %v986
    %1213 = vmatmul.mubr.f32.gmra.mxu0 %v985
    %v1214 = vpop.f32.mrf.mxu0
    %v1215 = vadd.f32 %v1130, %v1214
    %v1216 = vpop.f32.mrf.mxu0
    %1217 = vmatprep.mubr.f32.mxu0 %v990
    %1218 = vmatmul.mubr.f32.gmra.mxu0 %v989
    %v1219 = vpop.f32.mrf.mxu0
    %v1220 = vadd.f32 %v1135, %v1219
    %v1221 = vpop.f32.mrf.mxu0
    %1222 = vmatprep.mubr.f32.mxu0 %v994
    %1223 = vmatmul.mubr.f32.gmra.mxu0 %v993
    %v1224 = vpop.f32.mrf.mxu0
    %v1225 = vadd.f32 %v1140, %v1224
    %v1226 = vpop.f32.mrf.mxu0
    %1227 = vmatprep.mubr.f32.mxu0 %v998
    %1228 = vmatmul.mubr.f32.gmra.mxu0 %v997
    %v1229 = vpop.f32.mrf.mxu0
    %v1230 = vadd.f32 %v1145, %v1229
    %v1231 = vpop.f32.mrf.mxu0
    %1232 = vdwg.mxu0
    %1233 = vst.msk [vmem:[#allocation2 + $0x20] sm:$0xff] %vm201, %v1215
    %1234 = vst.msk [vmem:[#allocation2 + $0x28] sm:$0xff] %vm201, %v1220
    %1235 = vst.msk [vmem:[#allocation2 + $0x30] sm:$0xff] %vm201, %v1225
    %1236 = vst.msk [vmem:[#allocation2 + $0x38] sm:$0xff] %vm201, %v1230
    %v1237 = vld [vmem:[%s0] sm:$0xff]
    %v1238 = vld [vmem:[%s0 + $0x8] sm:$0xff]
    %v1239 = vld [vmem:[%s0 + $0x10] sm:$0xff]
    %v1240 = vld [vmem:[%s0 + $0x18] sm:$0xff]
    %v1241 = vld [vmem:[%s0 + $0x20] sm:$0xff]
    %v1242 = vld [vmem:[%s0 + $0x28] sm:$0xff]
    %v1243 = vld [vmem:[%s0 + $0x30] sm:$0xff]
    %v1244 = vld [vmem:[%s0 + $0x38] sm:$0xff]
    %v1245 = vld [vmem:[%s0 + $0x40] sm:$0xff]
    %v1246 = vld [vmem:[%s0 + $0x48] sm:$0xff]
    %v1247 = vld [vmem:[%s0 + $0x50] sm:$0xff]
    %v1248 = vld [vmem:[%s0 + $0x58] sm:$0xff]
    %v1249 = vld [vmem:[%s0 + $0x60] sm:$0xff]
    %v1250 = vld [vmem:[%s0 + $0x68] sm:$0xff]
    %v1251 = vld [vmem:[%s0 + $0x70] sm:$0xff]
    %v1252 = vld [vmem:[%s0 + $0x78] sm:$0xff]
    %v1253 = vlaneseq
    %v1254 = vshrl.u32 %v1253, 7
    %v1255 = vsub.s32 2, %v1254
    %v1256 = vrot.slane %v347, %v1255
    %v1257 = vlaneseq
    %v1258 = vshrl.u32 %v1257, 7
    %v1259 = vsub.s32 2, %v1258
    %v1260 = vrot.slane %v348, %v1259
    %v1261 = vlaneseq
    %v1262 = vshrl.u32 %v1261, 7
    %v1263 = vsub.s32 2, %v1262
    %v1264 = vrot.slane %v349, %v1263
    %v1265 = vlaneseq
    %v1266 = vshrl.u32 %v1265, 7
    %v1267 = vsub.s32 2, %v1266
    %v1268 = vrot.slane %v350, %v1267
    %v1269 = vmul.f32 %v1237, %v1256
    %v1270 = vmul.f32 %v1238, %v1260
    %v1271 = vmul.f32 %v1239, %v1264
    %v1272 = vmul.f32 %v1240, %v1268
    %v1273 = vmul.f32 %v1241, %v1256
    %v1274 = vmul.f32 %v1242, %v1260
    %v1275 = vmul.f32 %v1243, %v1264
    %v1276 = vmul.f32 %v1244, %v1268
    %v1277 = vmul.f32 %v1245, %v1256
    %v1278 = vmul.f32 %v1246, %v1260
    %v1279 = vmul.f32 %v1247, %v1264
    %v1280 = vmul.f32 %v1248, %v1268
    %v1281 = vmul.f32 %v1249, %v1256
    %v1282 = vmul.f32 %v1250, %v1260
    %v1283 = vmul.f32 %v1251, %v1264
    %v1284 = vmul.f32 %v1252, %v1268
    %v1285 = vld [vmem:[%s7] sm:$0xff]
    %v1286 = vld [vmem:[%s7 + $0x8] sm:$0xff]
    %v1287 = vld [vmem:[%s7 + $0x10] sm:$0xff]
    %v1288 = vld [vmem:[%s7 + $0x18] sm:$0xff]
    %v1289 = vld [vmem:[%s7 + $0x20] sm:$0xff]
    %v1290 = vld [vmem:[%s7 + $0x28] sm:$0xff]
    %v1291 = vld [vmem:[%s7 + $0x30] sm:$0xff]
    %v1292 = vld [vmem:[%s7 + $0x38] sm:$0xff]
    %v1293 = vld [vmem:[%s7 + $0x40] sm:$0xff]
    %v1294 = vld [vmem:[%s7 + $0x48] sm:$0xff]
    %v1295 = vld [vmem:[%s7 + $0x50] sm:$0xff]
    %v1296 = vld [vmem:[%s7 + $0x58] sm:$0xff]
    %v1297 = vld [vmem:[%s7 + $0x60] sm:$0xff]
    %v1298 = vld [vmem:[%s7 + $0x68] sm:$0xff]
    %v1299 = vld [vmem:[%s7 + $0x70] sm:$0xff]
    %v1300 = vld [vmem:[%s7 + $0x78] sm:$0xff]
    %v1301 = vld [vmem:[%s7 + $0x80] sm:$0xff]
    %v1302 = vld [vmem:[%s7 + $0x88] sm:$0xff]
    %v1303 = vld [vmem:[%s7 + $0x90] sm:$0xff]
    %v1304 = vld [vmem:[%s7 + $0x98] sm:$0xff]
    %v1305 = vld [vmem:[%s7 + $0xa0] sm:$0xff]
    %v1306 = vld [vmem:[%s7 + $0xa8] sm:$0xff]
    %v1307 = vld [vmem:[%s7 + $0xb0] sm:$0xff]
    %v1308 = vld [vmem:[%s7 + $0xb8] sm:$0xff]
    %v1309 = vld [vmem:[%s7 + $0xc0] sm:$0xff]
    %v1310 = vld [vmem:[%s7 + $0xc8] sm:$0xff]
    %v1311 = vld [vmem:[%s7 + $0xd0] sm:$0xff]
    %v1312 = vld [vmem:[%s7 + $0xd8] sm:$0xff]
    %v1313 = vld [vmem:[%s7 + $0xe0] sm:$0xff]
    %v1314 = vld [vmem:[%s7 + $0xe8] sm:$0xff]
    %v1315 = vld [vmem:[%s7 + $0xf0] sm:$0xff]
    %v1316 = vld [vmem:[%s7 + $0xf8] sm:$0xff]
    %v1317 = vld [vmem:[%s7 + $0x100] sm:$0xff]
    %v1318 = vld [vmem:[%s7 + $0x108] sm:$0xff]
    %v1319 = vld [vmem:[%s7 + $0x110] sm:$0xff]
    %v1320 = vld [vmem:[%s7 + $0x118] sm:$0xff]
    %v1321 = vld [vmem:[%s7 + $0x120] sm:$0xff]
    %v1322 = vld [vmem:[%s7 + $0x128] sm:$0xff]
    %v1323 = vld [vmem:[%s7 + $0x130] sm:$0xff]
    %v1324 = vld [vmem:[%s7 + $0x138] sm:$0xff]
    %v1325 = vld [vmem:[%s7 + $0x140] sm:$0xff]
    %v1326 = vld [vmem:[%s7 + $0x148] sm:$0xff]
    %v1327 = vld [vmem:[%s7 + $0x150] sm:$0xff]
    %v1328 = vld [vmem:[%s7 + $0x158] sm:$0xff]
    %v1329 = vld [vmem:[%s7 + $0x160] sm:$0xff]
    %v1330 = vld [vmem:[%s7 + $0x168] sm:$0xff]
    %v1331 = vld [vmem:[%s7 + $0x170] sm:$0xff]
    %v1332 = vld [vmem:[%s7 + $0x178] sm:$0xff]
    %v1333 = vld [vmem:[%s7 + $0x180] sm:$0xff]
    %v1334 = vld [vmem:[%s7 + $0x188] sm:$0xff]
    %v1335 = vld [vmem:[%s7 + $0x190] sm:$0xff]
    %v1336 = vld [vmem:[%s7 + $0x198] sm:$0xff]
    %v1337 = vld [vmem:[%s7 + $0x1a0] sm:$0xff]
    %v1338 = vld [vmem:[%s7 + $0x1a8] sm:$0xff]
    %v1339 = vld [vmem:[%s7 + $0x1b0] sm:$0xff]
    %v1340 = vld [vmem:[%s7 + $0x1b8] sm:$0xff]
    %v1341 = vld [vmem:[%s7 + $0x1c0] sm:$0xff]
    %v1342 = vld [vmem:[%s7 + $0x1c8] sm:$0xff]
    %v1343 = vld [vmem:[%s7 + $0x1d0] sm:$0xff]
    %v1344 = vld [vmem:[%s7 + $0x1d8] sm:$0xff]
    %v1345 = vld [vmem:[%s7 + $0x1e0] sm:$0xff]
    %v1346 = vld [vmem:[%s7 + $0x1e8] sm:$0xff]
    %v1347 = vld [vmem:[%s7 + $0x1f0] sm:$0xff]
    %v1348 = vld [vmem:[%s7 + $0x1f8] sm:$0xff]
    %1349 = vmatprep.subr.mxu0 0.0
    %1350 = vmatpush1.msra.mxu0 %v1300
    %1351 = vmatprep.subr.mxu0 0.0
    %1352 = vmatpush1.msra.mxu0 %v1299
    %1353 = vmatprep.subr.mxu0 0.0
    %1354 = vmatpush1.msra.mxu0 %v1298
    %1355 = vmatprep.subr.mxu0 0.0
    %1356 = vmatpush1.msra.mxu0 %v1297
    %1357 = vmatprep.subr.mxu0 0.0
    %1358 = vmatpush1.msra.mxu0 %v1296
    %1359 = vmatprep.subr.mxu0 0.0
    %1360 = vmatpush1.msra.mxu0 %v1295
    %1361 = vmatprep.subr.mxu0 0.0
    %1362 = vmatpush1.msra.mxu0 %v1294
    %1363 = vmatprep.subr.mxu0 0.0
    %1364 = vmatpush1.msra.mxu0 %v1293
    %1365 = vmatprep.subr.mxu0 0.0
    %1366 = vmatpush1.msra.mxu0 %v1292
    %1367 = vmatprep.subr.mxu0 0.0
    %1368 = vmatpush1.msra.mxu0 %v1291
    %1369 = vmatprep.subr.mxu0 0.0
    %1370 = vmatpush1.msra.mxu0 %v1290
    %1371 = vmatprep.subr.mxu0 0.0
    %1372 = vmatpush1.msra.mxu0 %v1289
    %1373 = vmatprep.subr.mxu0 0.0
    %1374 = vmatpush1.msra.mxu0 %v1288
    %1375 = vmatprep.subr.mxu0 0.0
    %1376 = vmatpush1.msra.mxu0 %v1287
    %1377 = vmatprep.subr.mxu0 0.0
    %1378 = vmatpush1.msra.mxu0 %v1286
    %1379 = vmatprep.subr.mxu0 0.0
    %1380 = vmatpush1.msra.mxu0 %v1285
    %1381 = vmatprep.subr.mxu0 0.0
    %1382 = vmatpush2.msra.mxu0 %v1316
    %1383 = vmatprep.subr.mxu0 0.0
    %1384 = vmatpush2.msra.mxu0 %v1315
    %1385 = vmatprep.subr.mxu0 0.0
    %1386 = vmatpush2.msra.mxu0 %v1314
    %1387 = vmatprep.subr.mxu0 0.0
    %1388 = vmatpush2.msra.mxu0 %v1313
    %1389 = vmatprep.subr.mxu0 0.0
    %1390 = vmatpush2.msra.mxu0 %v1312
    %1391 = vmatprep.subr.mxu0 0.0
    %1392 = vmatpush2.msra.mxu0 %v1311
    %1393 = vmatprep.subr.mxu0 0.0
    %1394 = vmatpush2.msra.mxu0 %v1310
    %1395 = vmatprep.subr.mxu0 0.0
    %1396 = vmatpush2.msra.mxu0 %v1309
    %1397 = vmatprep.subr.mxu0 0.0
    %1398 = vmatpush2.msra.mxu0 %v1308
    %1399 = vmatprep.subr.mxu0 0.0
    %1400 = vmatpush2.msra.mxu0 %v1307
    %1401 = vmatprep.subr.mxu0 0.0
    %1402 = vmatpush2.msra.mxu0 %v1306
    %1403 = vmatprep.subr.mxu0 0.0
    %1404 = vmatpush2.msra.mxu0 %v1305
    %1405 = vmatprep.subr.mxu0 0.0
    %1406 = vmatpush2.msra.mxu0 %v1304
    %1407 = vmatprep.subr.mxu0 0.0
    %1408 = vmatpush2.msra.mxu0 %v1303
    %1409 = vmatprep.subr.mxu0 0.0
    %1410 = vmatpush2.msra.mxu0 %v1302
    %1411 = vmatprep.subr.mxu0 0.0
    %1412 = vmatpush2.msra.mxu0 %v1301
    %1413 = vmatprep.mubr.f32.mxu0 %v1270
    %1414 = vmatmul.mubr.f32.gmra.mxu0 %v1269
    %v1415 = vpop.f32.mrf.mxu0
    %v1416 = vadd.f32 0.0, %v1415
    %v1417 = vpop.f32.mrf.mxu0
    %1418 = vmatprep.mubr.f32.mxu0 %v1274
    %1419 = vmatmul.mubr.f32.gmra.mxu0 %v1273
    %v1420 = vpop.f32.mrf.mxu0
    %v1421 = vadd.f32 0.0, %v1420
    %v1422 = vpop.f32.mrf.mxu0
    %1423 = vmatprep.mubr.f32.mxu0 %v1278
    %1424 = vmatmul.mubr.f32.gmra.mxu0 %v1277
    %v1425 = vpop.f32.mrf.mxu0
    %v1426 = vadd.f32 0.0, %v1425
    %v1427 = vpop.f32.mrf.mxu0
    %1428 = vmatprep.mubr.f32.mxu0 %v1282
    %1429 = vmatmul.mubr.f32.gmra.mxu0 %v1281
    %v1430 = vpop.f32.mrf.mxu0
    %v1431 = vadd.f32 0.0, %v1430
    %v1432 = vpop.f32.mrf.mxu0
    %1433 = vdwg.mxu0
    %1434 = vmatprep.subr.mxu0 0.0
    %1435 = vmatpush1.msra.mxu0 %v1332
    %1436 = vmatprep.subr.mxu0 0.0
    %1437 = vmatpush1.msra.mxu0 %v1331
    %1438 = vmatprep.subr.mxu0 0.0
    %1439 = vmatpush1.msra.mxu0 %v1330
    %1440 = vmatprep.subr.mxu0 0.0
    %1441 = vmatpush1.msra.mxu0 %v1329
    %1442 = vmatprep.subr.mxu0 0.0
    %1443 = vmatpush1.msra.mxu0 %v1328
    %1444 = vmatprep.subr.mxu0 0.0
    %1445 = vmatpush1.msra.mxu0 %v1327
    %1446 = vmatprep.subr.mxu0 0.0
    %1447 = vmatpush1.msra.mxu0 %v1326
    %1448 = vmatprep.subr.mxu0 0.0
    %1449 = vmatpush1.msra.mxu0 %v1325
    %1450 = vmatprep.subr.mxu0 0.0
    %1451 = vmatpush1.msra.mxu0 %v1324
    %1452 = vmatprep.subr.mxu0 0.0
    %1453 = vmatpush1.msra.mxu0 %v1323
    %1454 = vmatprep.subr.mxu0 0.0
    %1455 = vmatpush1.msra.mxu0 %v1322
    %1456 = vmatprep.subr.mxu0 0.0
    %1457 = vmatpush1.msra.mxu0 %v1321
    %1458 = vmatprep.subr.mxu0 0.0
    %1459 = vmatpush1.msra.mxu0 %v1320
    %1460 = vmatprep.subr.mxu0 0.0
    %1461 = vmatpush1.msra.mxu0 %v1319
    %1462 = vmatprep.subr.mxu0 0.0
    %1463 = vmatpush1.msra.mxu0 %v1318
    %1464 = vmatprep.subr.mxu0 0.0
    %1465 = vmatpush1.msra.mxu0 %v1317
    %1466 = vmatprep.subr.mxu0 0.0
    %1467 = vmatpush2.msra.mxu0 %v1348
    %1468 = vmatprep.subr.mxu0 0.0
    %1469 = vmatpush2.msra.mxu0 %v1347
    %1470 = vmatprep.subr.mxu0 0.0
    %1471 = vmatpush2.msra.mxu0 %v1346
    %1472 = vmatprep.subr.mxu0 0.0
    %1473 = vmatpush2.msra.mxu0 %v1345
    %1474 = vmatprep.subr.mxu0 0.0
    %1475 = vmatpush2.msra.mxu0 %v1344
    %1476 = vmatprep.subr.mxu0 0.0
    %1477 = vmatpush2.msra.mxu0 %v1343
    %1478 = vmatprep.subr.mxu0 0.0
    %1479 = vmatpush2.msra.mxu0 %v1342
    %1480 = vmatprep.subr.mxu0 0.0
    %1481 = vmatpush2.msra.mxu0 %v1341
    %1482 = vmatprep.subr.mxu0 0.0
    %1483 = vmatpush2.msra.mxu0 %v1340
    %1484 = vmatprep.subr.mxu0 0.0
    %1485 = vmatpush2.msra.mxu0 %v1339
    %1486 = vmatprep.subr.mxu0 0.0
    %1487 = vmatpush2.msra.mxu0 %v1338
    %1488 = vmatprep.subr.mxu0 0.0
    %1489 = vmatpush2.msra.mxu0 %v1337
    %1490 = vmatprep.subr.mxu0 0.0
    %1491 = vmatpush2.msra.mxu0 %v1336
    %1492 = vmatprep.subr.mxu0 0.0
    %1493 = vmatpush2.msra.mxu0 %v1335
    %1494 = vmatprep.subr.mxu0 0.0
    %1495 = vmatpush2.msra.mxu0 %v1334
    %1496 = vmatprep.subr.mxu0 0.0
    %1497 = vmatpush2.msra.mxu0 %v1333
    %1498 = vmatprep.mubr.f32.mxu0 %v1272
    %1499 = vmatmul.mubr.f32.gmra.mxu0 %v1271
    %v1500 = vpop.f32.mrf.mxu0
    %v1501 = vadd.f32 %v1416, %v1500
    %v1502 = vpop.f32.mrf.mxu0
    %1503 = vmatprep.mubr.f32.mxu0 %v1276
    %1504 = vmatmul.mubr.f32.gmra.mxu0 %v1275
    %v1505 = vpop.f32.mrf.mxu0
    %v1506 = vadd.f32 %v1421, %v1505
    %v1507 = vpop.f32.mrf.mxu0
    %1508 = vmatprep.mubr.f32.mxu0 %v1280
    %1509 = vmatmul.mubr.f32.gmra.mxu0 %v1279
    %v1510 = vpop.f32.mrf.mxu0
    %v1511 = vadd.f32 %v1426, %v1510
    %v1512 = vpop.f32.mrf.mxu0
    %1513 = vmatprep.mubr.f32.mxu0 %v1284
    %1514 = vmatmul.mubr.f32.gmra.mxu0 %v1283
    %v1515 = vpop.f32.mrf.mxu0
    %v1516 = vadd.f32 %v1431, %v1515
    %v1517 = vpop.f32.mrf.mxu0
    %1518 = vdwg.mxu0
    %1519 = vst.msk [vmem:[#allocation2 + $0x40] sm:$0xff] %vm201, %v1501
    %1520 = vst.msk [vmem:[#allocation2 + $0x48] sm:$0xff] %vm201, %v1506
    %1521 = vst.msk [vmem:[#allocation2 + $0x50] sm:$0xff] %vm201, %v1511
    %1522 = vst.msk [vmem:[#allocation2 + $0x58] sm:$0xff] %vm201, %v1516
    %v1523 = vld [vmem:[%s0] sm:$0xff]
    %v1524 = vld [vmem:[%s0 + $0x8] sm:$0xff]
    %v1525 = vld [vmem:[%s0 + $0x10] sm:$0xff]
    %v1526 = vld [vmem:[%s0 + $0x18] sm:$0xff]
    %v1527 = vld [vmem:[%s0 + $0x20] sm:$0xff]
    %v1528 = vld [vmem:[%s0 + $0x28] sm:$0xff]
    %v1529 = vld [vmem:[%s0 + $0x30] sm:$0xff]
    %v1530 = vld [vmem:[%s0 + $0x38] sm:$0xff]
    %v1531 = vld [vmem:[%s0 + $0x40] sm:$0xff]
    %v1532 = vld [vmem:[%s0 + $0x48] sm:$0xff]
    %v1533 = vld [vmem:[%s0 + $0x50] sm:$0xff]
    %v1534 = vld [vmem:[%s0 + $0x58] sm:$0xff]
    %v1535 = vld [vmem:[%s0 + $0x60] sm:$0xff]
    %v1536 = vld [vmem:[%s0 + $0x68] sm:$0xff]
    %v1537 = vld [vmem:[%s0 + $0x70] sm:$0xff]
    %v1538 = vld [vmem:[%s0 + $0x78] sm:$0xff]
    %v1539 = vlaneseq
    %v1540 = vshrl.u32 %v1539, 7
    %v1541 = vsub.s32 3, %v1540
    %v1542 = vrot.slane %v347, %v1541
    %v1543 = vlaneseq
    %v1544 = vshrl.u32 %v1543, 7
    %v1545 = vsub.s32 3, %v1544
    %v1546 = vrot.slane %v348, %v1545
    %v1547 = vlaneseq
    %v1548 = vshrl.u32 %v1547, 7
    %v1549 = vsub.s32 3, %v1548
    %v1550 = vrot.slane %v349, %v1549
    %v1551 = vlaneseq
    %v1552 = vshrl.u32 %v1551, 7
    %v1553 = vsub.s32 3, %v1552
    %v1554 = vrot.slane %v350, %v1553
    %v1555 = vmul.f32 %v1523, %v1542
    %v1556 = vmul.f32 %v1524, %v1546
    %v1557 = vmul.f32 %v1525, %v1550
    %v1558 = vmul.f32 %v1526, %v1554
    %v1559 = vmul.f32 %v1527, %v1542
    %v1560 = vmul.f32 %v1528, %v1546
    %v1561 = vmul.f32 %v1529, %v1550
    %v1562 = vmul.f32 %v1530, %v1554
    %v1563 = vmul.f32 %v1531, %v1542
    %v1564 = vmul.f32 %v1532, %v1546
    %v1565 = vmul.f32 %v1533, %v1550
    %v1566 = vmul.f32 %v1534, %v1554
    %v1567 = vmul.f32 %v1535, %v1542
    %v1568 = vmul.f32 %v1536, %v1546
    %v1569 = vmul.f32 %v1537, %v1550
    %v1570 = vmul.f32 %v1538, %v1554
    %v1571 = vld [vmem:[%s7] sm:$0xff]
    %v1572 = vld [vmem:[%s7 + $0x8] sm:$0xff]
    %v1573 = vld [vmem:[%s7 + $0x10] sm:$0xff]
    %v1574 = vld [vmem:[%s7 + $0x18] sm:$0xff]
    %v1575 = vld [vmem:[%s7 + $0x20] sm:$0xff]
    %v1576 = vld [vmem:[%s7 + $0x28] sm:$0xff]
    %v1577 = vld [vmem:[%s7 + $0x30] sm:$0xff]
    %v1578 = vld [vmem:[%s7 + $0x38] sm:$0xff]
    %v1579 = vld [vmem:[%s7 + $0x40] sm:$0xff]
    %v1580 = vld [vmem:[%s7 + $0x48] sm:$0xff]
    %v1581 = vld [vmem:[%s7 + $0x50] sm:$0xff]
    %v1582 = vld [vmem:[%s7 + $0x58] sm:$0xff]
    %v1583 = vld [vmem:[%s7 + $0x60] sm:$0xff]
    %v1584 = vld [vmem:[%s7 + $0x68] sm:$0xff]
    %v1585 = vld [vmem:[%s7 + $0x70] sm:$0xff]
    %v1586 = vld [vmem:[%s7 + $0x78] sm:$0xff]
    %v1587 = vld [vmem:[%s7 + $0x80] sm:$0xff]
    %v1588 = vld [vmem:[%s7 + $0x88] sm:$0xff]
    %v1589 = vld [vmem:[%s7 + $0x90] sm:$0xff]
    %v1590 = vld [vmem:[%s7 + $0x98] sm:$0xff]
    %v1591 = vld [vmem:[%s7 + $0xa0] sm:$0xff]
    %v1592 = vld [vmem:[%s7 + $0xa8] sm:$0xff]
    %v1593 = vld [vmem:[%s7 + $0xb0] sm:$0xff]
    %v1594 = vld [vmem:[%s7 + $0xb8] sm:$0xff]
    %v1595 = vld [vmem:[%s7 + $0xc0] sm:$0xff]
    %v1596 = vld [vmem:[%s7 + $0xc8] sm:$0xff]
    %v1597 = vld [vmem:[%s7 + $0xd0] sm:$0xff]
    %v1598 = vld [vmem:[%s7 + $0xd8] sm:$0xff]
    %v1599 = vld [vmem:[%s7 + $0xe0] sm:$0xff]
    %v1600 = vld [vmem:[%s7 + $0xe8] sm:$0xff]
    %v1601 = vld [vmem:[%s7 + $0xf0] sm:$0xff]
    %v1602 = vld [vmem:[%s7 + $0xf8] sm:$0xff]
    %v1603 = vld [vmem:[%s7 + $0x100] sm:$0xff]
    %v1604 = vld [vmem:[%s7 + $0x108] sm:$0xff]
    %v1605 = vld [vmem:[%s7 + $0x110] sm:$0xff]
    %v1606 = vld [vmem:[%s7 + $0x118] sm:$0xff]
    %v1607 = vld [vmem:[%s7 + $0x120] sm:$0xff]
    %v1608 = vld [vmem:[%s7 + $0x128] sm:$0xff]
    %v1609 = vld [vmem:[%s7 + $0x130] sm:$0xff]
    %v1610 = vld [vmem:[%s7 + $0x138] sm:$0xff]
    %v1611 = vld [vmem:[%s7 + $0x140] sm:$0xff]
    %v1612 = vld [vmem:[%s7 + $0x148] sm:$0xff]
    %v1613 = vld [vmem:[%s7 + $0x150] sm:$0xff]
    %v1614 = vld [vmem:[%s7 + $0x158] sm:$0xff]
    %v1615 = vld [vmem:[%s7 + $0x160] sm:$0xff]
    %v1616 = vld [vmem:[%s7 + $0x168] sm:$0xff]
    %v1617 = vld [vmem:[%s7 + $0x170] sm:$0xff]
    %v1618 = vld [vmem:[%s7 + $0x178] sm:$0xff]
    %v1619 = vld [vmem:[%s7 + $0x180] sm:$0xff]
    %v1620 = vld [vmem:[%s7 + $0x188] sm:$0xff]
    %v1621 = vld [vmem:[%s7 + $0x190] sm:$0xff]
    %v1622 = vld [vmem:[%s7 + $0x198] sm:$0xff]
    %v1623 = vld [vmem:[%s7 + $0x1a0] sm:$0xff]
    %v1624 = vld [vmem:[%s7 + $0x1a8] sm:$0xff]
    %v1625 = vld [vmem:[%s7 + $0x1b0] sm:$0xff]
    %v1626 = vld [vmem:[%s7 + $0x1b8] sm:$0xff]
    %v1627 = vld [vmem:[%s7 + $0x1c0] sm:$0xff]
    %v1628 = vld [vmem:[%s7 + $0x1c8] sm:$0xff]
    %v1629 = vld [vmem:[%s7 + $0x1d0] sm:$0xff]
    %v1630 = vld [vmem:[%s7 + $0x1d8] sm:$0xff]
    %v1631 = vld [vmem:[%s7 + $0x1e0] sm:$0xff]
    %v1632 = vld [vmem:[%s7 + $0x1e8] sm:$0xff]
    %v1633 = vld [vmem:[%s7 + $0x1f0] sm:$0xff]
    %v1634 = vld [vmem:[%s7 + $0x1f8] sm:$0xff]
    %1635 = vmatprep.subr.mxu0 0.0
    %1636 = vmatpush1.msra.mxu0 %v1586
    %1637 = vmatprep.subr.mxu0 0.0
    %1638 = vmatpush1.msra.mxu0 %v1585
    %1639 = vmatprep.subr.mxu0 0.0
    %1640 = vmatpush1.msra.mxu0 %v1584
    %1641 = vmatprep.subr.mxu0 0.0
    %1642 = vmatpush1.msra.mxu0 %v1583
    %1643 = vmatprep.subr.mxu0 0.0
    %1644 = vmatpush1.msra.mxu0 %v1582
    %1645 = vmatprep.subr.mxu0 0.0
    %1646 = vmatpush1.msra.mxu0 %v1581
    %1647 = vmatprep.subr.mxu0 0.0
    %1648 = vmatpush1.msra.mxu0 %v1580
    %1649 = vmatprep.subr.mxu0 0.0
    %1650 = vmatpush1.msra.mxu0 %v1579
    %1651 = vmatprep.subr.mxu0 0.0
    %1652 = vmatpush1.msra.mxu0 %v1578
    %1653 = vmatprep.subr.mxu0 0.0
    %1654 = vmatpush1.msra.mxu0 %v1577
    %1655 = vmatprep.subr.mxu0 0.0
    %1656 = vmatpush1.msra.mxu0 %v1576
    %1657 = vmatprep.subr.mxu0 0.0
    %1658 = vmatpush1.msra.mxu0 %v1575
    %1659 = vmatprep.subr.mxu0 0.0
    %1660 = vmatpush1.msra.mxu0 %v1574
    %1661 = vmatprep.subr.mxu0 0.0
    %1662 = vmatpush1.msra.mxu0 %v1573
    %1663 = vmatprep.subr.mxu0 0.0
    %1664 = vmatpush1.msra.mxu0 %v1572
    %1665 = vmatprep.subr.mxu0 0.0
    %1666 = vmatpush1.msra.mxu0 %v1571
    %1667 = vmatprep.subr.mxu0 0.0
    %1668 = vmatpush2.msra.mxu0 %v1602
    %1669 = vmatprep.subr.mxu0 0.0
    %1670 = vmatpush2.msra.mxu0 %v1601
    %1671 = vmatprep.subr.mxu0 0.0
    %1672 = vmatpush2.msra.mxu0 %v1600
    %1673 = vmatprep.subr.mxu0 0.0
    %1674 = vmatpush2.msra.mxu0 %v1599
    %1675 = vmatprep.subr.mxu0 0.0
    %1676 = vmatpush2.msra.mxu0 %v1598
    %1677 = vmatprep.subr.mxu0 0.0
    %1678 = vmatpush2.msra.mxu0 %v1597
    %1679 = vmatprep.subr.mxu0 0.0
    %1680 = vmatpush2.msra.mxu0 %v1596
    %1681 = vmatprep.subr.mxu0 0.0
    %1682 = vmatpush2.msra.mxu0 %v1595
    %1683 = vmatprep.subr.mxu0 0.0
    %1684 = vmatpush2.msra.mxu0 %v1594
    %1685 = vmatprep.subr.mxu0 0.0
    %1686 = vmatpush2.msra.mxu0 %v1593
    %1687 = vmatprep.subr.mxu0 0.0
    %1688 = vmatpush2.msra.mxu0 %v1592
    %1689 = vmatprep.subr.mxu0 0.0
    %1690 = vmatpush2.msra.mxu0 %v1591
    %1691 = vmatprep.subr.mxu0 0.0
    %1692 = vmatpush2.msra.mxu0 %v1590
    %1693 = vmatprep.subr.mxu0 0.0
    %1694 = vmatpush2.msra.mxu0 %v1589
    %1695 = vmatprep.subr.mxu0 0.0
    %1696 = vmatpush2.msra.mxu0 %v1588
    %1697 = vmatprep.subr.mxu0 0.0
    %1698 = vmatpush2.msra.mxu0 %v1587
    %1699 = vmatprep.mubr.f32.mxu0 %v1556
    %1700 = vmatmul.mubr.f32.gmra.mxu0 %v1555
    %v1701 = vpop.f32.mrf.mxu0
    %v1702 = vadd.f32 0.0, %v1701
    %v1703 = vpop.f32.mrf.mxu0
    %1704 = vmatprep.mubr.f32.mxu0 %v1560
    %1705 = vmatmul.mubr.f32.gmra.mxu0 %v1559
    %v1706 = vpop.f32.mrf.mxu0
    %v1707 = vadd.f32 0.0, %v1706
    %v1708 = vpop.f32.mrf.mxu0
    %1709 = vmatprep.mubr.f32.mxu0 %v1564
    %1710 = vmatmul.mubr.f32.gmra.mxu0 %v1563
    %v1711 = vpop.f32.mrf.mxu0
    %v1712 = vadd.f32 0.0, %v1711
    %v1713 = vpop.f32.mrf.mxu0
    %1714 = vmatprep.mubr.f32.mxu0 %v1568
    %1715 = vmatmul.mubr.f32.gmra.mxu0 %v1567
    %v1716 = vpop.f32.mrf.mxu0
    %v1717 = vadd.f32 0.0, %v1716
    %v1718 = vpop.f32.mrf.mxu0
    %1719 = vdwg.mxu0
    %1720 = vmatprep.subr.mxu0 0.0
    %1721 = vmatpush1.msra.mxu0 %v1618
    %1722 = vmatprep.subr.mxu0 0.0
    %1723 = vmatpush1.msra.mxu0 %v1617
    %1724 = vmatprep.subr.mxu0 0.0
    %1725 = vmatpush1.msra.mxu0 %v1616
    %1726 = vmatprep.subr.mxu0 0.0
    %1727 = vmatpush1.msra.mxu0 %v1615
    %1728 = vmatprep.subr.mxu0 0.0
    %1729 = vmatpush1.msra.mxu0 %v1614
    %1730 = vmatprep.subr.mxu0 0.0
    %1731 = vmatpush1.msra.mxu0 %v1613
    %1732 = vmatprep.subr.mxu0 0.0
    %1733 = vmatpush1.msra.mxu0 %v1612
    %1734 = vmatprep.subr.mxu0 0.0
    %1735 = vmatpush1.msra.mxu0 %v1611
    %1736 = vmatprep.subr.mxu0 0.0
    %1737 = vmatpush1.msra.mxu0 %v1610
    %1738 = vmatprep.subr.mxu0 0.0
    %1739 = vmatpush1.msra.mxu0 %v1609
    %1740 = vmatprep.subr.mxu0 0.0
    %1741 = vmatpush1.msra.mxu0 %v1608
    %1742 = vmatprep.subr.mxu0 0.0
    %1743 = vmatpush1.msra.mxu0 %v1607
    %1744 = vmatprep.subr.mxu0 0.0
    %1745 = vmatpush1.msra.mxu0 %v1606
    %1746 = vmatprep.subr.mxu0 0.0
    %1747 = vmatpush1.msra.mxu0 %v1605
    %1748 = vmatprep.subr.mxu0 0.0
    %1749 = vmatpush1.msra.mxu0 %v1604
    %1750 = vmatprep.subr.mxu0 0.0
    %1751 = vmatpush1.msra.mxu0 %v1603
    %1752 = vmatprep.subr.mxu0 0.0
    %1753 = vmatpush2.msra.mxu0 %v1634
    %1754 = vmatprep.subr.mxu0 0.0
    %1755 = vmatpush2.msra.mxu0 %v1633
    %1756 = vmatprep.subr.mxu0 0.0
    %1757 = vmatpush2.msra.mxu0 %v1632
    %1758 = vmatprep.subr.mxu0 0.0
    %1759 = vmatpush2.msra.mxu0 %v1631
    %1760 = vmatprep.subr.mxu0 0.0
    %1761 = vmatpush2.msra.mxu0 %v1630
    %1762 = vmatprep.subr.mxu0 0.0
    %1763 = vmatpush2.msra.mxu0 %v1629
    %1764 = vmatprep.subr.mxu0 0.0
    %1765 = vmatpush2.msra.mxu0 %v1628
    %1766 = vmatprep.subr.mxu0 0.0
    %1767 = vmatpush2.msra.mxu0 %v1627
    %1768 = vmatprep.subr.mxu0 0.0
    %1769 = vmatpush2.msra.mxu0 %v1626
    %1770 = vmatprep.subr.mxu0 0.0
    %1771 = vmatpush2.msra.mxu0 %v1625
    %1772 = vmatprep.subr.mxu0 0.0
    %1773 = vmatpush2.msra.mxu0 %v1624
    %1774 = vmatprep.subr.mxu0 0.0
    %1775 = vmatpush2.msra.mxu0 %v1623
    %1776 = vmatprep.subr.mxu0 0.0
    %1777 = vmatpush2.msra.mxu0 %v1622
    %1778 = vmatprep.subr.mxu0 0.0
    %1779 = vmatpush2.msra.mxu0 %v1621
    %1780 = vmatprep.subr.mxu0 0.0
    %1781 = vmatpush2.msra.mxu0 %v1620
    %1782 = vmatprep.subr.mxu0 0.0
    %1783 = vmatpush2.msra.mxu0 %v1619
    %1784 = vmatprep.mubr.f32.mxu0 %v1558
    %1785 = vmatmul.mubr.f32.gmra.mxu0 %v1557
    %v1786 = vpop.f32.mrf.mxu0
    %v1787 = vadd.f32 %v1702, %v1786
    %v1788 = vpop.f32.mrf.mxu0
    %1789 = vmatprep.mubr.f32.mxu0 %v1562
    %1790 = vmatmul.mubr.f32.gmra.mxu0 %v1561
    %v1791 = vpop.f32.mrf.mxu0
    %v1792 = vadd.f32 %v1707, %v1791
    %v1793 = vpop.f32.mrf.mxu0
    %1794 = vmatprep.mubr.f32.mxu0 %v1566
    %1795 = vmatmul.mubr.f32.gmra.mxu0 %v1565
    %v1796 = vpop.f32.mrf.mxu0
    %v1797 = vadd.f32 %v1712, %v1796
    %v1798 = vpop.f32.mrf.mxu0
    %1799 = vmatprep.mubr.f32.mxu0 %v1570
    %1800 = vmatmul.mubr.f32.gmra.mxu0 %v1569
    %v1801 = vpop.f32.mrf.mxu0
    %v1802 = vadd.f32 %v1717, %v1801
    %v1803 = vpop.f32.mrf.mxu0
    %1804 = vdwg.mxu0
    %1805 = vst.msk [vmem:[#allocation2 + $0x60] sm:$0xff] %vm201, %v1787
    %1806 = vst.msk [vmem:[#allocation2 + $0x68] sm:$0xff] %vm201, %v1792
    %1807 = vst.msk [vmem:[#allocation2 + $0x70] sm:$0xff] %vm201, %v1797
    %1808 = vst.msk [vmem:[#allocation2 + $0x78] sm:$0xff] %vm201, %v1802
    %v1809 = vld [vmem:[%s0] sm:$0xff]
    %v1810 = vld [vmem:[%s0 + $0x8] sm:$0xff]
    %v1811 = vld [vmem:[%s0 + $0x10] sm:$0xff]
    %v1812 = vld [vmem:[%s0 + $0x18] sm:$0xff]
    %v1813 = vld [vmem:[%s0 + $0x20] sm:$0xff]
    %v1814 = vld [vmem:[%s0 + $0x28] sm:$0xff]
    %v1815 = vld [vmem:[%s0 + $0x30] sm:$0xff]
    %v1816 = vld [vmem:[%s0 + $0x38] sm:$0xff]
    %v1817 = vld [vmem:[%s0 + $0x40] sm:$0xff]
    %v1818 = vld [vmem:[%s0 + $0x48] sm:$0xff]
    %v1819 = vld [vmem:[%s0 + $0x50] sm:$0xff]
    %v1820 = vld [vmem:[%s0 + $0x58] sm:$0xff]
    %v1821 = vld [vmem:[%s0 + $0x60] sm:$0xff]
    %v1822 = vld [vmem:[%s0 + $0x68] sm:$0xff]
    %v1823 = vld [vmem:[%s0 + $0x70] sm:$0xff]
    %v1824 = vld [vmem:[%s0 + $0x78] sm:$0xff]
    %v1825 = vlaneseq
    %v1826 = vshrl.u32 %v1825, 7
    %v1827 = vsub.s32 4, %v1826
    %v1828 = vrot.slane %v347, %v1827
    %v1829 = vlaneseq
    %v1830 = vshrl.u32 %v1829, 7
    %v1831 = vsub.s32 4, %v1830
    %v1832 = vrot.slane %v348, %v1831
    %v1833 = vlaneseq
    %v1834 = vshrl.u32 %v1833, 7
    %v1835 = vsub.s32 4, %v1834
    %v1836 = vrot.slane %v349, %v1835
    %v1837 = vlaneseq
    %v1838 = vshrl.u32 %v1837, 7
    %v1839 = vsub.s32 4, %v1838
    %v1840 = vrot.slane %v350, %v1839
    %v1841 = vmul.f32 %v1809, %v1828
    %v1842 = vmul.f32 %v1810, %v1832
    %v1843 = vmul.f32 %v1811, %v1836
    %v1844 = vmul.f32 %v1812, %v1840
    %v1845 = vmul.f32 %v1813, %v1828
    %v1846 = vmul.f32 %v1814, %v1832
    %v1847 = vmul.f32 %v1815, %v1836
    %v1848 = vmul.f32 %v1816, %v1840
    %v1849 = vmul.f32 %v1817, %v1828
    %v1850 = vmul.f32 %v1818, %v1832
    %v1851 = vmul.f32 %v1819, %v1836
    %v1852 = vmul.f32 %v1820, %v1840
    %v1853 = vmul.f32 %v1821, %v1828
    %v1854 = vmul.f32 %v1822, %v1832
    %v1855 = vmul.f32 %v1823, %v1836
    %v1856 = vmul.f32 %v1824, %v1840
    %v1857 = vld [vmem:[%s7] sm:$0xff]
    %v1858 = vld [vmem:[%s7 + $0x8] sm:$0xff]
    %v1859 = vld [vmem:[%s7 + $0x10] sm:$0xff]
    %v1860 = vld [vmem:[%s7 + $0x18] sm:$0xff]
    %v1861 = vld [vmem:[%s7 + $0x20] sm:$0xff]
    %v1862 = vld [vmem:[%s7 + $0x28] sm:$0xff]
    %v1863 = vld [vmem:[%s7 + $0x30] sm:$0xff]
    %v1864 = vld [vmem:[%s7 + $0x38] sm:$0xff]
    %v1865 = vld [vmem:[%s7 + $0x40] sm:$0xff]
    %v1866 = vld [vmem:[%s7 + $0x48] sm:$0xff]
    %v1867 = vld [vmem:[%s7 + $0x50] sm:$0xff]
    %v1868 = vld [vmem:[%s7 + $0x58] sm:$0xff]
    %v1869 = vld [vmem:[%s7 + $0x60] sm:$0xff]
    %v1870 = vld [vmem:[%s7 + $0x68] sm:$0xff]
    %v1871 = vld [vmem:[%s7 + $0x70] sm:$0xff]
    %v1872 = vld [vmem:[%s7 + $0x78] sm:$0xff]
    %v1873 = vld [vmem:[%s7 + $0x80] sm:$0xff]
    %v1874 = vld [vmem:[%s7 + $0x88] sm:$0xff]
    %v1875 = vld [vmem:[%s7 + $0x90] sm:$0xff]
    %v1876 = vld [vmem:[%s7 + $0x98] sm:$0xff]
    %v1877 = vld [vmem:[%s7 + $0xa0] sm:$0xff]
    %v1878 = vld [vmem:[%s7 + $0xa8] sm:$0xff]
    %v1879 = vld [vmem:[%s7 + $0xb0] sm:$0xff]
    %v1880 = vld [vmem:[%s7 + $0xb8] sm:$0xff]
    %v1881 = vld [vmem:[%s7 + $0xc0] sm:$0xff]
    %v1882 = vld [vmem:[%s7 + $0xc8] sm:$0xff]
    %v1883 = vld [vmem:[%s7 + $0xd0] sm:$0xff]
    %v1884 = vld [vmem:[%s7 + $0xd8] sm:$0xff]
    %v1885 = vld [vmem:[%s7 + $0xe0] sm:$0xff]
    %v1886 = vld [vmem:[%s7 + $0xe8] sm:$0xff]
    %v1887 = vld [vmem:[%s7 + $0xf0] sm:$0xff]
    %v1888 = vld [vmem:[%s7 + $0xf8] sm:$0xff]
    %v1889 = vld [vmem:[%s7 + $0x100] sm:$0xff]
    %v1890 = vld [vmem:[%s7 + $0x108] sm:$0xff]
    %v1891 = vld [vmem:[%s7 + $0x110] sm:$0xff]
    %v1892 = vld [vmem:[%s7 + $0x118] sm:$0xff]
    %v1893 = vld [vmem:[%s7 + $0x120] sm:$0xff]
    %v1894 = vld [vmem:[%s7 + $0x128] sm:$0xff]
    %v1895 = vld [vmem:[%s7 + $0x130] sm:$0xff]
    %v1896 = vld [vmem:[%s7 + $0x138] sm:$0xff]
    %v1897 = vld [vmem:[%s7 + $0x140] sm:$0xff]
    %v1898 = vld [vmem:[%s7 + $0x148] sm:$0xff]
    %v1899 = vld [vmem:[%s7 + $0x150] sm:$0xff]
    %v1900 = vld [vmem:[%s7 + $0x158] sm:$0xff]
    %v1901 = vld [vmem:[%s7 + $0x160] sm:$0xff]
    %v1902 = vld [vmem:[%s7 + $0x168] sm:$0xff]
    %v1903 = vld [vmem:[%s7 + $0x170] sm:$0xff]
    %v1904 = vld [vmem:[%s7 + $0x178] sm:$0xff]
    %v1905 = vld [vmem:[%s7 + $0x180] sm:$0xff]
    %v1906 = vld [vmem:[%s7 + $0x188] sm:$0xff]
    %v1907 = vld [vmem:[%s7 + $0x190] sm:$0xff]
    %v1908 = vld [vmem:[%s7 + $0x198] sm:$0xff]
    %v1909 = vld [vmem:[%s7 + $0x1a0] sm:$0xff]
    %v1910 = vld [vmem:[%s7 + $0x1a8] sm:$0xff]
    %v1911 = vld [vmem:[%s7 + $0x1b0] sm:$0xff]
    %v1912 = vld [vmem:[%s7 + $0x1b8] sm:$0xff]
    %v1913 = vld [vmem:[%s7 + $0x1c0] sm:$0xff]
    %v1914 = vld [vmem:[%s7 + $0x1c8] sm:$0xff]
    %v1915 = vld [vmem:[%s7 + $0x1d0] sm:$0xff]
    %v1916 = vld [vmem:[%s7 + $0x1d8] sm:$0xff]
    %v1917 = vld [vmem:[%s7 + $0x1e0] sm:$0xff]
    %v1918 = vld [vmem:[%s7 + $0x1e8] sm:$0xff]
    %v1919 = vld [vmem:[%s7 + $0x1f0] sm:$0xff]
    %v1920 = vld [vmem:[%s7 + $0x1f8] sm:$0xff]
    %1921 = vmatprep.subr.mxu0 0.0
    %1922 = vmatpush1.msra.mxu0 %v1872
    %1923 = vmatprep.subr.mxu0 0.0
    %1924 = vmatpush1.msra.mxu0 %v1871
    %1925 = vmatprep.subr.mxu0 0.0
    %1926 = vmatpush1.msra.mxu0 %v1870
    %1927 = vmatprep.subr.mxu0 0.0
    %1928 = vmatpush1.msra.mxu0 %v1869
    %1929 = vmatprep.subr.mxu0 0.0
    %1930 = vmatpush1.msra.mxu0 %v1868
    %1931 = vmatprep.subr.mxu0 0.0
    %1932 = vmatpush1.msra.mxu0 %v1867
    %1933 = vmatprep.subr.mxu0 0.0
    %1934 = vmatpush1.msra.mxu0 %v1866
    %1935 = vmatprep.subr.mxu0 0.0
    %1936 = vmatpush1.msra.mxu0 %v1865
    %1937 = vmatprep.subr.mxu0 0.0
    %1938 = vmatpush1.msra.mxu0 %v1864
    %1939 = vmatprep.subr.mxu0 0.0
    %1940 = vmatpush1.msra.mxu0 %v1863
    %1941 = vmatprep.subr.mxu0 0.0
    %1942 = vmatpush1.msra.mxu0 %v1862
    %1943 = vmatprep.subr.mxu0 0.0
    %1944 = vmatpush1.msra.mxu0 %v1861
    %1945 = vmatprep.subr.mxu0 0.0
    %1946 = vmatpush1.msra.mxu0 %v1860
    %1947 = vmatprep.subr.mxu0 0.0
    %1948 = vmatpush1.msra.mxu0 %v1859
    %1949 = vmatprep.subr.mxu0 0.0
    %1950 = vmatpush1.msra.mxu0 %v1858
    %1951 = vmatprep.subr.mxu0 0.0
    %1952 = vmatpush1.msra.mxu0 %v1857
    %1953 = vmatprep.subr.mxu0 0.0
    %1954 = vmatpush2.msra.mxu0 %v1888
    %1955 = vmatprep.subr.mxu0 0.0
    %1956 = vmatpush2.msra.mxu0 %v1887
    %1957 = vmatprep.subr.mxu0 0.0
    %1958 = vmatpush2.msra.mxu0 %v1886
    %1959 = vmatprep.subr.mxu0 0.0
    %1960 = vmatpush2.msra.mxu0 %v1885
    %1961 = vmatprep.subr.mxu0 0.0
    %1962 = vmatpush2.msra.mxu0 %v1884
    %1963 = vmatprep.subr.mxu0 0.0
    %1964 = vmatpush2.msra.mxu0 %v1883
    %1965 = vmatprep.subr.mxu0 0.0
    %1966 = vmatpush2.msra.mxu0 %v1882
    %1967 = vmatprep.subr.mxu0 0.0
    %1968 = vmatpush2.msra.mxu0 %v1881
    %1969 = vmatprep.subr.mxu0 0.0
    %1970 = vmatpush2.msra.mxu0 %v1880
    %1971 = vmatprep.subr.mxu0 0.0
    %1972 = vmatpush2.msra.mxu0 %v1879
    %1973 = vmatprep.subr.mxu0 0.0
    %1974 = vmatpush2.msra.mxu0 %v1878
    %1975 = vmatprep.subr.mxu0 0.0
    %1976 = vmatpush2.msra.mxu0 %v1877
    %1977 = vmatprep.subr.mxu0 0.0
    %1978 = vmatpush2.msra.mxu0 %v1876
    %1979 = vmatprep.subr.mxu0 0.0
    %1980 = vmatpush2.msra.mxu0 %v1875
    %1981 = vmatprep.subr.mxu0 0.0
    %1982 = vmatpush2.msra.mxu0 %v1874
    %1983 = vmatprep.subr.mxu0 0.0
    %1984 = vmatpush2.msra.mxu0 %v1873
    %1985 = vmatprep.mubr.f32.mxu0 %v1842
    %1986 = vmatmul.mubr.f32.gmra.mxu0 %v1841
    %v1987 = vpop.f32.mrf.mxu0
    %v1988 = vadd.f32 0.0, %v1987
    %v1989 = vpop.f32.mrf.mxu0
    %1990 = vmatprep.mubr.f32.mxu0 %v1846
    %1991 = vmatmul.mubr.f32.gmra.mxu0 %v1845
    %v1992 = vpop.f32.mrf.mxu0
    %v1993 = vadd.f32 0.0, %v1992
    %v1994 = vpop.f32.mrf.mxu0
    %1995 = vmatprep.mubr.f32.mxu0 %v1850
    %1996 = vmatmul.mubr.f32.gmra.mxu0 %v1849
    %v1997 = vpop.f32.mrf.mxu0
    %v1998 = vadd.f32 0.0, %v1997
    %v1999 = vpop.f32.mrf.mxu0
    %2000 = vmatprep.mubr.f32.mxu0 %v1854
    %2001 = vmatmul.mubr.f32.gmra.mxu0 %v1853
    %v2002 = vpop.f32.mrf.mxu0
    %v2003 = vadd.f32 0.0, %v2002
    %v2004 = vpop.f32.mrf.mxu0
    %2005 = vdwg.mxu0
    %2006 = vmatprep.subr.mxu0 0.0
    %2007 = vmatpush1.msra.mxu0 %v1904
    %2008 = vmatprep.subr.mxu0 0.0
    %2009 = vmatpush1.msra.mxu0 %v1903
    %2010 = vmatprep.subr.mxu0 0.0
    %2011 = vmatpush1.msra.mxu0 %v1902
    %2012 = vmatprep.subr.mxu0 0.0
    %2013 = vmatpush1.msra.mxu0 %v1901
    %2014 = vmatprep.subr.mxu0 0.0
    %2015 = vmatpush1.msra.mxu0 %v1900
    %2016 = vmatprep.subr.mxu0 0.0
    %2017 = vmatpush1.msra.mxu0 %v1899
    %2018 = vmatprep.subr.mxu0 0.0
    %2019 = vmatpush1.msra.mxu0 %v1898
    %2020 = vmatprep.subr.mxu0 0.0
    %2021 = vmatpush1.msra.mxu0 %v1897
    %2022 = vmatprep.subr.mxu0 0.0
    %2023 = vmatpush1.msra.mxu0 %v1896
    %2024 = vmatprep.subr.mxu0 0.0
    %2025 = vmatpush1.msra.mxu0 %v1895
    %2026 = vmatprep.subr.mxu0 0.0
    %2027 = vmatpush1.msra.mxu0 %v1894
    %2028 = vmatprep.subr.mxu0 0.0
    %2029 = vmatpush1.msra.mxu0 %v1893
    %2030 = vmatprep.subr.mxu0 0.0
    %2031 = vmatpush1.msra.mxu0 %v1892
    %2032 = vmatprep.subr.mxu0 0.0
    %2033 = vmatpush1.msra.mxu0 %v1891
    %2034 = vmatprep.subr.mxu0 0.0
    %2035 = vmatpush1.msra.mxu0 %v1890
    %2036 = vmatprep.subr.mxu0 0.0
    %2037 = vmatpush1.msra.mxu0 %v1889
    %2038 = vmatprep.subr.mxu0 0.0
    %2039 = vmatpush2.msra.mxu0 %v1920
    %2040 = vmatprep.subr.mxu0 0.0
    %2041 = vmatpush2.msra.mxu0 %v1919
    %2042 = vmatprep.subr.mxu0 0.0
    %2043 = vmatpush2.msra.mxu0 %v1918
    %2044 = vmatprep.subr.mxu0 0.0
    %2045 = vmatpush2.msra.mxu0 %v1917
    %2046 = vmatprep.subr.mxu0 0.0
    %2047 = vmatpush2.msra.mxu0 %v1916
    %2048 = vmatprep.subr.mxu0 0.0
    %2049 = vmatpush2.msra.mxu0 %v1915
    %2050 = vmatprep.subr.mxu0 0.0
    %2051 = vmatpush2.msra.mxu0 %v1914
    %2052 = vmatprep.subr.mxu0 0.0
    %2053 = vmatpush2.msra.mxu0 %v1913
    %2054 = vmatprep.subr.mxu0 0.0
    %2055 = vmatpush2.msra.mxu0 %v1912
    %2056 = vmatprep.subr.mxu0 0.0
    %2057 = vmatpush2.msra.mxu0 %v1911
    %2058 = vmatprep.subr.mxu0 0.0
    %2059 = vmatpush2.msra.mxu0 %v1910
    %2060 = vmatprep.subr.mxu0 0.0
    %2061 = vmatpush2.msra.mxu0 %v1909
    %2062 = vmatprep.subr.mxu0 0.0
    %2063 = vmatpush2.msra.mxu0 %v1908
    %2064 = vmatprep.subr.mxu0 0.0
    %2065 = vmatpush2.msra.mxu0 %v1907
    %2066 = vmatprep.subr.mxu0 0.0
    %2067 = vmatpush2.msra.mxu0 %v1906
    %2068 = vmatprep.subr.mxu0 0.0
    %2069 = vmatpush2.msra.mxu0 %v1905
    %2070 = vmatprep.mubr.f32.mxu0 %v1844
    %2071 = vmatmul.mubr.f32.gmra.mxu0 %v1843
    %v2072 = vpop.f32.mrf.mxu0
    %v2073 = vadd.f32 %v1988, %v2072
    %v2074 = vpop.f32.mrf.mxu0
    %2075 = vmatprep.mubr.f32.mxu0 %v1848
    %2076 = vmatmul.mubr.f32.gmra.mxu0 %v1847
    %v2077 = vpop.f32.mrf.mxu0
    %v2078 = vadd.f32 %v1993, %v2077
    %v2079 = vpop.f32.mrf.mxu0
    %2080 = vmatprep.mubr.f32.mxu0 %v1852
    %2081 = vmatmul.mubr.f32.gmra.mxu0 %v1851
    %v2082 = vpop.f32.mrf.mxu0
    %v2083 = vadd.f32 %v1998, %v2082
    %v2084 = vpop.f32.mrf.mxu0
    %2085 = vmatprep.mubr.f32.mxu0 %v1856
    %2086 = vmatmul.mubr.f32.gmra.mxu0 %v1855
    %v2087 = vpop.f32.mrf.mxu0
    %v2088 = vadd.f32 %v2003, %v2087
    %v2089 = vpop.f32.mrf.mxu0
    %2090 = vdwg.mxu0
    %2091 = vst.msk [vmem:[#allocation2 + $0x80] sm:$0xff] %vm201, %v2073
    %2092 = vst.msk [vmem:[#allocation2 + $0x88] sm:$0xff] %vm201, %v2078
    %2093 = vst.msk [vmem:[#allocation2 + $0x90] sm:$0xff] %vm201, %v2083
    %2094 = vst.msk [vmem:[#allocation2 + $0x98] sm:$0xff] %vm201, %v2088
    %v2095 = vld [vmem:[%s0] sm:$0xff]
    %v2096 = vld [vmem:[%s0 + $0x8] sm:$0xff]
    %v2097 = vld [vmem:[%s0 + $0x10] sm:$0xff]
    %v2098 = vld [vmem:[%s0 + $0x18] sm:$0xff]
    %v2099 = vld [vmem:[%s0 + $0x20] sm:$0xff]
    %v2100 = vld [vmem:[%s0 + $0x28] sm:$0xff]
    %v2101 = vld [vmem:[%s0 + $0x30] sm:$0xff]
    %v2102 = vld [vmem:[%s0 + $0x38] sm:$0xff]
    %v2103 = vld [vmem:[%s0 + $0x40] sm:$0xff]
    %v2104 = vld [vmem:[%s0 + $0x48] sm:$0xff]
    %v2105 = vld [vmem:[%s0 + $0x50] sm:$0xff]
    %v2106 = vld [vmem:[%s0 + $0x58] sm:$0xff]
    %v2107 = vld [vmem:[%s0 + $0x60] sm:$0xff]
    %v2108 = vld [vmem:[%s0 + $0x68] sm:$0xff]
    %v2109 = vld [vmem:[%s0 + $0x70] sm:$0xff]
    %v2110 = vld [vmem:[%s0 + $0x78] sm:$0xff]
    %v2111 = vlaneseq
    %v2112 = vshrl.u32 %v2111, 7
    %v2113 = vsub.s32 5, %v2112
    %v2114 = vrot.slane %v347, %v2113
    %v2115 = vlaneseq
    %v2116 = vshrl.u32 %v2115, 7
    %v2117 = vsub.s32 5, %v2116
    %v2118 = vrot.slane %v348, %v2117
    %v2119 = vlaneseq
    %v2120 = vshrl.u32 %v2119, 7
    %v2121 = vsub.s32 5, %v2120
    %v2122 = vrot.slane %v349, %v2121
    %v2123 = vlaneseq
    %v2124 = vshrl.u32 %v2123, 7
    %v2125 = vsub.s32 5, %v2124
    %v2126 = vrot.slane %v350, %v2125
    %v2127 = vmul.f32 %v2095, %v2114
    %v2128 = vmul.f32 %v2096, %v2118
    %v2129 = vmul.f32 %v2097, %v2122
    %v2130 = vmul.f32 %v2098, %v2126
    %v2131 = vmul.f32 %v2099, %v2114
    %v2132 = vmul.f32 %v2100, %v2118
    %v2133 = vmul.f32 %v2101, %v2122
    %v2134 = vmul.f32 %v2102, %v2126
    %v2135 = vmul.f32 %v2103, %v2114
    %v2136 = vmul.f32 %v2104, %v2118
    %v2137 = vmul.f32 %v2105, %v2122
    %v2138 = vmul.f32 %v2106, %v2126
    %v2139 = vmul.f32 %v2107, %v2114
    %v2140 = vmul.f32 %v2108, %v2118
    %v2141 = vmul.f32 %v2109, %v2122
    %v2142 = vmul.f32 %v2110, %v2126
    %v2143 = vld [vmem:[%s7] sm:$0xff]
    %v2144 = vld [vmem:[%s7 + $0x8] sm:$0xff]
    %v2145 = vld [vmem:[%s7 + $0x10] sm:$0xff]
    %v2146 = vld [vmem:[%s7 + $0x18] sm:$0xff]
    %v2147 = vld [vmem:[%s7 + $0x20] sm:$0xff]
    %v2148 = vld [vmem:[%s7 + $0x28] sm:$0xff]
    %v2149 = vld [vmem:[%s7 + $0x30] sm:$0xff]
    %v2150 = vld [vmem:[%s7 + $0x38] sm:$0xff]
    %v2151 = vld [vmem:[%s7 + $0x40] sm:$0xff]
    %v2152 = vld [vmem:[%s7 + $0x48] sm:$0xff]
    %v2153 = vld [vmem:[%s7 + $0x50] sm:$0xff]
    %v2154 = vld [vmem:[%s7 + $0x58] sm:$0xff]
    %v2155 = vld [vmem:[%s7 + $0x60] sm:$0xff]
    %v2156 = vld [vmem:[%s7 + $0x68] sm:$0xff]
    %v2157 = vld [vmem:[%s7 + $0x70] sm:$0xff]
    %v2158 = vld [vmem:[%s7 + $0x78] sm:$0xff]
    %v2159 = vld [vmem:[%s7 + $0x80] sm:$0xff]
    %v2160 = vld [vmem:[%s7 + $0x88] sm:$0xff]
    %v2161 = vld [vmem:[%s7 + $0x90] sm:$0xff]
    %v2162 = vld [vmem:[%s7 + $0x98] sm:$0xff]
    %v2163 = vld [vmem:[%s7 + $0xa0] sm:$0xff]
    %v2164 = vld [vmem:[%s7 + $0xa8] sm:$0xff]
    %v2165 = vld [vmem:[%s7 + $0xb0] sm:$0xff]
    %v2166 = vld [vmem:[%s7 + $0xb8] sm:$0xff]
    %v2167 = vld [vmem:[%s7 + $0xc0] sm:$0xff]
    %v2168 = vld [vmem:[%s7 + $0xc8] sm:$0xff]
    %v2169 = vld [vmem:[%s7 + $0xd0] sm:$0xff]
    %v2170 = vld [vmem:[%s7 + $0xd8] sm:$0xff]
    %v2171 = vld [vmem:[%s7 + $0xe0] sm:$0xff]
    %v2172 = vld [vmem:[%s7 + $0xe8] sm:$0xff]
    %v2173 = vld [vmem:[%s7 + $0xf0] sm:$0xff]
    %v2174 = vld [vmem:[%s7 + $0xf8] sm:$0xff]
    %v2175 = vld [vmem:[%s7 + $0x100] sm:$0xff]
    %v2176 = vld [vmem:[%s7 + $0x108] sm:$0xff]
    %v2177 = vld [vmem:[%s7 + $0x110] sm:$0xff]
    %v2178 = vld [vmem:[%s7 + $0x118] sm:$0xff]
    %v2179 = vld [vmem:[%s7 + $0x120] sm:$0xff]
    %v2180 = vld [vmem:[%s7 + $0x128] sm:$0xff]
    %v2181 = vld [vmem:[%s7 + $0x130] sm:$0xff]
    %v2182 = vld [vmem:[%s7 + $0x138] sm:$0xff]
    %v2183 = vld [vmem:[%s7 + $0x140] sm:$0xff]
    %v2184 = vld [vmem:[%s7 + $0x148] sm:$0xff]
    %v2185 = vld [vmem:[%s7 + $0x150] sm:$0xff]
    %v2186 = vld [vmem:[%s7 + $0x158] sm:$0xff]
    %v2187 = vld [vmem:[%s7 + $0x160] sm:$0xff]
    %v2188 = vld [vmem:[%s7 + $0x168] sm:$0xff]
    %v2189 = vld [vmem:[%s7 + $0x170] sm:$0xff]
    %v2190 = vld [vmem:[%s7 + $0x178] sm:$0xff]
    %v2191 = vld [vmem:[%s7 + $0x180] sm:$0xff]
    %v2192 = vld [vmem:[%s7 + $0x188] sm:$0xff]
    %v2193 = vld [vmem:[%s7 + $0x190] sm:$0xff]
    %v2194 = vld [vmem:[%s7 + $0x198] sm:$0xff]
    %v2195 = vld [vmem:[%s7 + $0x1a0] sm:$0xff]
    %v2196 = vld [vmem:[%s7 + $0x1a8] sm:$0xff]
    %v2197 = vld [vmem:[%s7 + $0x1b0] sm:$0xff]
    %v2198 = vld [vmem:[%s7 + $0x1b8] sm:$0xff]
    %v2199 = vld [vmem:[%s7 + $0x1c0] sm:$0xff]
    %v2200 = vld [vmem:[%s7 + $0x1c8] sm:$0xff]
    %v2201 = vld [vmem:[%s7 + $0x1d0] sm:$0xff]
    %v2202 = vld [vmem:[%s7 + $0x1d8] sm:$0xff]
    %v2203 = vld [vmem:[%s7 + $0x1e0] sm:$0xff]
    %v2204 = vld [vmem:[%s7 + $0x1e8] sm:$0xff]
    %v2205 = vld [vmem:[%s7 + $0x1f0] sm:$0xff]
    %v2206 = vld [vmem:[%s7 + $0x1f8] sm:$0xff]
    %2207 = vmatprep.subr.mxu0 0.0
    %2208 = vmatpush1.msra.mxu0 %v2158
    %2209 = vmatprep.subr.mxu0 0.0
    %2210 = vmatpush1.msra.mxu0 %v2157
    %2211 = vmatprep.subr.mxu0 0.0
    %2212 = vmatpush1.msra.mxu0 %v2156
    %2213 = vmatprep.subr.mxu0 0.0
    %2214 = vmatpush1.msra.mxu0 %v2155
    %2215 = vmatprep.subr.mxu0 0.0
    %2216 = vmatpush1.msra.mxu0 %v2154
    %2217 = vmatprep.subr.mxu0 0.0
    %2218 = vmatpush1.msra.mxu0 %v2153
    %2219 = vmatprep.subr.mxu0 0.0
    %2220 = vmatpush1.msra.mxu0 %v2152
    %2221 = vmatprep.subr.mxu0 0.0
    %2222 = vmatpush1.msra.mxu0 %v2151
    %2223 = vmatprep.subr.mxu0 0.0
    %2224 = vmatpush1.msra.mxu0 %v2150
    %2225 = vmatprep.subr.mxu0 0.0
    %2226 = vmatpush1.msra.mxu0 %v2149
    %2227 = vmatprep.subr.mxu0 0.0
    %2228 = vmatpush1.msra.mxu0 %v2148
    %2229 = vmatprep.subr.mxu0 0.0
    %2230 = vmatpush1.msra.mxu0 %v2147
    %2231 = vmatprep.subr.mxu0 0.0
    %2232 = vmatpush1.msra.mxu0 %v2146
    %2233 = vmatprep.subr.mxu0 0.0
    %2234 = vmatpush1.msra.mxu0 %v2145
    %2235 = vmatprep.subr.mxu0 0.0
    %2236 = vmatpush1.msra.mxu0 %v2144
    %2237 = vmatprep.subr.mxu0 0.0
    %2238 = vmatpush1.msra.mxu0 %v2143
    %2239 = vmatprep.subr.mxu0 0.0
    %2240 = vmatpush2.msra.mxu0 %v2174
    %2241 = vmatprep.subr.mxu0 0.0
    %2242 = vmatpush2.msra.mxu0 %v2173
    %2243 = vmatprep.subr.mxu0 0.0
    %2244 = vmatpush2.msra.mxu0 %v2172
    %2245 = vmatprep.subr.mxu0 0.0
    %2246 = vmatpush2.msra.mxu0 %v2171
    %2247 = vmatprep.subr.mxu0 0.0
    %2248 = vmatpush2.msra.mxu0 %v2170
    %2249 = vmatprep.subr.mxu0 0.0
    %2250 = vmatpush2.msra.mxu0 %v2169
    %2251 = vmatprep.subr.mxu0 0.0
    %2252 = vmatpush2.msra.mxu0 %v2168
    %2253 = vmatprep.subr.mxu0 0.0
    %2254 = vmatpush2.msra.mxu0 %v2167
    %2255 = vmatprep.subr.mxu0 0.0
    %2256 = vmatpush2.msra.mxu0 %v2166
    %2257 = vmatprep.subr.mxu0 0.0
    %2258 = vmatpush2.msra.mxu0 %v2165
    %2259 = vmatprep.subr.mxu0 0.0
    %2260 = vmatpush2.msra.mxu0 %v2164
    %2261 = vmatprep.subr.mxu0 0.0
    %2262 = vmatpush2.msra.mxu0 %v2163
    %2263 = vmatprep.subr.mxu0 0.0
    %2264 = vmatpush2.msra.mxu0 %v2162
    %2265 = vmatprep.subr.mxu0 0.0
    %2266 = vmatpush2.msra.mxu0 %v2161
    %2267 = vmatprep.subr.mxu0 0.0
    %2268 = vmatpush2.msra.mxu0 %v2160
    %2269 = vmatprep.subr.mxu0 0.0
    %2270 = vmatpush2.msra.mxu0 %v2159
    %2271 = vmatprep.mubr.f32.mxu0 %v2128
    %2272 = vmatmul.mubr.f32.gmra.mxu0 %v2127
    %v2273 = vpop.f32.mrf.mxu0
    %v2274 = vadd.f32 0.0, %v2273
    %v2275 = vpop.f32.mrf.mxu0
    %2276 = vmatprep.mubr.f32.mxu0 %v2132
    %2277 = vmatmul.mubr.f32.gmra.mxu0 %v2131
    %v2278 = vpop.f32.mrf.mxu0
    %v2279 = vadd.f32 0.0, %v2278
    %v2280 = vpop.f32.mrf.mxu0
    %2281 = vmatprep.mubr.f32.mxu0 %v2136
    %2282 = vmatmul.mubr.f32.gmra.mxu0 %v2135
    %v2283 = vpop.f32.mrf.mxu0
    %v2284 = vadd.f32 0.0, %v2283
    %v2285 = vpop.f32.mrf.mxu0
    %2286 = vmatprep.mubr.f32.mxu0 %v2140
    %2287 = vmatmul.mubr.f32.gmra.mxu0 %v2139
    %v2288 = vpop.f32.mrf.mxu0
    %v2289 = vadd.f32 0.0, %v2288
    %v2290 = vpop.f32.mrf.mxu0
    %2291 = vdwg.mxu0
    %2292 = vmatprep.subr.mxu0 0.0
    %2293 = vmatpush1.msra.mxu0 %v2190
    %2294 = vmatprep.subr.mxu0 0.0
    %2295 = vmatpush1.msra.mxu0 %v2189
    %2296 = vmatprep.subr.mxu0 0.0
    %2297 = vmatpush1.msra.mxu0 %v2188
    %2298 = vmatprep.subr.mxu0 0.0
    %2299 = vmatpush1.msra.mxu0 %v2187
    %2300 = vmatprep.subr.mxu0 0.0
    %2301 = vmatpush1.msra.mxu0 %v2186
    %2302 = vmatprep.subr.mxu0 0.0
    %2303 = vmatpush1.msra.mxu0 %v2185
    %2304 = vmatprep.subr.mxu0 0.0
    %2305 = vmatpush1.msra.mxu0 %v2184
    %2306 = vmatprep.subr.mxu0 0.0
    %2307 = vmatpush1.msra.mxu0 %v2183
    %2308 = vmatprep.subr.mxu0 0.0
    %2309 = vmatpush1.msra.mxu0 %v2182
    %2310 = vmatprep.subr.mxu0 0.0
    %2311 = vmatpush1.msra.mxu0 %v2181
    %2312 = vmatprep.subr.mxu0 0.0
    %2313 = vmatpush1.msra.mxu0 %v2180
    %2314 = vmatprep.subr.mxu0 0.0
    %2315 = vmatpush1.msra.mxu0 %v2179
    %2316 = vmatprep.subr.mxu0 0.0
    %2317 = vmatpush1.msra.mxu0 %v2178
    %2318 = vmatprep.subr.mxu0 0.0
    %2319 = vmatpush1.msra.mxu0 %v2177
    %2320 = vmatprep.subr.mxu0 0.0
    %2321 = vmatpush1.msra.mxu0 %v2176
    %2322 = vmatprep.subr.mxu0 0.0
    %2323 = vmatpush1.msra.mxu0 %v2175
    %2324 = vmatprep.subr.mxu0 0.0
    %2325 = vmatpush2.msra.mxu0 %v2206
    %2326 = vmatprep.subr.mxu0 0.0
    %2327 = vmatpush2.msra.mxu0 %v2205
    %2328 = vmatprep.subr.mxu0 0.0
    %2329 = vmatpush2.msra.mxu0 %v2204
    %2330 = vmatprep.subr.mxu0 0.0
    %2331 = vmatpush2.msra.mxu0 %v2203
    %2332 = vmatprep.subr.mxu0 0.0
    %2333 = vmatpush2.msra.mxu0 %v2202
    %2334 = vmatprep.subr.mxu0 0.0
    %2335 = vmatpush2.msra.mxu0 %v2201
    %2336 = vmatprep.subr.mxu0 0.0
    %2337 = vmatpush2.msra.mxu0 %v2200
    %2338 = vmatprep.subr.mxu0 0.0
    %2339 = vmatpush2.msra.mxu0 %v2199
    %2340 = vmatprep.subr.mxu0 0.0
    %2341 = vmatpush2.msra.mxu0 %v2198
    %2342 = vmatprep.subr.mxu0 0.0
    %2343 = vmatpush2.msra.mxu0 %v2197
    %2344 = vmatprep.subr.mxu0 0.0
    %2345 = vmatpush2.msra.mxu0 %v2196
    %2346 = vmatprep.subr.mxu0 0.0
    %2347 = vmatpush2.msra.mxu0 %v2195
    %2348 = vmatprep.subr.mxu0 0.0
    %2349 = vmatpush2.msra.mxu0 %v2194
    %2350 = vmatprep.subr.mxu0 0.0
    %2351 = vmatpush2.msra.mxu0 %v2193
    %2352 = vmatprep.subr.mxu0 0.0
    %2353 = vmatpush2.msra.mxu0 %v2192
    %2354 = vmatprep.subr.mxu0 0.0
    %2355 = vmatpush2.msra.mxu0 %v2191
    %2356 = vmatprep.mubr.f32.mxu0 %v2130
    %2357 = vmatmul.mubr.f32.gmra.mxu0 %v2129
    %v2358 = vpop.f32.mrf.mxu0
    %v2359 = vadd.f32 %v2274, %v2358
    %v2360 = vpop.f32.mrf.mxu0
    %2361 = vmatprep.mubr.f32.mxu0 %v2134
    %2362 = vmatmul.mubr.f32.gmra.mxu0 %v2133
    %v2363 = vpop.f32.mrf.mxu0
    %v2364 = vadd.f32 %v2279, %v2363
    %v2365 = vpop.f32.mrf.mxu0
    %2366 = vmatprep.mubr.f32.mxu0 %v2138
    %2367 = vmatmul.mubr.f32.gmra.mxu0 %v2137
    %v2368 = vpop.f32.mrf.mxu0
    %v2369 = vadd.f32 %v2284, %v2368
    %v2370 = vpop.f32.mrf.mxu0
    %2371 = vmatprep.mubr.f32.mxu0 %v2142
    %2372 = vmatmul.mubr.f32.gmra.mxu0 %v2141
    %v2373 = vpop.f32.mrf.mxu0
    %v2374 = vadd.f32 %v2289, %v2373
    %v2375 = vpop.f32.mrf.mxu0
    %2376 = vdwg.mxu0
    %2377 = vst.msk [vmem:[#allocation2 + $0xa0] sm:$0xff] %vm201, %v2359
    %2378 = vst.msk [vmem:[#allocation2 + $0xa8] sm:$0xff] %vm201, %v2364
    %2379 = vst.msk [vmem:[#allocation2 + $0xb0] sm:$0xff] %vm201, %v2369
    %2380 = vst.msk [vmem:[#allocation2 + $0xb8] sm:$0xff] %vm201, %v2374
    %v2381 = vld [vmem:[%s0] sm:$0xff]
    %v2382 = vld [vmem:[%s0 + $0x8] sm:$0xff]
    %v2383 = vld [vmem:[%s0 + $0x10] sm:$0xff]
    %v2384 = vld [vmem:[%s0 + $0x18] sm:$0xff]
    %v2385 = vld [vmem:[%s0 + $0x20] sm:$0xff]
    %v2386 = vld [vmem:[%s0 + $0x28] sm:$0xff]
    %v2387 = vld [vmem:[%s0 + $0x30] sm:$0xff]
    %v2388 = vld [vmem:[%s0 + $0x38] sm:$0xff]
    %v2389 = vld [vmem:[%s0 + $0x40] sm:$0xff]
    %v2390 = vld [vmem:[%s0 + $0x48] sm:$0xff]
    %v2391 = vld [vmem:[%s0 + $0x50] sm:$0xff]
    %v2392 = vld [vmem:[%s0 + $0x58] sm:$0xff]
    %v2393 = vld [vmem:[%s0 + $0x60] sm:$0xff]
    %v2394 = vld [vmem:[%s0 + $0x68] sm:$0xff]
    %v2395 = vld [vmem:[%s0 + $0x70] sm:$0xff]
    %v2396 = vld [vmem:[%s0 + $0x78] sm:$0xff]
    %v2397 = vlaneseq
    %v2398 = vshrl.u32 %v2397, 7
    %v2399 = vsub.s32 6, %v2398
    %v2400 = vrot.slane %v347, %v2399
    %v2401 = vlaneseq
    %v2402 = vshrl.u32 %v2401, 7
    %v2403 = vsub.s32 6, %v2402
    %v2404 = vrot.slane %v348, %v2403
    %v2405 = vlaneseq
    %v2406 = vshrl.u32 %v2405, 7
    %v2407 = vsub.s32 6, %v2406
    %v2408 = vrot.slane %v349, %v2407
    %v2409 = vlaneseq
    %v2410 = vshrl.u32 %v2409, 7
    %v2411 = vsub.s32 6, %v2410
    %v2412 = vrot.slane %v350, %v2411
    %v2413 = vmul.f32 %v2381, %v2400
    %v2414 = vmul.f32 %v2382, %v2404
    %v2415 = vmul.f32 %v2383, %v2408
    %v2416 = vmul.f32 %v2384, %v2412
    %v2417 = vmul.f32 %v2385, %v2400
    %v2418 = vmul.f32 %v2386, %v2404
    %v2419 = vmul.f32 %v2387, %v2408
    %v2420 = vmul.f32 %v2388, %v2412
    %v2421 = vmul.f32 %v2389, %v2400
    %v2422 = vmul.f32 %v2390, %v2404
    %v2423 = vmul.f32 %v2391, %v2408
    %v2424 = vmul.f32 %v2392, %v2412
    %v2425 = vmul.f32 %v2393, %v2400
    %v2426 = vmul.f32 %v2394, %v2404
    %v2427 = vmul.f32 %v2395, %v2408
    %v2428 = vmul.f32 %v2396, %v2412
    %v2429 = vld [vmem:[%s7] sm:$0xff]
    %v2430 = vld [vmem:[%s7 + $0x8] sm:$0xff]
    %v2431 = vld [vmem:[%s7 + $0x10] sm:$0xff]
    %v2432 = vld [vmem:[%s7 + $0x18] sm:$0xff]
    %v2433 = vld [vmem:[%s7 + $0x20] sm:$0xff]
    %v2434 = vld [vmem:[%s7 + $0x28] sm:$0xff]
    %v2435 = vld [vmem:[%s7 + $0x30] sm:$0xff]
    %v2436 = vld [vmem:[%s7 + $0x38] sm:$0xff]
    %v2437 = vld [vmem:[%s7 + $0x40] sm:$0xff]
    %v2438 = vld [vmem:[%s7 + $0x48] sm:$0xff]
    %v2439 = vld [vmem:[%s7 + $0x50] sm:$0xff]
    %v2440 = vld [vmem:[%s7 + $0x58] sm:$0xff]
    %v2441 = vld [vmem:[%s7 + $0x60] sm:$0xff]
    %v2442 = vld [vmem:[%s7 + $0x68] sm:$0xff]
    %v2443 = vld [vmem:[%s7 + $0x70] sm:$0xff]
    %v2444 = vld [vmem:[%s7 + $0x78] sm:$0xff]
    %v2445 = vld [vmem:[%s7 + $0x80] sm:$0xff]
    %v2446 = vld [vmem:[%s7 + $0x88] sm:$0xff]
    %v2447 = vld [vmem:[%s7 + $0x90] sm:$0xff]
    %v2448 = vld [vmem:[%s7 + $0x98] sm:$0xff]
    %v2449 = vld [vmem:[%s7 + $0xa0] sm:$0xff]
    %v2450 = vld [vmem:[%s7 + $0xa8] sm:$0xff]
    %v2451 = vld [vmem:[%s7 + $0xb0] sm:$0xff]
    %v2452 = vld [vmem:[%s7 + $0xb8] sm:$0xff]
    %v2453 = vld [vmem:[%s7 + $0xc0] sm:$0xff]
    %v2454 = vld [vmem:[%s7 + $0xc8] sm:$0xff]
    %v2455 = vld [vmem:[%s7 + $0xd0] sm:$0xff]
    %v2456 = vld [vmem:[%s7 + $0xd8] sm:$0xff]
    %v2457 = vld [vmem:[%s7 + $0xe0] sm:$0xff]
    %v2458 = vld [vmem:[%s7 + $0xe8] sm:$0xff]
    %v2459 = vld [vmem:[%s7 + $0xf0] sm:$0xff]
    %v2460 = vld [vmem:[%s7 + $0xf8] sm:$0xff]
    %v2461 = vld [vmem:[%s7 + $0x100] sm:$0xff]
    %v2462 = vld [vmem:[%s7 + $0x108] sm:$0xff]
    %v2463 = vld [vmem:[%s7 + $0x110] sm:$0xff]
    %v2464 = vld [vmem:[%s7 + $0x118] sm:$0xff]
    %v2465 = vld [vmem:[%s7 + $0x120] sm:$0xff]
    %v2466 = vld [vmem:[%s7 + $0x128] sm:$0xff]
    %v2467 = vld [vmem:[%s7 + $0x130] sm:$0xff]
    %v2468 = vld [vmem:[%s7 + $0x138] sm:$0xff]
    %v2469 = vld [vmem:[%s7 + $0x140] sm:$0xff]
    %v2470 = vld [vmem:[%s7 + $0x148] sm:$0xff]
    %v2471 = vld [vmem:[%s7 + $0x150] sm:$0xff]
    %v2472 = vld [vmem:[%s7 + $0x158] sm:$0xff]
    %v2473 = vld [vmem:[%s7 + $0x160] sm:$0xff]
    %v2474 = vld [vmem:[%s7 + $0x168] sm:$0xff]
    %v2475 = vld [vmem:[%s7 + $0x170] sm:$0xff]
    %v2476 = vld [vmem:[%s7 + $0x178] sm:$0xff]
    %v2477 = vld [vmem:[%s7 + $0x180] sm:$0xff]
    %v2478 = vld [vmem:[%s7 + $0x188] sm:$0xff]
    %v2479 = vld [vmem:[%s7 + $0x190] sm:$0xff]
    %v2480 = vld [vmem:[%s7 + $0x198] sm:$0xff]
    %v2481 = vld [vmem:[%s7 + $0x1a0] sm:$0xff]
    %v2482 = vld [vmem:[%s7 + $0x1a8] sm:$0xff]
    %v2483 = vld [vmem:[%s7 + $0x1b0] sm:$0xff]
    %v2484 = vld [vmem:[%s7 + $0x1b8] sm:$0xff]
    %v2485 = vld [vmem:[%s7 + $0x1c0] sm:$0xff]
    %v2486 = vld [vmem:[%s7 + $0x1c8] sm:$0xff]
    %v2487 = vld [vmem:[%s7 + $0x1d0] sm:$0xff]
    %v2488 = vld [vmem:[%s7 + $0x1d8] sm:$0xff]
    %v2489 = vld [vmem:[%s7 + $0x1e0] sm:$0xff]
    %v2490 = vld [vmem:[%s7 + $0x1e8] sm:$0xff]
    %v2491 = vld [vmem:[%s7 + $0x1f0] sm:$0xff]
    %v2492 = vld [vmem:[%s7 + $0x1f8] sm:$0xff]
    %2493 = vmatprep.subr.mxu0 0.0
    %2494 = vmatpush1.msra.mxu0 %v2444
    %2495 = vmatprep.subr.mxu0 0.0
    %2496 = vmatpush1.msra.mxu0 %v2443
    %2497 = vmatprep.subr.mxu0 0.0
    %2498 = vmatpush1.msra.mxu0 %v2442
    %2499 = vmatprep.subr.mxu0 0.0
    %2500 = vmatpush1.msra.mxu0 %v2441
    %2501 = vmatprep.subr.mxu0 0.0
    %2502 = vmatpush1.msra.mxu0 %v2440
    %2503 = vmatprep.subr.mxu0 0.0
    %2504 = vmatpush1.msra.mxu0 %v2439
    %2505 = vmatprep.subr.mxu0 0.0
    %2506 = vmatpush1.msra.mxu0 %v2438
    %2507 = vmatprep.subr.mxu0 0.0
    %2508 = vmatpush1.msra.mxu0 %v2437
    %2509 = vmatprep.subr.mxu0 0.0
    %2510 = vmatpush1.msra.mxu0 %v2436
    %2511 = vmatprep.subr.mxu0 0.0
    %2512 = vmatpush1.msra.mxu0 %v2435
    %2513 = vmatprep.subr.mxu0 0.0
    %2514 = vmatpush1.msra.mxu0 %v2434
    %2515 = vmatprep.subr.mxu0 0.0
    %2516 = vmatpush1.msra.mxu0 %v2433
    %2517 = vmatprep.subr.mxu0 0.0
    %2518 = vmatpush1.msra.mxu0 %v2432
    %2519 = vmatprep.subr.mxu0 0.0
    %2520 = vmatpush1.msra.mxu0 %v2431
    %2521 = vmatprep.subr.mxu0 0.0
    %2522 = vmatpush1.msra.mxu0 %v2430
    %2523 = vmatprep.subr.mxu0 0.0
    %2524 = vmatpush1.msra.mxu0 %v2429
    %2525 = vmatprep.subr.mxu0 0.0
    %2526 = vmatpush2.msra.mxu0 %v2460
    %2527 = vmatprep.subr.mxu0 0.0
    %2528 = vmatpush2.msra.mxu0 %v2459
    %2529 = vmatprep.subr.mxu0 0.0
    %2530 = vmatpush2.msra.mxu0 %v2458
    %2531 = vmatprep.subr.mxu0 0.0
    %2532 = vmatpush2.msra.mxu0 %v2457
    %2533 = vmatprep.subr.mxu0 0.0
    %2534 = vmatpush2.msra.mxu0 %v2456
    %2535 = vmatprep.subr.mxu0 0.0
    %2536 = vmatpush2.msra.mxu0 %v2455
    %2537 = vmatprep.subr.mxu0 0.0
    %2538 = vmatpush2.msra.mxu0 %v2454
    %2539 = vmatprep.subr.mxu0 0.0
    %2540 = vmatpush2.msra.mxu0 %v2453
    %2541 = vmatprep.subr.mxu0 0.0
    %2542 = vmatpush2.msra.mxu0 %v2452
    %2543 = vmatprep.subr.mxu0 0.0
    %2544 = vmatpush2.msra.mxu0 %v2451
    %2545 = vmatprep.subr.mxu0 0.0
    %2546 = vmatpush2.msra.mxu0 %v2450
    %2547 = vmatprep.subr.mxu0 0.0
    %2548 = vmatpush2.msra.mxu0 %v2449
    %2549 = vmatprep.subr.mxu0 0.0
    %2550 = vmatpush2.msra.mxu0 %v2448
    %2551 = vmatprep.subr.mxu0 0.0
    %2552 = vmatpush2.msra.mxu0 %v2447
    %2553 = vmatprep.subr.mxu0 0.0
    %2554 = vmatpush2.msra.mxu0 %v2446
    %2555 = vmatprep.subr.mxu0 0.0
    %2556 = vmatpush2.msra.mxu0 %v2445
    %2557 = vmatprep.mubr.f32.mxu0 %v2414
    %2558 = vmatmul.mubr.f32.gmra.mxu0 %v2413
    %v2559 = vpop.f32.mrf.mxu0
    %v2560 = vadd.f32 0.0, %v2559
    %v2561 = vpop.f32.mrf.mxu0
    %2562 = vmatprep.mubr.f32.mxu0 %v2418
    %2563 = vmatmul.mubr.f32.gmra.mxu0 %v2417
    %v2564 = vpop.f32.mrf.mxu0
    %v2565 = vadd.f32 0.0, %v2564
    %v2566 = vpop.f32.mrf.mxu0
    %2567 = vmatprep.mubr.f32.mxu0 %v2422
    %2568 = vmatmul.mubr.f32.gmra.mxu0 %v2421
    %v2569 = vpop.f32.mrf.mxu0
    %v2570 = vadd.f32 0.0, %v2569
    %v2571 = vpop.f32.mrf.mxu0
    %2572 = vmatprep.mubr.f32.mxu0 %v2426
    %2573 = vmatmul.mubr.f32.gmra.mxu0 %v2425
    %v2574 = vpop.f32.mrf.mxu0
    %v2575 = vadd.f32 0.0, %v2574
    %v2576 = vpop.f32.mrf.mxu0
    %2577 = vdwg.mxu0
    %2578 = vmatprep.subr.mxu0 0.0
    %2579 = vmatpush1.msra.mxu0 %v2476
    %2580 = vmatprep.subr.mxu0 0.0
    %2581 = vmatpush1.msra.mxu0 %v2475
    %2582 = vmatprep.subr.mxu0 0.0
    %2583 = vmatpush1.msra.mxu0 %v2474
    %2584 = vmatprep.subr.mxu0 0.0
    %2585 = vmatpush1.msra.mxu0 %v2473
    %2586 = vmatprep.subr.mxu0 0.0
    %2587 = vmatpush1.msra.mxu0 %v2472
    %2588 = vmatprep.subr.mxu0 0.0
    %2589 = vmatpush1.msra.mxu0 %v2471
    %2590 = vmatprep.subr.mxu0 0.0
    %2591 = vmatpush1.msra.mxu0 %v2470
    %2592 = vmatprep.subr.mxu0 0.0
    %2593 = vmatpush1.msra.mxu0 %v2469
    %2594 = vmatprep.subr.mxu0 0.0
    %2595 = vmatpush1.msra.mxu0 %v2468
    %2596 = vmatprep.subr.mxu0 0.0
    %2597 = vmatpush1.msra.mxu0 %v2467
    %2598 = vmatprep.subr.mxu0 0.0
    %2599 = vmatpush1.msra.mxu0 %v2466
    %2600 = vmatprep.subr.mxu0 0.0
    %2601 = vmatpush1.msra.mxu0 %v2465
    %2602 = vmatprep.subr.mxu0 0.0
    %2603 = vmatpush1.msra.mxu0 %v2464
    %2604 = vmatprep.subr.mxu0 0.0
    %2605 = vmatpush1.msra.mxu0 %v2463
    %2606 = vmatprep.subr.mxu0 0.0
    %2607 = vmatpush1.msra.mxu0 %v2462
    %2608 = vmatprep.subr.mxu0 0.0
    %2609 = vmatpush1.msra.mxu0 %v2461
    %2610 = vmatprep.subr.mxu0 0.0
    %2611 = vmatpush2.msra.mxu0 %v2492
    %2612 = vmatprep.subr.mxu0 0.0
    %2613 = vmatpush2.msra.mxu0 %v2491
    %2614 = vmatprep.subr.mxu0 0.0
    %2615 = vmatpush2.msra.mxu0 %v2490
    %2616 = vmatprep.subr.mxu0 0.0
    %2617 = vmatpush2.msra.mxu0 %v2489
    %2618 = vmatprep.subr.mxu0 0.0
    %2619 = vmatpush2.msra.mxu0 %v2488
    %2620 = vmatprep.subr.mxu0 0.0
    %2621 = vmatpush2.msra.mxu0 %v2487
    %2622 = vmatprep.subr.mxu0 0.0
    %2623 = vmatpush2.msra.mxu0 %v2486
    %2624 = vmatprep.subr.mxu0 0.0
    %2625 = vmatpush2.msra.mxu0 %v2485
    %2626 = vmatprep.subr.mxu0 0.0
    %2627 = vmatpush2.msra.mxu0 %v2484
    %2628 = vmatprep.subr.mxu0 0.0
    %2629 = vmatpush2.msra.mxu0 %v2483
    %2630 = vmatprep.subr.mxu0 0.0
    %2631 = vmatpush2.msra.mxu0 %v2482
    %2632 = vmatprep.subr.mxu0 0.0
    %2633 = vmatpush2.msra.mxu0 %v2481
    %2634 = vmatprep.subr.mxu0 0.0
    %2635 = vmatpush2.msra.mxu0 %v2480
    %2636 = vmatprep.subr.mxu0 0.0
    %2637 = vmatpush2.msra.mxu0 %v2479
    %2638 = vmatprep.subr.mxu0 0.0
    %2639 = vmatpush2.msra.mxu0 %v2478
    %2640 = vmatprep.subr.mxu0 0.0
    %2641 = vmatpush2.msra.mxu0 %v2477
    %2642 = vmatprep.mubr.f32.mxu0 %v2416
    %2643 = vmatmul.mubr.f32.gmra.mxu0 %v2415
    %v2644 = vpop.f32.mrf.mxu0
    %v2645 = vadd.f32 %v2560, %v2644
    %v2646 = vpop.f32.mrf.mxu0
    %2647 = vmatprep.mubr.f32.mxu0 %v2420
    %2648 = vmatmul.mubr.f32.gmra.mxu0 %v2419
    %v2649 = vpop.f32.mrf.mxu0
    %v2650 = vadd.f32 %v2565, %v2649
    %v2651 = vpop.f32.mrf.mxu0
    %2652 = vmatprep.mubr.f32.mxu0 %v2424
    %2653 = vmatmul.mubr.f32.gmra.mxu0 %v2423
    %v2654 = vpop.f32.mrf.mxu0
    %v2655 = vadd.f32 %v2570, %v2654
    %v2656 = vpop.f32.mrf.mxu0
    %2657 = vmatprep.mubr.f32.mxu0 %v2428
    %2658 = vmatmul.mubr.f32.gmra.mxu0 %v2427
    %v2659 = vpop.f32.mrf.mxu0
    %v2660 = vadd.f32 %v2575, %v2659
    %v2661 = vpop.f32.mrf.mxu0
    %2662 = vdwg.mxu0
    %2663 = vst.msk [vmem:[#allocation2 + $0xc0] sm:$0xff] %vm201, %v2645
    %2664 = vst.msk [vmem:[#allocation2 + $0xc8] sm:$0xff] %vm201, %v2650
    %2665 = vst.msk [vmem:[#allocation2 + $0xd0] sm:$0xff] %vm201, %v2655
    %2666 = vst.msk [vmem:[#allocation2 + $0xd8] sm:$0xff] %vm201, %v2660
    %v2667 = vld [vmem:[%s0] sm:$0xff]
    %v2668 = vld [vmem:[%s0 + $0x8] sm:$0xff]
    %v2669 = vld [vmem:[%s0 + $0x10] sm:$0xff]
    %v2670 = vld [vmem:[%s0 + $0x18] sm:$0xff]
    %v2671 = vld [vmem:[%s0 + $0x20] sm:$0xff]
    %v2672 = vld [vmem:[%s0 + $0x28] sm:$0xff]
    %v2673 = vld [vmem:[%s0 + $0x30] sm:$0xff]
    %v2674 = vld [vmem:[%s0 + $0x38] sm:$0xff]
    %v2675 = vld [vmem:[%s0 + $0x40] sm:$0xff]
    %v2676 = vld [vmem:[%s0 + $0x48] sm:$0xff]
    %v2677 = vld [vmem:[%s0 + $0x50] sm:$0xff]
    %v2678 = vld [vmem:[%s0 + $0x58] sm:$0xff]
    %v2679 = vld [vmem:[%s0 + $0x60] sm:$0xff]
    %v2680 = vld [vmem:[%s0 + $0x68] sm:$0xff]
    %v2681 = vld [vmem:[%s0 + $0x70] sm:$0xff]
    %v2682 = vld [vmem:[%s0 + $0x78] sm:$0xff]
    %v2683 = vlaneseq
    %v2684 = vshrl.u32 %v2683, 7
    %v2685 = vsub.s32 7, %v2684
    %v2686 = vrot.slane %v347, %v2685
    %v2687 = vlaneseq
    %v2688 = vshrl.u32 %v2687, 7
    %v2689 = vsub.s32 7, %v2688
    %v2690 = vrot.slane %v348, %v2689
    %v2691 = vlaneseq
    %v2692 = vshrl.u32 %v2691, 7
    %v2693 = vsub.s32 7, %v2692
    %v2694 = vrot.slane %v349, %v2693
    %v2695 = vlaneseq
    %v2696 = vshrl.u32 %v2695, 7
    %v2697 = vsub.s32 7, %v2696
    %v2698 = vrot.slane %v350, %v2697
    %v2699 = vmul.f32 %v2667, %v2686
    %v2700 = vmul.f32 %v2668, %v2690
    %v2701 = vmul.f32 %v2669, %v2694
    %v2702 = vmul.f32 %v2670, %v2698
    %v2703 = vmul.f32 %v2671, %v2686
    %v2704 = vmul.f32 %v2672, %v2690
    %v2705 = vmul.f32 %v2673, %v2694
    %v2706 = vmul.f32 %v2674, %v2698
    %v2707 = vmul.f32 %v2675, %v2686
    %v2708 = vmul.f32 %v2676, %v2690
    %v2709 = vmul.f32 %v2677, %v2694
    %v2710 = vmul.f32 %v2678, %v2698
    %v2711 = vmul.f32 %v2679, %v2686
    %v2712 = vmul.f32 %v2680, %v2690
    %v2713 = vmul.f32 %v2681, %v2694
    %v2714 = vmul.f32 %v2682, %v2698
    %v2715 = vld [vmem:[%s7] sm:$0xff]
    %v2716 = vld [vmem:[%s7 + $0x8] sm:$0xff]
    %v2717 = vld [vmem:[%s7 + $0x10] sm:$0xff]
    %v2718 = vld [vmem:[%s7 + $0x18] sm:$0xff]
    %v2719 = vld [vmem:[%s7 + $0x20] sm:$0xff]
    %v2720 = vld [vmem:[%s7 + $0x28] sm:$0xff]
    %v2721 = vld [vmem:[%s7 + $0x30] sm:$0xff]
    %v2722 = vld [vmem:[%s7 + $0x38] sm:$0xff]
    %v2723 = vld [vmem:[%s7 + $0x40] sm:$0xff]
    %v2724 = vld [vmem:[%s7 + $0x48] sm:$0xff]
    %v2725 = vld [vmem:[%s7 + $0x50] sm:$0xff]
    %v2726 = vld [vmem:[%s7 + $0x58] sm:$0xff]
    %v2727 = vld [vmem:[%s7 + $0x60] sm:$0xff]
    %v2728 = vld [vmem:[%s7 + $0x68] sm:$0xff]
    %v2729 = vld [vmem:[%s7 + $0x70] sm:$0xff]
    %v2730 = vld [vmem:[%s7 + $0x78] sm:$0xff]
    %v2731 = vld [vmem:[%s7 + $0x80] sm:$0xff]
    %v2732 = vld [vmem:[%s7 + $0x88] sm:$0xff]
    %v2733 = vld [vmem:[%s7 + $0x90] sm:$0xff]
    %v2734 = vld [vmem:[%s7 + $0x98] sm:$0xff]
    %v2735 = vld [vmem:[%s7 + $0xa0] sm:$0xff]
    %v2736 = vld [vmem:[%s7 + $0xa8] sm:$0xff]
    %v2737 = vld [vmem:[%s7 + $0xb0] sm:$0xff]
    %v2738 = vld [vmem:[%s7 + $0xb8] sm:$0xff]
    %v2739 = vld [vmem:[%s7 + $0xc0] sm:$0xff]
    %v2740 = vld [vmem:[%s7 + $0xc8] sm:$0xff]
    %v2741 = vld [vmem:[%s7 + $0xd0] sm:$0xff]
    %v2742 = vld [vmem:[%s7 + $0xd8] sm:$0xff]
    %v2743 = vld [vmem:[%s7 + $0xe0] sm:$0xff]
    %v2744 = vld [vmem:[%s7 + $0xe8] sm:$0xff]
    %v2745 = vld [vmem:[%s7 + $0xf0] sm:$0xff]
    %v2746 = vld [vmem:[%s7 + $0xf8] sm:$0xff]
    %v2747 = vld [vmem:[%s7 + $0x100] sm:$0xff]
    %v2748 = vld [vmem:[%s7 + $0x108] sm:$0xff]
    %v2749 = vld [vmem:[%s7 + $0x110] sm:$0xff]
    %v2750 = vld [vmem:[%s7 + $0x118] sm:$0xff]
    %v2751 = vld [vmem:[%s7 + $0x120] sm:$0xff]
    %v2752 = vld [vmem:[%s7 + $0x128] sm:$0xff]
    %v2753 = vld [vmem:[%s7 + $0x130] sm:$0xff]
    %v2754 = vld [vmem:[%s7 + $0x138] sm:$0xff]
    %v2755 = vld [vmem:[%s7 + $0x140] sm:$0xff]
    %v2756 = vld [vmem:[%s7 + $0x148] sm:$0xff]
    %v2757 = vld [vmem:[%s7 + $0x150] sm:$0xff]
    %v2758 = vld [vmem:[%s7 + $0x158] sm:$0xff]
    %v2759 = vld [vmem:[%s7 + $0x160] sm:$0xff]
    %v2760 = vld [vmem:[%s7 + $0x168] sm:$0xff]
    %v2761 = vld [vmem:[%s7 + $0x170] sm:$0xff]
    %v2762 = vld [vmem:[%s7 + $0x178] sm:$0xff]
    %v2763 = vld [vmem:[%s7 + $0x180] sm:$0xff]
    %v2764 = vld [vmem:[%s7 + $0x188] sm:$0xff]
    %v2765 = vld [vmem:[%s7 + $0x190] sm:$0xff]
    %v2766 = vld [vmem:[%s7 + $0x198] sm:$0xff]
    %v2767 = vld [vmem:[%s7 + $0x1a0] sm:$0xff]
    %v2768 = vld [vmem:[%s7 + $0x1a8] sm:$0xff]
    %v2769 = vld [vmem:[%s7 + $0x1b0] sm:$0xff]
    %v2770 = vld [vmem:[%s7 + $0x1b8] sm:$0xff]
    %v2771 = vld [vmem:[%s7 + $0x1c0] sm:$0xff]
    %v2772 = vld [vmem:[%s7 + $0x1c8] sm:$0xff]
    %v2773 = vld [vmem:[%s7 + $0x1d0] sm:$0xff]
    %v2774 = vld [vmem:[%s7 + $0x1d8] sm:$0xff]
    %v2775 = vld [vmem:[%s7 + $0x1e0] sm:$0xff]
    %v2776 = vld [vmem:[%s7 + $0x1e8] sm:$0xff]
    %v2777 = vld [vmem:[%s7 + $0x1f0] sm:$0xff]
    %v2778 = vld [vmem:[%s7 + $0x1f8] sm:$0xff]
    %2779 = vmatprep.subr.mxu0 0.0
    %2780 = vmatpush1.msra.mxu0 %v2730
    %2781 = vmatprep.subr.mxu0 0.0
    %2782 = vmatpush1.msra.mxu0 %v2729
    %2783 = vmatprep.subr.mxu0 0.0
    %2784 = vmatpush1.msra.mxu0 %v2728
    %2785 = vmatprep.subr.mxu0 0.0
    %2786 = vmatpush1.msra.mxu0 %v2727
    %2787 = vmatprep.subr.mxu0 0.0
    %2788 = vmatpush1.msra.mxu0 %v2726
    %2789 = vmatprep.subr.mxu0 0.0
    %2790 = vmatpush1.msra.mxu0 %v2725
    %2791 = vmatprep.subr.mxu0 0.0
    %2792 = vmatpush1.msra.mxu0 %v2724
    %2793 = vmatprep.subr.mxu0 0.0
    %2794 = vmatpush1.msra.mxu0 %v2723
    %2795 = vmatprep.subr.mxu0 0.0
    %2796 = vmatpush1.msra.mxu0 %v2722
    %2797 = vmatprep.subr.mxu0 0.0
    %2798 = vmatpush1.msra.mxu0 %v2721
    %2799 = vmatprep.subr.mxu0 0.0
    %2800 = vmatpush1.msra.mxu0 %v2720
    %2801 = vmatprep.subr.mxu0 0.0
    %2802 = vmatpush1.msra.mxu0 %v2719
    %2803 = vmatprep.subr.mxu0 0.0
    %2804 = vmatpush1.msra.mxu0 %v2718
    %2805 = vmatprep.subr.mxu0 0.0
    %2806 = vmatpush1.msra.mxu0 %v2717
    %2807 = vmatprep.subr.mxu0 0.0
    %2808 = vmatpush1.msra.mxu0 %v2716
    %2809 = vmatprep.subr.mxu0 0.0
    %2810 = vmatpush1.msra.mxu0 %v2715
    %2811 = vmatprep.subr.mxu0 0.0
    %2812 = vmatpush2.msra.mxu0 %v2746
    %2813 = vmatprep.subr.mxu0 0.0
    %2814 = vmatpush2.msra.mxu0 %v2745
    %2815 = vmatprep.subr.mxu0 0.0
    %2816 = vmatpush2.msra.mxu0 %v2744
    %2817 = vmatprep.subr.mxu0 0.0
    %2818 = vmatpush2.msra.mxu0 %v2743
    %2819 = vmatprep.subr.mxu0 0.0
    %2820 = vmatpush2.msra.mxu0 %v2742
    %2821 = vmatprep.subr.mxu0 0.0
    %2822 = vmatpush2.msra.mxu0 %v2741
    %2823 = vmatprep.subr.mxu0 0.0
    %2824 = vmatpush2.msra.mxu0 %v2740
    %2825 = vmatprep.subr.mxu0 0.0
    %2826 = vmatpush2.msra.mxu0 %v2739
    %2827 = vmatprep.subr.mxu0 0.0
    %2828 = vmatpush2.msra.mxu0 %v2738
    %2829 = vmatprep.subr.mxu0 0.0
    %2830 = vmatpush2.msra.mxu0 %v2737
    %2831 = vmatprep.subr.mxu0 0.0
    %2832 = vmatpush2.msra.mxu0 %v2736
    %2833 = vmatprep.subr.mxu0 0.0
    %2834 = vmatpush2.msra.mxu0 %v2735
    %2835 = vmatprep.subr.mxu0 0.0
    %2836 = vmatpush2.msra.mxu0 %v2734
    %2837 = vmatprep.subr.mxu0 0.0
    %2838 = vmatpush2.msra.mxu0 %v2733
    %2839 = vmatprep.subr.mxu0 0.0
    %2840 = vmatpush2.msra.mxu0 %v2732
    %2841 = vmatprep.subr.mxu0 0.0
    %2842 = vmatpush2.msra.mxu0 %v2731
    %2843 = vmatprep.mubr.f32.mxu0 %v2700
    %2844 = vmatmul.mubr.f32.gmra.mxu0 %v2699
    %v2845 = vpop.f32.mrf.mxu0
    %v2846 = vadd.f32 0.0, %v2845
    %v2847 = vpop.f32.mrf.mxu0
    %2848 = vmatprep.mubr.f32.mxu0 %v2704
    %2849 = vmatmul.mubr.f32.gmra.mxu0 %v2703
    %v2850 = vpop.f32.mrf.mxu0
    %v2851 = vadd.f32 0.0, %v2850
    %v2852 = vpop.f32.mrf.mxu0
    %2853 = vmatprep.mubr.f32.mxu0 %v2708
    %2854 = vmatmul.mubr.f32.gmra.mxu0 %v2707
    %v2855 = vpop.f32.mrf.mxu0
    %v2856 = vadd.f32 0.0, %v2855
    %v2857 = vpop.f32.mrf.mxu0
    %2858 = vmatprep.mubr.f32.mxu0 %v2712
    %2859 = vmatmul.mubr.f32.gmra.mxu0 %v2711
    %v2860 = vpop.f32.mrf.mxu0
    %v2861 = vadd.f32 0.0, %v2860
    %v2862 = vpop.f32.mrf.mxu0
    %2863 = vdwg.mxu0
    %2864 = vmatprep.subr.mxu0 0.0
    %2865 = vmatpush1.msra.mxu0 %v2762
    %2866 = vmatprep.subr.mxu0 0.0
    %2867 = vmatpush1.msra.mxu0 %v2761
    %2868 = vmatprep.subr.mxu0 0.0
    %2869 = vmatpush1.msra.mxu0 %v2760
    %2870 = vmatprep.subr.mxu0 0.0
    %2871 = vmatpush1.msra.mxu0 %v2759
    %2872 = vmatprep.subr.mxu0 0.0
    %2873 = vmatpush1.msra.mxu0 %v2758
    %2874 = vmatprep.subr.mxu0 0.0
    %2875 = vmatpush1.msra.mxu0 %v2757
    %2876 = vmatprep.subr.mxu0 0.0
    %2877 = vmatpush1.msra.mxu0 %v2756
    %2878 = vmatprep.subr.mxu0 0.0
    %2879 = vmatpush1.msra.mxu0 %v2755
    %2880 = vmatprep.subr.mxu0 0.0
    %2881 = vmatpush1.msra.mxu0 %v2754
    %2882 = vmatprep.subr.mxu0 0.0
    %2883 = vmatpush1.msra.mxu0 %v2753
    %2884 = vmatprep.subr.mxu0 0.0
    %2885 = vmatpush1.msra.mxu0 %v2752
    %2886 = vmatprep.subr.mxu0 0.0
    %2887 = vmatpush1.msra.mxu0 %v2751
    %2888 = vmatprep.subr.mxu0 0.0
    %2889 = vmatpush1.msra.mxu0 %v2750
    %2890 = vmatprep.subr.mxu0 0.0
    %2891 = vmatpush1.msra.mxu0 %v2749
    %2892 = vmatprep.subr.mxu0 0.0
    %2893 = vmatpush1.msra.mxu0 %v2748
    %2894 = vmatprep.subr.mxu0 0.0
    %2895 = vmatpush1.msra.mxu0 %v2747
    %2896 = vmatprep.subr.mxu0 0.0
    %2897 = vmatpush2.msra.mxu0 %v2778
    %2898 = vmatprep.subr.mxu0 0.0
    %2899 = vmatpush2.msra.mxu0 %v2777
    %2900 = vmatprep.subr.mxu0 0.0
    %2901 = vmatpush2.msra.mxu0 %v2776
    %2902 = vmatprep.subr.mxu0 0.0
    %2903 = vmatpush2.msra.mxu0 %v2775
    %2904 = vmatprep.subr.mxu0 0.0
    %2905 = vmatpush2.msra.mxu0 %v2774
    %2906 = vmatprep.subr.mxu0 0.0
    %2907 = vmatpush2.msra.mxu0 %v2773
    %2908 = vmatprep.subr.mxu0 0.0
    %2909 = vmatpush2.msra.mxu0 %v2772
    %2910 = vmatprep.subr.mxu0 0.0
    %2911 = vmatpush2.msra.mxu0 %v2771
    %2912 = vmatprep.subr.mxu0 0.0
    %2913 = vmatpush2.msra.mxu0 %v2770
    %2914 = vmatprep.subr.mxu0 0.0
    %2915 = vmatpush2.msra.mxu0 %v2769
    %2916 = vmatprep.subr.mxu0 0.0
    %2917 = vmatpush2.msra.mxu0 %v2768
    %2918 = vmatprep.subr.mxu0 0.0
    %2919 = vmatpush2.msra.mxu0 %v2767
    %2920 = vmatprep.subr.mxu0 0.0
    %2921 = vmatpush2.msra.mxu0 %v2766
    %2922 = vmatprep.subr.mxu0 0.0
    %2923 = vmatpush2.msra.mxu0 %v2765
    %2924 = vmatprep.subr.mxu0 0.0
    %2925 = vmatpush2.msra.mxu0 %v2764
    %2926 = vmatprep.subr.mxu0 0.0
    %2927 = vmatpush2.msra.mxu0 %v2763
    %2928 = vmatprep.mubr.f32.mxu0 %v2702
    %2929 = vmatmul.mubr.f32.gmra.mxu0 %v2701
    %v2930 = vpop.f32.mrf.mxu0
    %v2931 = vadd.f32 %v2846, %v2930
    %v2932 = vpop.f32.mrf.mxu0
    %2933 = vmatprep.mubr.f32.mxu0 %v2706
    %2934 = vmatmul.mubr.f32.gmra.mxu0 %v2705
    %v2935 = vpop.f32.mrf.mxu0
    %v2936 = vadd.f32 %v2851, %v2935
    %v2937 = vpop.f32.mrf.mxu0
    %2938 = vmatprep.mubr.f32.mxu0 %v2710
    %2939 = vmatmul.mubr.f32.gmra.mxu0 %v2709
    %v2940 = vpop.f32.mrf.mxu0
    %v2941 = vadd.f32 %v2856, %v2940
    %v2942 = vpop.f32.mrf.mxu0
    %2943 = vmatprep.mubr.f32.mxu0 %v2714
    %2944 = vmatmul.mubr.f32.gmra.mxu0 %v2713
    %v2945 = vpop.f32.mrf.mxu0
    %v2946 = vadd.f32 %v2861, %v2945
    %v2947 = vpop.f32.mrf.mxu0
    %2948 = vdwg.mxu0
    %2949 = vst.msk [vmem:[#allocation2 + $0xe0] sm:$0xff] %vm201, %v2931
    %2950 = vst.msk [vmem:[#allocation2 + $0xe8] sm:$0xff] %vm201, %v2936
    %2951 = vst.msk [vmem:[#allocation2 + $0xf0] sm:$0xff] %vm201, %v2941
    %2952 = vst.msk [vmem:[#allocation2 + $0xf8] sm:$0xff] %vm201, %v2946
    %v2953 = vld [vmem:[%s8] sm:$0x1]
    %v2954 = vld [vmem:[%s8 + $0x1] sm:$0x1]
    %v2955 = vld [vmem:[#allocation2 + $0xe0] sm:$0xff]
    %v2956 = vld [vmem:[#allocation2 + $0xe8] sm:$0xff]
    %v2957 = vld [vmem:[#allocation2 + $0xf0] sm:$0xff]
    %v2958 = vld [vmem:[#allocation2 + $0xf8] sm:$0xff]
    %v2960 = vrot.slane %v578, 7
    %v2963 = vsel %vm201, %v2953, 0
    %2965 = vmatprep.subr.mxu0 0.0
    %2966 = vmatpush1.msra.mxu0 0.0
    %2967 = vmatprep.subr.mxu0 0.0
    %2968 = vmatpush1.msra.mxu0 0.0
    %2969 = vmatprep.subr.mxu0 0.0
    %2970 = vmatpush1.msra.mxu0 0.0
    %2971 = vmatprep.subr.mxu0 0.0
    %2972 = vmatpush1.msra.mxu0 0.0
    %2973 = vmatprep.subr.mxu0 0.0
    %2974 = vmatpush1.msra.mxu0 0.0
    %2975 = vmatprep.subr.mxu0 0.0
    %2976 = vmatpush1.msra.mxu0 0.0
    %2977 = vmatprep.subr.mxu0 0.0
    %2978 = vmatpush1.msra.mxu0 0.0
    %2979 = vmatprep.subr.mxu0 0.0
    %2980 = vmatpush1.msra.mxu0 0.0
    %2981 = vmatprep.subr.mxu0 0.0
    %2982 = vmatpush1.msra.mxu0 0.0
    %2983 = vmatprep.subr.mxu0 0.0
    %2984 = vmatpush1.msra.mxu0 0.0
    %2985 = vmatprep.subr.mxu0 0.0
    %2986 = vmatpush1.msra.mxu0 0.0
    %2987 = vmatprep.subr.mxu0 0.0
    %2988 = vmatpush1.msra.mxu0 0.0
    %2989 = vmatprep.subr.mxu0 0.0
    %2990 = vmatpush1.msra.mxu0 %v2958
    %2991 = vmatprep.subr.mxu0 0.0
    %2992 = vmatpush1.msra.mxu0 %v2957
    %2993 = vmatprep.subr.mxu0 0.0
    %2994 = vmatpush1.msra.mxu0 %v2956
    %2995 = vmatprep.subr.mxu0 0.0
    %2996 = vmatpush1.msra.mxu0 %v2955
    %2997 = vmatprep.subr.mxu0 0.0
    %2998 = vmatpush2.msra.mxu0 0.0
    %2999 = vmatprep.subr.mxu0 0.0
    %3000 = vmatpush2.msra.mxu0 0.0
    %3001 = vmatprep.subr.mxu0 0.0
    %3002 = vmatpush2.msra.mxu0 0.0
    %3003 = vmatprep.subr.mxu0 0.0
    %3004 = vmatpush2.msra.mxu0 0.0
    %3005 = vmatprep.subr.mxu0 0.0
    %3006 = vmatpush2.msra.mxu0 0.0
    %3007 = vmatprep.subr.mxu0 0.0
    %3008 = vmatpush2.msra.mxu0 0.0
    %3009 = vmatprep.subr.mxu0 0.0
    %3010 = vmatpush2.msra.mxu0 0.0
    %3011 = vmatprep.subr.mxu0 0.0
    %3012 = vmatpush2.msra.mxu0 0.0
    %3013 = vmatprep.subr.mxu0 0.0
    %3014 = vmatpush2.msra.mxu0 0.0
    %3015 = vmatprep.subr.mxu0 0.0
    %3016 = vmatpush2.msra.mxu0 0.0
    %3017 = vmatprep.subr.mxu0 0.0
    %3018 = vmatpush2.msra.mxu0 0.0
    %3019 = vmatprep.subr.mxu0 0.0
    %3020 = vmatpush2.msra.mxu0 0.0
    %3021 = vmatprep.subr.mxu0 0.0
    %3022 = vmatpush2.msra.mxu0 0.0
    %3023 = vmatprep.subr.mxu0 0.0
    %3024 = vmatpush2.msra.mxu0 0.0
    %3025 = vmatprep.subr.mxu0 0.0
    %3026 = vmatpush2.msra.mxu0 0.0
    %3027 = vmatprep.subr.mxu0 0.0
    %3028 = vmatpush2.msra.mxu0 0.0
    %3029 = vmatprep.mubr.f32.mxu0 0.0
    %3030 = vmatmul.mubr.f32.gmra.mxu0 %v2963
    %v3031 = vpop.f32.mrf.mxu0
    %v3032 = vadd.f32 %v2960, %v3031
    %v3033 = vpop.f32.mrf.mxu0
    %3034 = vdwg.mxu0
    %v3036 = vrot.slane %v726, 7
    %v3039 = vsel %vm201, %v2954, 0
    %3041 = vmatprep.subr.mxu0 0.0
    %3042 = vmatpush1.msra.mxu0 0.0
    %3043 = vmatprep.subr.mxu0 0.0
    %3044 = vmatpush1.msra.mxu0 0.0
    %3045 = vmatprep.subr.mxu0 0.0
    %3046 = vmatpush1.msra.mxu0 0.0
    %3047 = vmatprep.subr.mxu0 0.0
    %3048 = vmatpush1.msra.mxu0 0.0
    %3049 = vmatprep.subr.mxu0 0.0
    %3050 = vmatpush1.msra.mxu0 0.0
    %3051 = vmatprep.subr.mxu0 0.0
    %3052 = vmatpush1.msra.mxu0 0.0
    %3053 = vmatprep.subr.mxu0 0.0
    %3054 = vmatpush1.msra.mxu0 0.0
    %3055 = vmatprep.subr.mxu0 0.0
    %3056 = vmatpush1.msra.mxu0 0.0
    %3057 = vmatprep.subr.mxu0 0.0
    %3058 = vmatpush1.msra.mxu0 0.0
    %3059 = vmatprep.subr.mxu0 0.0
    %3060 = vmatpush1.msra.mxu0 0.0
    %3061 = vmatprep.subr.mxu0 0.0
    %3062 = vmatpush1.msra.mxu0 0.0
    %3063 = vmatprep.subr.mxu0 0.0
    %3064 = vmatpush1.msra.mxu0 0.0
    %3065 = vmatprep.subr.mxu0 0.0
    %3066 = vmatpush1.msra.mxu0 %v2958
    %3067 = vmatprep.subr.mxu0 0.0
    %3068 = vmatpush1.msra.mxu0 %v2957
    %3069 = vmatprep.subr.mxu0 0.0
    %3070 = vmatpush1.msra.mxu0 %v2956
    %3071 = vmatprep.subr.mxu0 0.0
    %3072 = vmatpush1.msra.mxu0 %v2955
    %3073 = vmatprep.subr.mxu0 0.0
    %3074 = vmatpush2.msra.mxu0 0.0
    %3075 = vmatprep.subr.mxu0 0.0
    %3076 = vmatpush2.msra.mxu0 0.0
    %3077 = vmatprep.subr.mxu0 0.0
    %3078 = vmatpush2.msra.mxu0 0.0
    %3079 = vmatprep.subr.mxu0 0.0
    %3080 = vmatpush2.msra.mxu0 0.0
    %3081 = vmatprep.subr.mxu0 0.0
    %3082 = vmatpush2.msra.mxu0 0.0
    %3083 = vmatprep.subr.mxu0 0.0
    %3084 = vmatpush2.msra.mxu0 0.0
    %3085 = vmatprep.subr.mxu0 0.0
    %3086 = vmatpush2.msra.mxu0 0.0
    %3087 = vmatprep.subr.mxu0 0.0
    %3088 = vmatpush2.msra.mxu0 0.0
    %3089 = vmatprep.subr.mxu0 0.0
    %3090 = vmatpush2.msra.mxu0 0.0
    %3091 = vmatprep.subr.mxu0 0.0
    %3092 = vmatpush2.msra.mxu0 0.0
    %3093 = vmatprep.subr.mxu0 0.0
    %3094 = vmatpush2.msra.mxu0 0.0
    %3095 = vmatprep.subr.mxu0 0.0
    %3096 = vmatpush2.msra.mxu0 0.0
    %3097 = vmatprep.subr.mxu0 0.0
    %3098 = vmatpush2.msra.mxu0 0.0
    %3099 = vmatprep.subr.mxu0 0.0
    %3100 = vmatpush2.msra.mxu0 0.0
    %3101 = vmatprep.subr.mxu0 0.0
    %3102 = vmatpush2.msra.mxu0 0.0
    %3103 = vmatprep.subr.mxu0 0.0
    %3104 = vmatpush2.msra.mxu0 0.0
    %3105 = vmatprep.mubr.f32.mxu0 0.0
    %3106 = vmatmul.mubr.f32.gmra.mxu0 %v3039
    %v3107 = vpop.f32.mrf.mxu0
    %v3108 = vadd.f32 %v3036, %v3107
    %v3109 = vpop.f32.mrf.mxu0
    %3110 = vdwg.mxu0
    %v3111 = vld [vmem:[#allocation2 + $0xc0] sm:$0xff]
    %v3112 = vld [vmem:[#allocation2 + $0xc8] sm:$0xff]
    %v3113 = vld [vmem:[#allocation2 + $0xd0] sm:$0xff]
    %v3114 = vld [vmem:[#allocation2 + $0xd8] sm:$0xff]
    %v3115 = vrot.slane %v578, 6
    %v3118 = vsel %vm201, %v3032, 0
    %3120 = vmatprep.subr.mxu0 0.0
    %3121 = vmatpush1.msra.mxu0 0.0
    %3122 = vmatprep.subr.mxu0 0.0
    %3123 = vmatpush1.msra.mxu0 0.0
    %3124 = vmatprep.subr.mxu0 0.0
    %3125 = vmatpush1.msra.mxu0 0.0
    %3126 = vmatprep.subr.mxu0 0.0
    %3127 = vmatpush1.msra.mxu0 0.0
    %3128 = vmatprep.subr.mxu0 0.0
    %3129 = vmatpush1.msra.mxu0 0.0
    %3130 = vmatprep.subr.mxu0 0.0
    %3131 = vmatpush1.msra.mxu0 0.0
    %3132 = vmatprep.subr.mxu0 0.0
    %3133 = vmatpush1.msra.mxu0 0.0
    %3134 = vmatprep.subr.mxu0 0.0
    %3135 = vmatpush1.msra.mxu0 0.0
    %3136 = vmatprep.subr.mxu0 0.0
    %3137 = vmatpush1.msra.mxu0 0.0
    %3138 = vmatprep.subr.mxu0 0.0
    %3139 = vmatpush1.msra.mxu0 0.0
    %3140 = vmatprep.subr.mxu0 0.0
    %3141 = vmatpush1.msra.mxu0 0.0
    %3142 = vmatprep.subr.mxu0 0.0
    %3143 = vmatpush1.msra.mxu0 0.0
    %3144 = vmatprep.subr.mxu0 0.0
    %3145 = vmatpush1.msra.mxu0 %v3114
    %3146 = vmatprep.subr.mxu0 0.0
    %3147 = vmatpush1.msra.mxu0 %v3113
    %3148 = vmatprep.subr.mxu0 0.0
    %3149 = vmatpush1.msra.mxu0 %v3112
    %3150 = vmatprep.subr.mxu0 0.0
    %3151 = vmatpush1.msra.mxu0 %v3111
    %3152 = vmatprep.subr.mxu0 0.0
    %3153 = vmatpush2.msra.mxu0 0.0
    %3154 = vmatprep.subr.mxu0 0.0
    %3155 = vmatpush2.msra.mxu0 0.0
    %3156 = vmatprep.subr.mxu0 0.0
    %3157 = vmatpush2.msra.mxu0 0.0
    %3158 = vmatprep.subr.mxu0 0.0
    %3159 = vmatpush2.msra.mxu0 0.0
    %3160 = vmatprep.subr.mxu0 0.0
    %3161 = vmatpush2.msra.mxu0 0.0
    %3162 = vmatprep.subr.mxu0 0.0
    %3163 = vmatpush2.msra.mxu0 0.0
    %3164 = vmatprep.subr.mxu0 0.0
    %3165 = vmatpush2.msra.mxu0 0.0
    %3166 = vmatprep.subr.mxu0 0.0
    %3167 = vmatpush2.msra.mxu0 0.0
    %3168 = vmatprep.subr.mxu0 0.0
    %3169 = vmatpush2.msra.mxu0 0.0
    %3170 = vmatprep.subr.mxu0 0.0
    %3171 = vmatpush2.msra.mxu0 0.0
    %3172 = vmatprep.subr.mxu0 0.0
    %3173 = vmatpush2.msra.mxu0 0.0
    %3174 = vmatprep.subr.mxu0 0.0
    %3175 = vmatpush2.msra.mxu0 0.0
    %3176 = vmatprep.subr.mxu0 0.0
    %3177 = vmatpush2.msra.mxu0 0.0
    %3178 = vmatprep.subr.mxu0 0.0
    %3179 = vmatpush2.msra.mxu0 0.0
    %3180 = vmatprep.subr.mxu0 0.0
    %3181 = vmatpush2.msra.mxu0 0.0
    %3182 = vmatprep.subr.mxu0 0.0
    %3183 = vmatpush2.msra.mxu0 0.0
    %3184 = vmatprep.mubr.f32.mxu0 0.0
    %3185 = vmatmul.mubr.f32.gmra.mxu0 %v3118
    %v3186 = vpop.f32.mrf.mxu0
    %v3187 = vadd.f32 %v3115, %v3186
    %v3188 = vpop.f32.mrf.mxu0
    %3189 = vdwg.mxu0
    %v3190 = vrot.slane %v726, 6
    %v3193 = vsel %vm201, %v3108, 0
    %3195 = vmatprep.subr.mxu0 0.0
    %3196 = vmatpush1.msra.mxu0 0.0
    %3197 = vmatprep.subr.mxu0 0.0
    %3198 = vmatpush1.msra.mxu0 0.0
    %3199 = vmatprep.subr.mxu0 0.0
    %3200 = vmatpush1.msra.mxu0 0.0
    %3201 = vmatprep.subr.mxu0 0.0
    %3202 = vmatpush1.msra.mxu0 0.0
    %3203 = vmatprep.subr.mxu0 0.0
    %3204 = vmatpush1.msra.mxu0 0.0
    %3205 = vmatprep.subr.mxu0 0.0
    %3206 = vmatpush1.msra.mxu0 0.0
    %3207 = vmatprep.subr.mxu0 0.0
    %3208 = vmatpush1.msra.mxu0 0.0
    %3209 = vmatprep.subr.mxu0 0.0
    %3210 = vmatpush1.msra.mxu0 0.0
    %3211 = vmatprep.subr.mxu0 0.0
    %3212 = vmatpush1.msra.mxu0 0.0
    %3213 = vmatprep.subr.mxu0 0.0
    %3214 = vmatpush1.msra.mxu0 0.0
    %3215 = vmatprep.subr.mxu0 0.0
    %3216 = vmatpush1.msra.mxu0 0.0
    %3217 = vmatprep.subr.mxu0 0.0
    %3218 = vmatpush1.msra.mxu0 0.0
    %3219 = vmatprep.subr.mxu0 0.0
    %3220 = vmatpush1.msra.mxu0 %v3114
    %3221 = vmatprep.subr.mxu0 0.0
    %3222 = vmatpush1.msra.mxu0 %v3113
    %3223 = vmatprep.subr.mxu0 0.0
    %3224 = vmatpush1.msra.mxu0 %v3112
    %3225 = vmatprep.subr.mxu0 0.0
    %3226 = vmatpush1.msra.mxu0 %v3111
    %3227 = vmatprep.subr.mxu0 0.0
    %3228 = vmatpush2.msra.mxu0 0.0
    %3229 = vmatprep.subr.mxu0 0.0
    %3230 = vmatpush2.msra.mxu0 0.0
    %3231 = vmatprep.subr.mxu0 0.0
    %3232 = vmatpush2.msra.mxu0 0.0
    %3233 = vmatprep.subr.mxu0 0.0
    %3234 = vmatpush2.msra.mxu0 0.0
    %3235 = vmatprep.subr.mxu0 0.0
    %3236 = vmatpush2.msra.mxu0 0.0
    %3237 = vmatprep.subr.mxu0 0.0
    %3238 = vmatpush2.msra.mxu0 0.0
    %3239 = vmatprep.subr.mxu0 0.0
    %3240 = vmatpush2.msra.mxu0 0.0
    %3241 = vmatprep.subr.mxu0 0.0
    %3242 = vmatpush2.msra.mxu0 0.0
    %3243 = vmatprep.subr.mxu0 0.0
    %3244 = vmatpush2.msra.mxu0 0.0
    %3245 = vmatprep.subr.mxu0 0.0
    %3246 = vmatpush2.msra.mxu0 0.0
    %3247 = vmatprep.subr.mxu0 0.0
    %3248 = vmatpush2.msra.mxu0 0.0
    %3249 = vmatprep.subr.mxu0 0.0
    %3250 = vmatpush2.msra.mxu0 0.0
    %3251 = vmatprep.subr.mxu0 0.0
    %3252 = vmatpush2.msra.mxu0 0.0
    %3253 = vmatprep.subr.mxu0 0.0
    %3254 = vmatpush2.msra.mxu0 0.0
    %3255 = vmatprep.subr.mxu0 0.0
    %3256 = vmatpush2.msra.mxu0 0.0
    %3257 = vmatprep.subr.mxu0 0.0
    %3258 = vmatpush2.msra.mxu0 0.0
    %3259 = vmatprep.mubr.f32.mxu0 0.0
    %3260 = vmatmul.mubr.f32.gmra.mxu0 %v3193
    %v3261 = vpop.f32.mrf.mxu0
    %v3262 = vadd.f32 %v3190, %v3261
    %v3263 = vpop.f32.mrf.mxu0
    %3264 = vdwg.mxu0
    %v3265 = vld [vmem:[#allocation2 + $0xa0] sm:$0xff]
    %v3266 = vld [vmem:[#allocation2 + $0xa8] sm:$0xff]
    %v3267 = vld [vmem:[#allocation2 + $0xb0] sm:$0xff]
    %v3268 = vld [vmem:[#allocation2 + $0xb8] sm:$0xff]
    %v3269 = vrot.slane %v578, 5
    %v3272 = vsel %vm201, %v3187, 0
    %3274 = vmatprep.subr.mxu0 0.0
    %3275 = vmatpush1.msra.mxu0 0.0
    %3276 = vmatprep.subr.mxu0 0.0
    %3277 = vmatpush1.msra.mxu0 0.0
    %3278 = vmatprep.subr.mxu0 0.0
    %3279 = vmatpush1.msra.mxu0 0.0
    %3280 = vmatprep.subr.mxu0 0.0
    %3281 = vmatpush1.msra.mxu0 0.0
    %3282 = vmatprep.subr.mxu0 0.0
    %3283 = vmatpush1.msra.mxu0 0.0
    %3284 = vmatprep.subr.mxu0 0.0
    %3285 = vmatpush1.msra.mxu0 0.0
    %3286 = vmatprep.subr.mxu0 0.0
    %3287 = vmatpush1.msra.mxu0 0.0
    %3288 = vmatprep.subr.mxu0 0.0
    %3289 = vmatpush1.msra.mxu0 0.0
    %3290 = vmatprep.subr.mxu0 0.0
    %3291 = vmatpush1.msra.mxu0 0.0
    %3292 = vmatprep.subr.mxu0 0.0
    %3293 = vmatpush1.msra.mxu0 0.0
    %3294 = vmatprep.subr.mxu0 0.0
    %3295 = vmatpush1.msra.mxu0 0.0
    %3296 = vmatprep.subr.mxu0 0.0
    %3297 = vmatpush1.msra.mxu0 0.0
    %3298 = vmatprep.subr.mxu0 0.0
    %3299 = vmatpush1.msra.mxu0 %v3268
    %3300 = vmatprep.subr.mxu0 0.0
    %3301 = vmatpush1.msra.mxu0 %v3267
    %3302 = vmatprep.subr.mxu0 0.0
    %3303 = vmatpush1.msra.mxu0 %v3266
    %3304 = vmatprep.subr.mxu0 0.0
    %3305 = vmatpush1.msra.mxu0 %v3265
    %3306 = vmatprep.subr.mxu0 0.0
    %3307 = vmatpush2.msra.mxu0 0.0
    %3308 = vmatprep.subr.mxu0 0.0
    %3309 = vmatpush2.msra.mxu0 0.0
    %3310 = vmatprep.subr.mxu0 0.0
    %3311 = vmatpush2.msra.mxu0 0.0
    %3312 = vmatprep.subr.mxu0 0.0
    %3313 = vmatpush2.msra.mxu0 0.0
    %3314 = vmatprep.subr.mxu0 0.0
    %3315 = vmatpush2.msra.mxu0 0.0
    %3316 = vmatprep.subr.mxu0 0.0
    %3317 = vmatpush2.msra.mxu0 0.0
    %3318 = vmatprep.subr.mxu0 0.0
    %3319 = vmatpush2.msra.mxu0 0.0
    %3320 = vmatprep.subr.mxu0 0.0
    %3321 = vmatpush2.msra.mxu0 0.0
    %3322 = vmatprep.subr.mxu0 0.0
    %3323 = vmatpush2.msra.mxu0 0.0
    %3324 = vmatprep.subr.mxu0 0.0
    %3325 = vmatpush2.msra.mxu0 0.0
    %3326 = vmatprep.subr.mxu0 0.0
    %3327 = vmatpush2.msra.mxu0 0.0
    %3328 = vmatprep.subr.mxu0 0.0
    %3329 = vmatpush2.msra.mxu0 0.0
    %3330 = vmatprep.subr.mxu0 0.0
    %3331 = vmatpush2.msra.mxu0 0.0
    %3332 = vmatprep.subr.mxu0 0.0
    %3333 = vmatpush2.msra.mxu0 0.0
    %3334 = vmatprep.subr.mxu0 0.0
    %3335 = vmatpush2.msra.mxu0 0.0
    %3336 = vmatprep.subr.mxu0 0.0
    %3337 = vmatpush2.msra.mxu0 0.0
    %3338 = vmatprep.mubr.f32.mxu0 0.0
    %3339 = vmatmul.mubr.f32.gmra.mxu0 %v3272
    %v3340 = vpop.f32.mrf.mxu0
    %v3341 = vadd.f32 %v3269, %v3340
    %v3342 = vpop.f32.mrf.mxu0
    %3343 = vdwg.mxu0
    %v3344 = vrot.slane %v726, 5
    %v3347 = vsel %vm201, %v3262, 0
    %3349 = vmatprep.subr.mxu0 0.0
    %3350 = vmatpush1.msra.mxu0 0.0
    %3351 = vmatprep.subr.mxu0 0.0
    %3352 = vmatpush1.msra.mxu0 0.0
    %3353 = vmatprep.subr.mxu0 0.0
    %3354 = vmatpush1.msra.mxu0 0.0
    %3355 = vmatprep.subr.mxu0 0.0
    %3356 = vmatpush1.msra.mxu0 0.0
    %3357 = vmatprep.subr.mxu0 0.0
    %3358 = vmatpush1.msra.mxu0 0.0
    %3359 = vmatprep.subr.mxu0 0.0
    %3360 = vmatpush1.msra.mxu0 0.0
    %3361 = vmatprep.subr.mxu0 0.0
    %3362 = vmatpush1.msra.mxu0 0.0
    %3363 = vmatprep.subr.mxu0 0.0
    %3364 = vmatpush1.msra.mxu0 0.0
    %3365 = vmatprep.subr.mxu0 0.0
    %3366 = vmatpush1.msra.mxu0 0.0
    %3367 = vmatprep.subr.mxu0 0.0
    %3368 = vmatpush1.msra.mxu0 0.0
    %3369 = vmatprep.subr.mxu0 0.0
    %3370 = vmatpush1.msra.mxu0 0.0
    %3371 = vmatprep.subr.mxu0 0.0
    %3372 = vmatpush1.msra.mxu0 0.0
    %3373 = vmatprep.subr.mxu0 0.0
    %3374 = vmatpush1.msra.mxu0 %v3268
    %3375 = vmatprep.subr.mxu0 0.0
    %3376 = vmatpush1.msra.mxu0 %v3267
    %3377 = vmatprep.subr.mxu0 0.0
    %3378 = vmatpush1.msra.mxu0 %v3266
    %3379 = vmatprep.subr.mxu0 0.0
    %3380 = vmatpush1.msra.mxu0 %v3265
    %3381 = vmatprep.subr.mxu0 0.0
    %3382 = vmatpush2.msra.mxu0 0.0
    %3383 = vmatprep.subr.mxu0 0.0
    %3384 = vmatpush2.msra.mxu0 0.0
    %3385 = vmatprep.subr.mxu0 0.0
    %3386 = vmatpush2.msra.mxu0 0.0
    %3387 = vmatprep.subr.mxu0 0.0
    %3388 = vmatpush2.msra.mxu0 0.0
    %3389 = vmatprep.subr.mxu0 0.0
    %3390 = vmatpush2.msra.mxu0 0.0
    %3391 = vmatprep.subr.mxu0 0.0
    %3392 = vmatpush2.msra.mxu0 0.0
    %3393 = vmatprep.subr.mxu0 0.0
    %3394 = vmatpush2.msra.mxu0 0.0
    %3395 = vmatprep.subr.mxu0 0.0
    %3396 = vmatpush2.msra.mxu0 0.0
    %3397 = vmatprep.subr.mxu0 0.0
    %3398 = vmatpush2.msra.mxu0 0.0
    %3399 = vmatprep.subr.mxu0 0.0
    %3400 = vmatpush2.msra.mxu0 0.0
    %3401 = vmatprep.subr.mxu0 0.0
    %3402 = vmatpush2.msra.mxu0 0.0
    %3403 = vmatprep.subr.mxu0 0.0
    %3404 = vmatpush2.msra.mxu0 0.0
    %3405 = vmatprep.subr.mxu0 0.0
    %3406 = vmatpush2.msra.mxu0 0.0
    %3407 = vmatprep.subr.mxu0 0.0
    %3408 = vmatpush2.msra.mxu0 0.0
    %3409 = vmatprep.subr.mxu0 0.0
    %3410 = vmatpush2.msra.mxu0 0.0
    %3411 = vmatprep.subr.mxu0 0.0
    %3412 = vmatpush2.msra.mxu0 0.0
    %3413 = vmatprep.mubr.f32.mxu0 0.0
    %3414 = vmatmul.mubr.f32.gmra.mxu0 %v3347
    %v3415 = vpop.f32.mrf.mxu0
    %v3416 = vadd.f32 %v3344, %v3415
    %v3417 = vpop.f32.mrf.mxu0
    %3418 = vdwg.mxu0
    %v3419 = vld [vmem:[#allocation2 + $0x80] sm:$0xff]
    %v3420 = vld [vmem:[#allocation2 + $0x88] sm:$0xff]
    %v3421 = vld [vmem:[#allocation2 + $0x90] sm:$0xff]
    %v3422 = vld [vmem:[#allocation2 + $0x98] sm:$0xff]
    %v3423 = vrot.slane %v578, 4
    %v3426 = vsel %vm201, %v3341, 0
    %3428 = vmatprep.subr.mxu0 0.0
    %3429 = vmatpush1.msra.mxu0 0.0
    %3430 = vmatprep.subr.mxu0 0.0
    %3431 = vmatpush1.msra.mxu0 0.0
    %3432 = vmatprep.subr.mxu0 0.0
    %3433 = vmatpush1.msra.mxu0 0.0
    %3434 = vmatprep.subr.mxu0 0.0
    %3435 = vmatpush1.msra.mxu0 0.0
    %3436 = vmatprep.subr.mxu0 0.0
    %3437 = vmatpush1.msra.mxu0 0.0
    %3438 = vmatprep.subr.mxu0 0.0
    %3439 = vmatpush1.msra.mxu0 0.0
    %3440 = vmatprep.subr.mxu0 0.0
    %3441 = vmatpush1.msra.mxu0 0.0
    %3442 = vmatprep.subr.mxu0 0.0
    %3443 = vmatpush1.msra.mxu0 0.0
    %3444 = vmatprep.subr.mxu0 0.0
    %3445 = vmatpush1.msra.mxu0 0.0
    %3446 = vmatprep.subr.mxu0 0.0
    %3447 = vmatpush1.msra.mxu0 0.0
    %3448 = vmatprep.subr.mxu0 0.0
    %3449 = vmatpush1.msra.mxu0 0.0
    %3450 = vmatprep.subr.mxu0 0.0
    %3451 = vmatpush1.msra.mxu0 0.0
    %3452 = vmatprep.subr.mxu0 0.0
    %3453 = vmatpush1.msra.mxu0 %v3422
    %3454 = vmatprep.subr.mxu0 0.0
    %3455 = vmatpush1.msra.mxu0 %v3421
    %3456 = vmatprep.subr.mxu0 0.0
    %3457 = vmatpush1.msra.mxu0 %v3420
    %3458 = vmatprep.subr.mxu0 0.0
    %3459 = vmatpush1.msra.mxu0 %v3419
    %3460 = vmatprep.subr.mxu0 0.0
    %3461 = vmatpush2.msra.mxu0 0.0
    %3462 = vmatprep.subr.mxu0 0.0
    %3463 = vmatpush2.msra.mxu0 0.0
    %3464 = vmatprep.subr.mxu0 0.0
    %3465 = vmatpush2.msra.mxu0 0.0
    %3466 = vmatprep.subr.mxu0 0.0
    %3467 = vmatpush2.msra.mxu0 0.0
    %3468 = vmatprep.subr.mxu0 0.0
    %3469 = vmatpush2.msra.mxu0 0.0
    %3470 = vmatprep.subr.mxu0 0.0
    %3471 = vmatpush2.msra.mxu0 0.0
    %3472 = vmatprep.subr.mxu0 0.0
    %3473 = vmatpush2.msra.mxu0 0.0
    %3474 = vmatprep.subr.mxu0 0.0
    %3475 = vmatpush2.msra.mxu0 0.0
    %3476 = vmatprep.subr.mxu0 0.0
    %3477 = vmatpush2.msra.mxu0 0.0
    %3478 = vmatprep.subr.mxu0 0.0
    %3479 = vmatpush2.msra.mxu0 0.0
    %3480 = vmatprep.subr.mxu0 0.0
    %3481 = vmatpush2.msra.mxu0 0.0
    %3482 = vmatprep.subr.mxu0 0.0
    %3483 = vmatpush2.msra.mxu0 0.0
    %3484 = vmatprep.subr.mxu0 0.0
    %3485 = vmatpush2.msra.mxu0 0.0
    %3486 = vmatprep.subr.mxu0 0.0
    %3487 = vmatpush2.msra.mxu0 0.0
    %3488 = vmatprep.subr.mxu0 0.0
    %3489 = vmatpush2.msra.mxu0 0.0
    %3490 = vmatprep.subr.mxu0 0.0
    %3491 = vmatpush2.msra.mxu0 0.0
    %3492 = vmatprep.mubr.f32.mxu0 0.0
    %3493 = vmatmul.mubr.f32.gmra.mxu0 %v3426
    %v3494 = vpop.f32.mrf.mxu0
    %v3495 = vadd.f32 %v3423, %v3494
    %v3496 = vpop.f32.mrf.mxu0
    %3497 = vdwg.mxu0
    %v3498 = vrot.slane %v726, 4
    %v3501 = vsel %vm201, %v3416, 0
    %3503 = vmatprep.subr.mxu0 0.0
    %3504 = vmatpush1.msra.mxu0 0.0
    %3505 = vmatprep.subr.mxu0 0.0
    %3506 = vmatpush1.msra.mxu0 0.0
    %3507 = vmatprep.subr.mxu0 0.0
    %3508 = vmatpush1.msra.mxu0 0.0
    %3509 = vmatprep.subr.mxu0 0.0
    %3510 = vmatpush1.msra.mxu0 0.0
    %3511 = vmatprep.subr.mxu0 0.0
    %3512 = vmatpush1.msra.mxu0 0.0
    %3513 = vmatprep.subr.mxu0 0.0
    %3514 = vmatpush1.msra.mxu0 0.0
    %3515 = vmatprep.subr.mxu0 0.0
    %3516 = vmatpush1.msra.mxu0 0.0
    %3517 = vmatprep.subr.mxu0 0.0
    %3518 = vmatpush1.msra.mxu0 0.0
    %3519 = vmatprep.subr.mxu0 0.0
    %3520 = vmatpush1.msra.mxu0 0.0
    %3521 = vmatprep.subr.mxu0 0.0
    %3522 = vmatpush1.msra.mxu0 0.0
    %3523 = vmatprep.subr.mxu0 0.0
    %3524 = vmatpush1.msra.mxu0 0.0
    %3525 = vmatprep.subr.mxu0 0.0
    %3526 = vmatpush1.msra.mxu0 0.0
    %3527 = vmatprep.subr.mxu0 0.0
    %3528 = vmatpush1.msra.mxu0 %v3422
    %3529 = vmatprep.subr.mxu0 0.0
    %3530 = vmatpush1.msra.mxu0 %v3421
    %3531 = vmatprep.subr.mxu0 0.0
    %3532 = vmatpush1.msra.mxu0 %v3420
    %3533 = vmatprep.subr.mxu0 0.0
    %3534 = vmatpush1.msra.mxu0 %v3419
    %3535 = vmatprep.subr.mxu0 0.0
    %3536 = vmatpush2.msra.mxu0 0.0
    %3537 = vmatprep.subr.mxu0 0.0
    %3538 = vmatpush2.msra.mxu0 0.0
    %3539 = vmatprep.subr.mxu0 0.0
    %3540 = vmatpush2.msra.mxu0 0.0
    %3541 = vmatprep.subr.mxu0 0.0
    %3542 = vmatpush2.msra.mxu0 0.0
    %3543 = vmatprep.subr.mxu0 0.0
    %3544 = vmatpush2.msra.mxu0 0.0
    %3545 = vmatprep.subr.mxu0 0.0
    %3546 = vmatpush2.msra.mxu0 0.0
    %3547 = vmatprep.subr.mxu0 0.0
    %3548 = vmatpush2.msra.mxu0 0.0
    %3549 = vmatprep.subr.mxu0 0.0
    %3550 = vmatpush2.msra.mxu0 0.0
    %3551 = vmatprep.subr.mxu0 0.0
    %3552 = vmatpush2.msra.mxu0 0.0
    %3553 = vmatprep.subr.mxu0 0.0
    %3554 = vmatpush2.msra.mxu0 0.0
    %3555 = vmatprep.subr.mxu0 0.0
    %3556 = vmatpush2.msra.mxu0 0.0
    %3557 = vmatprep.subr.mxu0 0.0
    %3558 = vmatpush2.msra.mxu0 0.0
    %3559 = vmatprep.subr.mxu0 0.0
    %3560 = vmatpush2.msra.mxu0 0.0
    %3561 = vmatprep.subr.mxu0 0.0
    %3562 = vmatpush2.msra.mxu0 0.0
    %3563 = vmatprep.subr.mxu0 0.0
    %3564 = vmatpush2.msra.mxu0 0.0
    %3565 = vmatprep.subr.mxu0 0.0
    %3566 = vmatpush2.msra.mxu0 0.0
    %3567 = vmatprep.mubr.f32.mxu0 0.0
    %3568 = vmatmul.mubr.f32.gmra.mxu0 %v3501
    %v3569 = vpop.f32.mrf.mxu0
    %v3570 = vadd.f32 %v3498, %v3569
    %v3571 = vpop.f32.mrf.mxu0
    %3572 = vdwg.mxu0
    %v3573 = vld [vmem:[#allocation2 + $0x60] sm:$0xff]
    %v3574 = vld [vmem:[#allocation2 + $0x68] sm:$0xff]
    %v3575 = vld [vmem:[#allocation2 + $0x70] sm:$0xff]
    %v3576 = vld [vmem:[#allocation2 + $0x78] sm:$0xff]
    %v3577 = vrot.slane %v578, 3
    %v3580 = vsel %vm201, %v3495, 0
    %3582 = vmatprep.subr.mxu0 0.0
    %3583 = vmatpush1.msra.mxu0 0.0
    %3584 = vmatprep.subr.mxu0 0.0
    %3585 = vmatpush1.msra.mxu0 0.0
    %3586 = vmatprep.subr.mxu0 0.0
    %3587 = vmatpush1.msra.mxu0 0.0
    %3588 = vmatprep.subr.mxu0 0.0
    %3589 = vmatpush1.msra.mxu0 0.0
    %3590 = vmatprep.subr.mxu0 0.0
    %3591 = vmatpush1.msra.mxu0 0.0
    %3592 = vmatprep.subr.mxu0 0.0
    %3593 = vmatpush1.msra.mxu0 0.0
    %3594 = vmatprep.subr.mxu0 0.0
    %3595 = vmatpush1.msra.mxu0 0.0
    %3596 = vmatprep.subr.mxu0 0.0
    %3597 = vmatpush1.msra.mxu0 0.0
    %3598 = vmatprep.subr.mxu0 0.0
    %3599 = vmatpush1.msra.mxu0 0.0
    %3600 = vmatprep.subr.mxu0 0.0
    %3601 = vmatpush1.msra.mxu0 0.0
    %3602 = vmatprep.subr.mxu0 0.0
    %3603 = vmatpush1.msra.mxu0 0.0
    %3604 = vmatprep.subr.mxu0 0.0
    %3605 = vmatpush1.msra.mxu0 0.0
    %3606 = vmatprep.subr.mxu0 0.0
    %3607 = vmatpush1.msra.mxu0 %v3576
    %3608 = vmatprep.subr.mxu0 0.0
    %3609 = vmatpush1.msra.mxu0 %v3575
    %3610 = vmatprep.subr.mxu0 0.0
    %3611 = vmatpush1.msra.mxu0 %v3574
    %3612 = vmatprep.subr.mxu0 0.0
    %3613 = vmatpush1.msra.mxu0 %v3573
    %3614 = vmatprep.subr.mxu0 0.0
    %3615 = vmatpush2.msra.mxu0 0.0
    %3616 = vmatprep.subr.mxu0 0.0
    %3617 = vmatpush2.msra.mxu0 0.0
    %3618 = vmatprep.subr.mxu0 0.0
    %3619 = vmatpush2.msra.mxu0 0.0
    %3620 = vmatprep.subr.mxu0 0.0
    %3621 = vmatpush2.msra.mxu0 0.0
    %3622 = vmatprep.subr.mxu0 0.0
    %3623 = vmatpush2.msra.mxu0 0.0
    %3624 = vmatprep.subr.mxu0 0.0
    %3625 = vmatpush2.msra.mxu0 0.0
    %3626 = vmatprep.subr.mxu0 0.0
    %3627 = vmatpush2.msra.mxu0 0.0
    %3628 = vmatprep.subr.mxu0 0.0
    %3629 = vmatpush2.msra.mxu0 0.0
    %3630 = vmatprep.subr.mxu0 0.0
    %3631 = vmatpush2.msra.mxu0 0.0
    %3632 = vmatprep.subr.mxu0 0.0
    %3633 = vmatpush2.msra.mxu0 0.0
    %3634 = vmatprep.subr.mxu0 0.0
    %3635 = vmatpush2.msra.mxu0 0.0
    %3636 = vmatprep.subr.mxu0 0.0
    %3637 = vmatpush2.msra.mxu0 0.0
    %3638 = vmatprep.subr.mxu0 0.0
    %3639 = vmatpush2.msra.mxu0 0.0
    %3640 = vmatprep.subr.mxu0 0.0
    %3641 = vmatpush2.msra.mxu0 0.0
    %3642 = vmatprep.subr.mxu0 0.0
    %3643 = vmatpush2.msra.mxu0 0.0
    %3644 = vmatprep.subr.mxu0 0.0
    %3645 = vmatpush2.msra.mxu0 0.0
    %3646 = vmatprep.mubr.f32.mxu0 0.0
    %3647 = vmatmul.mubr.f32.gmra.mxu0 %v3580
    %v3648 = vpop.f32.mrf.mxu0
    %v3649 = vadd.f32 %v3577, %v3648
    %v3650 = vpop.f32.mrf.mxu0
    %3651 = vdwg.mxu0
    %v3652 = vrot.slane %v726, 3
    %v3655 = vsel %vm201, %v3570, 0
    %3657 = vmatprep.subr.mxu0 0.0
    %3658 = vmatpush1.msra.mxu0 0.0
    %3659 = vmatprep.subr.mxu0 0.0
    %3660 = vmatpush1.msra.mxu0 0.0
    %3661 = vmatprep.subr.mxu0 0.0
    %3662 = vmatpush1.msra.mxu0 0.0
    %3663 = vmatprep.subr.mxu0 0.0
    %3664 = vmatpush1.msra.mxu0 0.0
    %3665 = vmatprep.subr.mxu0 0.0
    %3666 = vmatpush1.msra.mxu0 0.0
    %3667 = vmatprep.subr.mxu0 0.0
    %3668 = vmatpush1.msra.mxu0 0.0
    %3669 = vmatprep.subr.mxu0 0.0
    %3670 = vmatpush1.msra.mxu0 0.0
    %3671 = vmatprep.subr.mxu0 0.0
    %3672 = vmatpush1.msra.mxu0 0.0
    %3673 = vmatprep.subr.mxu0 0.0
    %3674 = vmatpush1.msra.mxu0 0.0
    %3675 = vmatprep.subr.mxu0 0.0
    %3676 = vmatpush1.msra.mxu0 0.0
    %3677 = vmatprep.subr.mxu0 0.0
    %3678 = vmatpush1.msra.mxu0 0.0
    %3679 = vmatprep.subr.mxu0 0.0
    %3680 = vmatpush1.msra.mxu0 0.0
    %3681 = vmatprep.subr.mxu0 0.0
    %3682 = vmatpush1.msra.mxu0 %v3576
    %3683 = vmatprep.subr.mxu0 0.0
    %3684 = vmatpush1.msra.mxu0 %v3575
    %3685 = vmatprep.subr.mxu0 0.0
    %3686 = vmatpush1.msra.mxu0 %v3574
    %3687 = vmatprep.subr.mxu0 0.0
    %3688 = vmatpush1.msra.mxu0 %v3573
    %3689 = vmatprep.subr.mxu0 0.0
    %3690 = vmatpush2.msra.mxu0 0.0
    %3691 = vmatprep.subr.mxu0 0.0
    %3692 = vmatpush2.msra.mxu0 0.0
    %3693 = vmatprep.subr.mxu0 0.0
    %3694 = vmatpush2.msra.mxu0 0.0
    %3695 = vmatprep.subr.mxu0 0.0
    %3696 = vmatpush2.msra.mxu0 0.0
    %3697 = vmatprep.subr.mxu0 0.0
    %3698 = vmatpush2.msra.mxu0 0.0
    %3699 = vmatprep.subr.mxu0 0.0
    %3700 = vmatpush2.msra.mxu0 0.0
    %3701 = vmatprep.subr.mxu0 0.0
    %3702 = vmatpush2.msra.mxu0 0.0
    %3703 = vmatprep.subr.mxu0 0.0
    %3704 = vmatpush2.msra.mxu0 0.0
    %3705 = vmatprep.subr.mxu0 0.0
    %3706 = vmatpush2.msra.mxu0 0.0
    %3707 = vmatprep.subr.mxu0 0.0
    %3708 = vmatpush2.msra.mxu0 0.0
    %3709 = vmatprep.subr.mxu0 0.0
    %3710 = vmatpush2.msra.mxu0 0.0
    %3711 = vmatprep.subr.mxu0 0.0
    %3712 = vmatpush2.msra.mxu0 0.0
    %3713 = vmatprep.subr.mxu0 0.0
    %3714 = vmatpush2.msra.mxu0 0.0
    %3715 = vmatprep.subr.mxu0 0.0
    %3716 = vmatpush2.msra.mxu0 0.0
    %3717 = vmatprep.subr.mxu0 0.0
    %3718 = vmatpush2.msra.mxu0 0.0
    %3719 = vmatprep.subr.mxu0 0.0
    %3720 = vmatpush2.msra.mxu0 0.0
    %3721 = vmatprep.mubr.f32.mxu0 0.0
    %3722 = vmatmul.mubr.f32.gmra.mxu0 %v3655
    %v3723 = vpop.f32.mrf.mxu0
    %v3724 = vadd.f32 %v3652, %v3723
    %v3725 = vpop.f32.mrf.mxu0
    %3726 = vdwg.mxu0
    %v3727 = vld [vmem:[#allocation2 + $0x40] sm:$0xff]
    %v3728 = vld [vmem:[#allocation2 + $0x48] sm:$0xff]
    %v3729 = vld [vmem:[#allocation2 + $0x50] sm:$0xff]
    %v3730 = vld [vmem:[#allocation2 + $0x58] sm:$0xff]
    %v3731 = vrot.slane %v578, 2
    %v3734 = vsel %vm201, %v3649, 0
    %3736 = vmatprep.subr.mxu0 0.0
    %3737 = vmatpush1.msra.mxu0 0.0
    %3738 = vmatprep.subr.mxu0 0.0
    %3739 = vmatpush1.msra.mxu0 0.0
    %3740 = vmatprep.subr.mxu0 0.0
    %3741 = vmatpush1.msra.mxu0 0.0
    %3742 = vmatprep.subr.mxu0 0.0
    %3743 = vmatpush1.msra.mxu0 0.0
    %3744 = vmatprep.subr.mxu0 0.0
    %3745 = vmatpush1.msra.mxu0 0.0
    %3746 = vmatprep.subr.mxu0 0.0
    %3747 = vmatpush1.msra.mxu0 0.0
    %3748 = vmatprep.subr.mxu0 0.0
    %3749 = vmatpush1.msra.mxu0 0.0
    %3750 = vmatprep.subr.mxu0 0.0
    %3751 = vmatpush1.msra.mxu0 0.0
    %3752 = vmatprep.subr.mxu0 0.0
    %3753 = vmatpush1.msra.mxu0 0.0
    %3754 = vmatprep.subr.mxu0 0.0
    %3755 = vmatpush1.msra.mxu0 0.0
    %3756 = vmatprep.subr.mxu0 0.0
    %3757 = vmatpush1.msra.mxu0 0.0
    %3758 = vmatprep.subr.mxu0 0.0
    %3759 = vmatpush1.msra.mxu0 0.0
    %3760 = vmatprep.subr.mxu0 0.0
    %3761 = vmatpush1.msra.mxu0 %v3730
    %3762 = vmatprep.subr.mxu0 0.0
    %3763 = vmatpush1.msra.mxu0 %v3729
    %3764 = vmatprep.subr.mxu0 0.0
    %3765 = vmatpush1.msra.mxu0 %v3728
    %3766 = vmatprep.subr.mxu0 0.0
    %3767 = vmatpush1.msra.mxu0 %v3727
    %3768 = vmatprep.subr.mxu0 0.0
    %3769 = vmatpush2.msra.mxu0 0.0
    %3770 = vmatprep.subr.mxu0 0.0
    %3771 = vmatpush2.msra.mxu0 0.0
    %3772 = vmatprep.subr.mxu0 0.0
    %3773 = vmatpush2.msra.mxu0 0.0
    %3774 = vmatprep.subr.mxu0 0.0
    %3775 = vmatpush2.msra.mxu0 0.0
    %3776 = vmatprep.subr.mxu0 0.0
    %3777 = vmatpush2.msra.mxu0 0.0
    %3778 = vmatprep.subr.mxu0 0.0
    %3779 = vmatpush2.msra.mxu0 0.0
    %3780 = vmatprep.subr.mxu0 0.0
    %3781 = vmatpush2.msra.mxu0 0.0
    %3782 = vmatprep.subr.mxu0 0.0
    %3783 = vmatpush2.msra.mxu0 0.0
    %3784 = vmatprep.subr.mxu0 0.0
    %3785 = vmatpush2.msra.mxu0 0.0
    %3786 = vmatprep.subr.mxu0 0.0
    %3787 = vmatpush2.msra.mxu0 0.0
    %3788 = vmatprep.subr.mxu0 0.0
    %3789 = vmatpush2.msra.mxu0 0.0
    %3790 = vmatprep.subr.mxu0 0.0
    %3791 = vmatpush2.msra.mxu0 0.0
    %3792 = vmatprep.subr.mxu0 0.0
    %3793 = vmatpush2.msra.mxu0 0.0
    %3794 = vmatprep.subr.mxu0 0.0
    %3795 = vmatpush2.msra.mxu0 0.0
    %3796 = vmatprep.subr.mxu0 0.0
    %3797 = vmatpush2.msra.mxu0 0.0
    %3798 = vmatprep.subr.mxu0 0.0
    %3799 = vmatpush2.msra.mxu0 0.0
    %3800 = vmatprep.mubr.f32.mxu0 0.0
    %3801 = vmatmul.mubr.f32.gmra.mxu0 %v3734
    %v3802 = vpop.f32.mrf.mxu0
    %v3803 = vadd.f32 %v3731, %v3802
    %v3804 = vpop.f32.mrf.mxu0
    %3805 = vdwg.mxu0
    %v3806 = vrot.slane %v726, 2
    %v3809 = vsel %vm201, %v3724, 0
    %3811 = vmatprep.subr.mxu0 0.0
    %3812 = vmatpush1.msra.mxu0 0.0
    %3813 = vmatprep.subr.mxu0 0.0
    %3814 = vmatpush1.msra.mxu0 0.0
    %3815 = vmatprep.subr.mxu0 0.0
    %3816 = vmatpush1.msra.mxu0 0.0
    %3817 = vmatprep.subr.mxu0 0.0
    %3818 = vmatpush1.msra.mxu0 0.0
    %3819 = vmatprep.subr.mxu0 0.0
    %3820 = vmatpush1.msra.mxu0 0.0
    %3821 = vmatprep.subr.mxu0 0.0
    %3822 = vmatpush1.msra.mxu0 0.0
    %3823 = vmatprep.subr.mxu0 0.0
    %3824 = vmatpush1.msra.mxu0 0.0
    %3825 = vmatprep.subr.mxu0 0.0
    %3826 = vmatpush1.msra.mxu0 0.0
    %3827 = vmatprep.subr.mxu0 0.0
    %3828 = vmatpush1.msra.mxu0 0.0
    %3829 = vmatprep.subr.mxu0 0.0
    %3830 = vmatpush1.msra.mxu0 0.0
    %3831 = vmatprep.subr.mxu0 0.0
    %3832 = vmatpush1.msra.mxu0 0.0
    %3833 = vmatprep.subr.mxu0 0.0
    %3834 = vmatpush1.msra.mxu0 0.0
    %3835 = vmatprep.subr.mxu0 0.0
    %3836 = vmatpush1.msra.mxu0 %v3730
    %3837 = vmatprep.subr.mxu0 0.0
    %3838 = vmatpush1.msra.mxu0 %v3729
    %3839 = vmatprep.subr.mxu0 0.0
    %3840 = vmatpush1.msra.mxu0 %v3728
    %3841 = vmatprep.subr.mxu0 0.0
    %3842 = vmatpush1.msra.mxu0 %v3727
    %3843 = vmatprep.subr.mxu0 0.0
    %3844 = vmatpush2.msra.mxu0 0.0
    %3845 = vmatprep.subr.mxu0 0.0
    %3846 = vmatpush2.msra.mxu0 0.0
    %3847 = vmatprep.subr.mxu0 0.0
    %3848 = vmatpush2.msra.mxu0 0.0
    %3849 = vmatprep.subr.mxu0 0.0
    %3850 = vmatpush2.msra.mxu0 0.0
    %3851 = vmatprep.subr.mxu0 0.0
    %3852 = vmatpush2.msra.mxu0 0.0
    %3853 = vmatprep.subr.mxu0 0.0
    %3854 = vmatpush2.msra.mxu0 0.0
    %3855 = vmatprep.subr.mxu0 0.0
    %3856 = vmatpush2.msra.mxu0 0.0
    %3857 = vmatprep.subr.mxu0 0.0
    %3858 = vmatpush2.msra.mxu0 0.0
    %3859 = vmatprep.subr.mxu0 0.0
    %3860 = vmatpush2.msra.mxu0 0.0
    %3861 = vmatprep.subr.mxu0 0.0
    %3862 = vmatpush2.msra.mxu0 0.0
    %3863 = vmatprep.subr.mxu0 0.0
    %3864 = vmatpush2.msra.mxu0 0.0
    %3865 = vmatprep.subr.mxu0 0.0
    %3866 = vmatpush2.msra.mxu0 0.0
    %3867 = vmatprep.subr.mxu0 0.0
    %3868 = vmatpush2.msra.mxu0 0.0
    %3869 = vmatprep.subr.mxu0 0.0
    %3870 = vmatpush2.msra.mxu0 0.0
    %3871 = vmatprep.subr.mxu0 0.0
    %3872 = vmatpush2.msra.mxu0 0.0
    %3873 = vmatprep.subr.mxu0 0.0
    %3874 = vmatpush2.msra.mxu0 0.0
    %3875 = vmatprep.mubr.f32.mxu0 0.0
    %3876 = vmatmul.mubr.f32.gmra.mxu0 %v3809
    %v3877 = vpop.f32.mrf.mxu0
    %v3878 = vadd.f32 %v3806, %v3877
    %v3879 = vpop.f32.mrf.mxu0
    %3880 = vdwg.mxu0
    %v3881 = vld [vmem:[#allocation2 + $0x20] sm:$0xff]
    %v3882 = vld [vmem:[#allocation2 + $0x28] sm:$0xff]
    %v3883 = vld [vmem:[#allocation2 + $0x30] sm:$0xff]
    %v3884 = vld [vmem:[#allocation2 + $0x38] sm:$0xff]
    %v3885 = vrot.slane %v578, 1
    %v3888 = vsel %vm201, %v3803, 0
    %3890 = vmatprep.subr.mxu0 0.0
    %3891 = vmatpush1.msra.mxu0 0.0
    %3892 = vmatprep.subr.mxu0 0.0
    %3893 = vmatpush1.msra.mxu0 0.0
    %3894 = vmatprep.subr.mxu0 0.0
    %3895 = vmatpush1.msra.mxu0 0.0
    %3896 = vmatprep.subr.mxu0 0.0
    %3897 = vmatpush1.msra.mxu0 0.0
    %3898 = vmatprep.subr.mxu0 0.0
    %3899 = vmatpush1.msra.mxu0 0.0
    %3900 = vmatprep.subr.mxu0 0.0
    %3901 = vmatpush1.msra.mxu0 0.0
    %3902 = vmatprep.subr.mxu0 0.0
    %3903 = vmatpush1.msra.mxu0 0.0
    %3904 = vmatprep.subr.mxu0 0.0
    %3905 = vmatpush1.msra.mxu0 0.0
    %3906 = vmatprep.subr.mxu0 0.0
    %3907 = vmatpush1.msra.mxu0 0.0
    %3908 = vmatprep.subr.mxu0 0.0
    %3909 = vmatpush1.msra.mxu0 0.0
    %3910 = vmatprep.subr.mxu0 0.0
    %3911 = vmatpush1.msra.mxu0 0.0
    %3912 = vmatprep.subr.mxu0 0.0
    %3913 = vmatpush1.msra.mxu0 0.0
    %3914 = vmatprep.subr.mxu0 0.0
    %3915 = vmatpush1.msra.mxu0 %v3884
    %3916 = vmatprep.subr.mxu0 0.0
    %3917 = vmatpush1.msra.mxu0 %v3883
    %3918 = vmatprep.subr.mxu0 0.0
    %3919 = vmatpush1.msra.mxu0 %v3882
    %3920 = vmatprep.subr.mxu0 0.0
    %3921 = vmatpush1.msra.mxu0 %v3881
    %3922 = vmatprep.subr.mxu0 0.0
    %3923 = vmatpush2.msra.mxu0 0.0
    %3924 = vmatprep.subr.mxu0 0.0
    %3925 = vmatpush2.msra.mxu0 0.0
    %3926 = vmatprep.subr.mxu0 0.0
    %3927 = vmatpush2.msra.mxu0 0.0
    %3928 = vmatprep.subr.mxu0 0.0
    %3929 = vmatpush2.msra.mxu0 0.0
    %3930 = vmatprep.subr.mxu0 0.0
    %3931 = vmatpush2.msra.mxu0 0.0
    %3932 = vmatprep.subr.mxu0 0.0
    %3933 = vmatpush2.msra.mxu0 0.0
    %3934 = vmatprep.subr.mxu0 0.0
    %3935 = vmatpush2.msra.mxu0 0.0
    %3936 = vmatprep.subr.mxu0 0.0
    %3937 = vmatpush2.msra.mxu0 0.0
    %3938 = vmatprep.subr.mxu0 0.0
    %3939 = vmatpush2.msra.mxu0 0.0
    %3940 = vmatprep.subr.mxu0 0.0
    %3941 = vmatpush2.msra.mxu0 0.0
    %3942 = vmatprep.subr.mxu0 0.0
    %3943 = vmatpush2.msra.mxu0 0.0
    %3944 = vmatprep.subr.mxu0 0.0
    %3945 = vmatpush2.msra.mxu0 0.0
    %3946 = vmatprep.subr.mxu0 0.0
    %3947 = vmatpush2.msra.mxu0 0.0
    %3948 = vmatprep.subr.mxu0 0.0
    %3949 = vmatpush2.msra.mxu0 0.0
    %3950 = vmatprep.subr.mxu0 0.0
    %3951 = vmatpush2.msra.mxu0 0.0
    %3952 = vmatprep.subr.mxu0 0.0
    %3953 = vmatpush2.msra.mxu0 0.0
    %3954 = vmatprep.mubr.f32.mxu0 0.0
    %3955 = vmatmul.mubr.f32.gmra.mxu0 %v3888
    %v3956 = vpop.f32.mrf.mxu0
    %v3957 = vadd.f32 %v3885, %v3956
    %v3958 = vpop.f32.mrf.mxu0
    %3959 = vdwg.mxu0
    %v3960 = vrot.slane %v726, 1
    %v3963 = vsel %vm201, %v3878, 0
    %3965 = vmatprep.subr.mxu0 0.0
    %3966 = vmatpush1.msra.mxu0 0.0
    %3967 = vmatprep.subr.mxu0 0.0
    %3968 = vmatpush1.msra.mxu0 0.0
    %3969 = vmatprep.subr.mxu0 0.0
    %3970 = vmatpush1.msra.mxu0 0.0
    %3971 = vmatprep.subr.mxu0 0.0
    %3972 = vmatpush1.msra.mxu0 0.0
    %3973 = vmatprep.subr.mxu0 0.0
    %3974 = vmatpush1.msra.mxu0 0.0
    %3975 = vmatprep.subr.mxu0 0.0
    %3976 = vmatpush1.msra.mxu0 0.0
    %3977 = vmatprep.subr.mxu0 0.0
    %3978 = vmatpush1.msra.mxu0 0.0
    %3979 = vmatprep.subr.mxu0 0.0
    %3980 = vmatpush1.msra.mxu0 0.0
    %3981 = vmatprep.subr.mxu0 0.0
    %3982 = vmatpush1.msra.mxu0 0.0
    %3983 = vmatprep.subr.mxu0 0.0
    %3984 = vmatpush1.msra.mxu0 0.0
    %3985 = vmatprep.subr.mxu0 0.0
    %3986 = vmatpush1.msra.mxu0 0.0
    %3987 = vmatprep.subr.mxu0 0.0
    %3988 = vmatpush1.msra.mxu0 0.0
    %3989 = vmatprep.subr.mxu0 0.0
    %3990 = vmatpush1.msra.mxu0 %v3884
    %3991 = vmatprep.subr.mxu0 0.0
    %3992 = vmatpush1.msra.mxu0 %v3883
    %3993 = vmatprep.subr.mxu0 0.0
    %3994 = vmatpush1.msra.mxu0 %v3882
    %3995 = vmatprep.subr.mxu0 0.0
    %3996 = vmatpush1.msra.mxu0 %v3881
    %3997 = vmatprep.subr.mxu0 0.0
    %3998 = vmatpush2.msra.mxu0 0.0
    %3999 = vmatprep.subr.mxu0 0.0
    %4000 = vmatpush2.msra.mxu0 0.0
    %4001 = vmatprep.subr.mxu0 0.0
    %4002 = vmatpush2.msra.mxu0 0.0
    %4003 = vmatprep.subr.mxu0 0.0
    %4004 = vmatpush2.msra.mxu0 0.0
    %4005 = vmatprep.subr.mxu0 0.0
    %4006 = vmatpush2.msra.mxu0 0.0
    %4007 = vmatprep.subr.mxu0 0.0
    %4008 = vmatpush2.msra.mxu0 0.0
    %4009 = vmatprep.subr.mxu0 0.0
    %4010 = vmatpush2.msra.mxu0 0.0
    %4011 = vmatprep.subr.mxu0 0.0
    %4012 = vmatpush2.msra.mxu0 0.0
    %4013 = vmatprep.subr.mxu0 0.0
    %4014 = vmatpush2.msra.mxu0 0.0
    %4015 = vmatprep.subr.mxu0 0.0
    %4016 = vmatpush2.msra.mxu0 0.0
    %4017 = vmatprep.subr.mxu0 0.0
    %4018 = vmatpush2.msra.mxu0 0.0
    %4019 = vmatprep.subr.mxu0 0.0
    %4020 = vmatpush2.msra.mxu0 0.0
    %4021 = vmatprep.subr.mxu0 0.0
    %4022 = vmatpush2.msra.mxu0 0.0
    %4023 = vmatprep.subr.mxu0 0.0
    %4024 = vmatpush2.msra.mxu0 0.0
    %4025 = vmatprep.subr.mxu0 0.0
    %4026 = vmatpush2.msra.mxu0 0.0
    %4027 = vmatprep.subr.mxu0 0.0
    %4028 = vmatpush2.msra.mxu0 0.0
    %4029 = vmatprep.mubr.f32.mxu0 0.0
    %4030 = vmatmul.mubr.f32.gmra.mxu0 %v3963
    %v4031 = vpop.f32.mrf.mxu0
    %v4032 = vadd.f32 %v3960, %v4031
    %v4033 = vpop.f32.mrf.mxu0
    %4034 = vdwg.mxu0
    %v4035 = vld [vmem:[#allocation2] sm:$0xff]
    %v4036 = vld [vmem:[#allocation2 + $0x8] sm:$0xff]
    %v4037 = vld [vmem:[#allocation2 + $0x10] sm:$0xff]
    %v4038 = vld [vmem:[#allocation2 + $0x18] sm:$0xff]
    %v4040 = vsel %vm201, %v3957, 0
    %4042 = vmatprep.subr.mxu0 0.0
    %4043 = vmatpush1.msra.mxu0 0.0
    %4044 = vmatprep.subr.mxu0 0.0
    %4045 = vmatpush1.msra.mxu0 0.0
    %4046 = vmatprep.subr.mxu0 0.0
    %4047 = vmatpush1.msra.mxu0 0.0
    %4048 = vmatprep.subr.mxu0 0.0
    %4049 = vmatpush1.msra.mxu0 0.0
    %4050 = vmatprep.subr.mxu0 0.0
    %4051 = vmatpush1.msra.mxu0 0.0
    %4052 = vmatprep.subr.mxu0 0.0
    %4053 = vmatpush1.msra.mxu0 0.0
    %4054 = vmatprep.subr.mxu0 0.0
    %4055 = vmatpush1.msra.mxu0 0.0
    %4056 = vmatprep.subr.mxu0 0.0
    %4057 = vmatpush1.msra.mxu0 0.0
    %4058 = vmatprep.subr.mxu0 0.0
    %4059 = vmatpush1.msra.mxu0 0.0
    %4060 = vmatprep.subr.mxu0 0.0
    %4061 = vmatpush1.msra.mxu0 0.0
    %4062 = vmatprep.subr.mxu0 0.0
    %4063 = vmatpush1.msra.mxu0 0.0
    %4064 = vmatprep.subr.mxu0 0.0
    %4065 = vmatpush1.msra.mxu0 0.0
    %4066 = vmatprep.subr.mxu0 0.0
    %4067 = vmatpush1.msra.mxu0 %v4038
    %4068 = vmatprep.subr.mxu0 0.0
    %4069 = vmatpush1.msra.mxu0 %v4037
    %4070 = vmatprep.subr.mxu0 0.0
    %4071 = vmatpush1.msra.mxu0 %v4036
    %4072 = vmatprep.subr.mxu0 0.0
    %4073 = vmatpush1.msra.mxu0 %v4035
    %4074 = vmatprep.subr.mxu0 0.0
    %4075 = vmatpush2.msra.mxu0 0.0
    %4076 = vmatprep.subr.mxu0 0.0
    %4077 = vmatpush2.msra.mxu0 0.0
    %4078 = vmatprep.subr.mxu0 0.0
    %4079 = vmatpush2.msra.mxu0 0.0
    %4080 = vmatprep.subr.mxu0 0.0
    %4081 = vmatpush2.msra.mxu0 0.0
    %4082 = vmatprep.subr.mxu0 0.0
    %4083 = vmatpush2.msra.mxu0 0.0
    %4084 = vmatprep.subr.mxu0 0.0
    %4085 = vmatpush2.msra.mxu0 0.0
    %4086 = vmatprep.subr.mxu0 0.0
    %4087 = vmatpush2.msra.mxu0 0.0
    %4088 = vmatprep.subr.mxu0 0.0
    %4089 = vmatpush2.msra.mxu0 0.0
    %4090 = vmatprep.subr.mxu0 0.0
    %4091 = vmatpush2.msra.mxu0 0.0
    %4092 = vmatprep.subr.mxu0 0.0
    %4093 = vmatpush2.msra.mxu0 0.0
    %4094 = vmatprep.subr.mxu0 0.0
    %4095 = vmatpush2.msra.mxu0 0.0
    %4096 = vmatprep.subr.mxu0 0.0
    %4097 = vmatpush2.msra.mxu0 0.0
    %4098 = vmatprep.subr.mxu0 0.0
    %4099 = vmatpush2.msra.mxu0 0.0
    %4100 = vmatprep.subr.mxu0 0.0
    %4101 = vmatpush2.msra.mxu0 0.0
    %4102 = vmatprep.subr.mxu0 0.0
    %4103 = vmatpush2.msra.mxu0 0.0
    %4104 = vmatprep.subr.mxu0 0.0
    %4105 = vmatpush2.msra.mxu0 0.0
    %4106 = vmatprep.mubr.f32.mxu0 0.0
    %4107 = vmatmul.mubr.f32.gmra.mxu0 %v4040
    %v4108 = vpop.f32.mrf.mxu0
    %v4109 = vadd.f32 %v578, %v4108
    %v4110 = vpop.f32.mrf.mxu0
    %4111 = vdwg.mxu0
    %v4113 = vsel %vm201, %v4032, 0
    %4115 = vmatprep.subr.mxu0 0.0
    %4116 = vmatpush1.msra.mxu0 0.0
    %4117 = vmatprep.subr.mxu0 0.0
    %4118 = vmatpush1.msra.mxu0 0.0
    %4119 = vmatprep.subr.mxu0 0.0
    %4120 = vmatpush1.msra.mxu0 0.0
    %4121 = vmatprep.subr.mxu0 0.0
    %4122 = vmatpush1.msra.mxu0 0.0
    %4123 = vmatprep.subr.mxu0 0.0
    %4124 = vmatpush1.msra.mxu0 0.0
    %4125 = vmatprep.subr.mxu0 0.0
    %4126 = vmatpush1.msra.mxu0 0.0
    %4127 = vmatprep.subr.mxu0 0.0
    %4128 = vmatpush1.msra.mxu0 0.0
    %4129 = vmatprep.subr.mxu0 0.0
    %4130 = vmatpush1.msra.mxu0 0.0
    %4131 = vmatprep.subr.mxu0 0.0
    %4132 = vmatpush1.msra.mxu0 0.0
    %4133 = vmatprep.subr.mxu0 0.0
    %4134 = vmatpush1.msra.mxu0 0.0
    %4135 = vmatprep.subr.mxu0 0.0
    %4136 = vmatpush1.msra.mxu0 0.0
    %4137 = vmatprep.subr.mxu0 0.0
    %4138 = vmatpush1.msra.mxu0 0.0
    %4139 = vmatprep.subr.mxu0 0.0
    %4140 = vmatpush1.msra.mxu0 %v4038
    %4141 = vmatprep.subr.mxu0 0.0
    %4142 = vmatpush1.msra.mxu0 %v4037
    %4143 = vmatprep.subr.mxu0 0.0
    %4144 = vmatpush1.msra.mxu0 %v4036
    %4145 = vmatprep.subr.mxu0 0.0
    %4146 = vmatpush1.msra.mxu0 %v4035
    %4147 = vmatprep.subr.mxu0 0.0
    %4148 = vmatpush2.msra.mxu0 0.0
    %4149 = vmatprep.subr.mxu0 0.0
    %4150 = vmatpush2.msra.mxu0 0.0
    %4151 = vmatprep.subr.mxu0 0.0
    %4152 = vmatpush2.msra.mxu0 0.0
    %4153 = vmatprep.subr.mxu0 0.0
    %4154 = vmatpush2.msra.mxu0 0.0
    %4155 = vmatprep.subr.mxu0 0.0
    %4156 = vmatpush2.msra.mxu0 0.0
    %4157 = vmatprep.subr.mxu0 0.0
    %4158 = vmatpush2.msra.mxu0 0.0
    %4159 = vmatprep.subr.mxu0 0.0
    %4160 = vmatpush2.msra.mxu0 0.0
    %4161 = vmatprep.subr.mxu0 0.0
    %4162 = vmatpush2.msra.mxu0 0.0
    %4163 = vmatprep.subr.mxu0 0.0
    %4164 = vmatpush2.msra.mxu0 0.0
    %4165 = vmatprep.subr.mxu0 0.0
    %4166 = vmatpush2.msra.mxu0 0.0
    %4167 = vmatprep.subr.mxu0 0.0
    %4168 = vmatpush2.msra.mxu0 0.0
    %4169 = vmatprep.subr.mxu0 0.0
    %4170 = vmatpush2.msra.mxu0 0.0
    %4171 = vmatprep.subr.mxu0 0.0
    %4172 = vmatpush2.msra.mxu0 0.0
    %4173 = vmatprep.subr.mxu0 0.0
    %4174 = vmatpush2.msra.mxu0 0.0
    %4175 = vmatprep.subr.mxu0 0.0
    %4176 = vmatpush2.msra.mxu0 0.0
    %4177 = vmatprep.subr.mxu0 0.0
    %4178 = vmatpush2.msra.mxu0 0.0
    %4179 = vmatprep.mubr.f32.mxu0 0.0
    %4180 = vmatmul.mubr.f32.gmra.mxu0 %v4113
    %v4181 = vpop.f32.mrf.mxu0
    %v4182 = vadd.f32 %v726, %v4181
    %v4183 = vpop.f32.mrf.mxu0
    %4184 = vdwg.mxu0
    %vm4185 = vcmask 253952
    %4186 = vst.msk [vmem:[#allocation3] sm:$0x1] %vm4185, %v4109
    %4187 = vst.msk [vmem:[#allocation3 + $0x1] sm:$0x1] %vm4185, %v4182
    // Predicated region
    $region38: #{tpu_custom_call.1} parent=1 // pred_check
      _
    $region39: #{tpu_custom_call.1} parent=1 // pred_check_branch
      %4189 = sbr.rel (0) target = $region41
    $region40: #{tpu_custom_call.1} parent=1 // pred_region
      %s4191 = ssub.s32 32, 32
      %4192 = vsyncadd [#allocation4], %s4191
      %s4194 = sshll.u32 [#allocation3], 4
      %s4195 = int_to_ptr.vmem [resolvable:$true] %s4194
      %4197 = dma.vmem_to_hbm [thread:$0]  %s4195, 32, %s9, [#allocation4]
    $region41: #{tpu_custom_call.1} parent=1 // pred_fallthru
      _
    // Predicated region
    $region42: #{tpu_custom_call.1} parent=1 // pred_check
      _
    $region43: #{tpu_custom_call.1} parent=1 // pred_check_branch
      %4199 = sbr.rel (0) target = $region45
    $region44: #{tpu_custom_call.1} parent=1 // pred_region
      %4200 = dma.done [#allocation4], 32
    $region45: #{tpu_custom_call.1} parent=1 // pred_fallthru
      _
    %4201 = vsyncpa [#allocation4], 1

</llo_original>
